<compile_context>
chip_gen: v7x
topology: tpu7x:2x2x1
jax: 0.10.0
libtpu: 0.0.40
codegen_flags: <defaults>
</compile_context>

<pallas_src>
import functools

import jax
import jax.numpy as jnp
import numpy as np
from jax.experimental import pallas as pl
from jax.experimental.pallas import tpu as pltpu


def _resblock_kernel(x_ref, wm1_ref, wm2_ref, cmask_ref, p_ref, o_ref,
                     *, N, C, H, W):
    """Fused conv1 -> BN1 -> PReLU -> conv2 -> BN2 -> +x.

    Layout: activations are (H, L) with L = N*C*W lanes, lane = n*C*W + c*W + w.
      x_ref, o_ref     : (H, L)        f32 VMEM
      wm1_ref, wm2_ref : ((2C-1)*9, L) f32 VMEM  per-tap weight*mask vectors
      cmask_ref        : (C, L)        f32 VMEM  one-hot channel-lane masks
      p_ref            : (4C+1,)       f32 SMEM  [gamma1|beta1|gamma2|beta2|alpha]
    """
    L = N * C * W
    EPS = 1e-5
    inv_cnt = 1.0 / float(N * H * W)
    alpha = p_ref[4 * C]

    def conv3x3(v, wm_ref):
        # 3x3 "same" conv with all cross-channel terms.  Vertical taps come
        # from zero-padded row shifts; horizontal and cross-channel taps are
        # static lane rolls (XLU).  W / channel / batch boundary handling is
        # folded into the precomputed per-tap weight vectors (zero there), so
        # no padded scratch and no runtime masks are needed.
        zrow = jnp.zeros((1, L), jnp.float32)
        vs = (jnp.concatenate([zrow, v[:-1, :]], axis=0),   # reads row y-1
              v,                                            # reads row y
              jnp.concatenate([v[1:, :], zrow], axis=0))    # reads row y+1
        acc = jnp.zeros((H, L), jnp.float32)
        t = 0
        for dci in range(2 * C - 1):
            dc = dci - (C - 1)                    # dc = co - ci
            for dyi in range(3):
                for dxi in range(3):
                    dx = dxi - 1
                    shift = (dc * W - dx) % L
                    src = vs[dyi]
                    if shift:
                        src = pltpu.roll(src, shift, axis=1)
                    acc = acc + wm_ref[t:t + 1, :] * src
                    t += 1
        return acc

    def bn(v, gamma_off, beta_off):
        # Training-mode BatchNorm2d: per-channel batch mean / biased variance
        # over (N, H, W).  One-pass sums; channels live on lanes, so reduce
        # rows first, then C masked lane reductions of a single (1, L) vector.
        cs = jnp.sum(v, axis=0, keepdims=True)           # (1, L)
        cq = jnp.sum(v * v, axis=0, keepdims=True)       # (1, L)
        scale_vec = jnp.zeros((1, L), jnp.float32)
        shift_vec = jnp.zeros((1, L), jnp.float32)
        for c in range(C):
            m = cmask_ref[c:c + 1, :]                    # (1, L) one-hot lanes
            s = jnp.sum(cs * m)
            q = jnp.sum(cq * m)
            mean = s * inv_cnt
            var = q * inv_cnt - mean * mean
            scale = jax.lax.rsqrt(var + EPS) * p_ref[gamma_off + c]
            shift = p_ref[beta_off + c] - mean * scale
            scale_vec = scale_vec + scale * m
            shift_vec = shift_vec + shift * m
        return v * scale_vec + shift_vec

    x = x_ref[...]
    a = bn(conv3x3(x, wm1_ref), 0, C)                    # conv1 -> BN1
    a = jnp.where(a >= 0.0, a, alpha * a)                # PReLU (single alpha)
    r = bn(conv3x3(a, wm2_ref), 2 * C, 3 * C)            # conv2 -> BN2
    o_ref[...] = x + r                                   # residual add (dense vst)


def _tap_table(w, N, C, W):
    """Per-tap weight*mask lane vectors, shape ((2C-1)*9, N*C*W).

    Tap order matches the kernel loop: (dc, ky, kx) with dc = co - ci in
    [-(C-1), C-1].  Entry at lane (n, co, w) is conv_weight[co, co-dc, ky, kx]
    if the source (ci, w+kx-1) is in range, else 0 — this encodes the zero
    padding in W and the channel / batch boundaries of the circular lane roll.
    """
    L = N * C * W
    lane = np.arange(L)
    co_of = (lane // W) % C
    w_of = lane % W
    w = jnp.asarray(w, jnp.float32)
    rows = []
    for dci in range(2 * C - 1):
        dc = dci - (C - 1)
        ci = co_of - dc
        ci_ok = (ci >= 0) & (ci < C)
        ci_c = np.clip(ci, 0, C - 1)
        for ky in range(3):
            for kx in range(3):
                dx = kx - 1
                ws = w_of + dx
                valid = (ci_ok & (ws >= 0) & (ws < W)).astype(np.float32)
                rows.append(w[co_of, ci_c, ky, kx] * jnp.asarray(valid))
    return jnp.stack(rows, axis=0)


def _channel_masks(N, C, W):
    L = N * C * W
    c_of = (np.arange(L) // W) % C
    return jnp.asarray((c_of[None, :] == np.arange(C)[:, None]).astype(np.float32))


def residual_block(x, w1, b1, g1, be1, w2, b2, g2, be2, alpha):
    """x: (N, C, H, W) float32 (PyTorch NCHW); conv weights in (O, I, 3, 3)."""
    N, C, H, W = x.shape
    L = N * C * W
    # Lane-dense layout needs the packed minor dim to be a multiple of 128.
    # TODO(synk): for shapes where N*C*W % 128 != 0, pad W (or tile H) instead.
    assert L % 128 == 0, "N*C*W must be a multiple of 128 for the lane-dense path"

    x = x.astype(jnp.float32)
    del b1, b2  # additive conv bias is exactly cancelled by training-mode BN

    wm1 = _tap_table(w1, N, C, W)
    wm2 = _tap_table(w2, N, C, W)
    cmask = _channel_masks(N, C, W)
    params = jnp.concatenate([
        jnp.asarray(g1, jnp.float32).reshape(-1),
        jnp.asarray(be1, jnp.float32).reshape(-1),
        jnp.asarray(g2, jnp.float32).reshape(-1),
        jnp.asarray(be2, jnp.float32).reshape(-1),
        jnp.asarray(alpha, jnp.float32).reshape(-1),
    ])                                                    # (4C + 1,)

    # Layout plumbing (wrapper-side): NCHW -> (H, N*C*W), lane = n*C*W + c*W + w.
    x_l = jnp.transpose(x, (2, 0, 1, 3)).reshape(H, L)

    ntap = (2 * C - 1) * 9
    kernel = functools.partial(_resblock_kernel, N=N, C=C, H=H, W=W)

    out_l = pl.pallas_call(
        kernel,
        out_shape=jax.ShapeDtypeStruct((H, L), jnp.float32),
        grid=(1,),
        in_specs=[
            pl.BlockSpec((H, L), lambda i: (0, 0)),        # x (lane-dense)
            pl.BlockSpec((ntap, L), lambda i: (0, 0)),     # conv1 tap table
            pl.BlockSpec((ntap, L), lambda i: (0, 0)),     # conv2 tap table
            pl.BlockSpec((C, L), lambda i: (0, 0)),        # channel masks
            pl.BlockSpec((4 * C + 1,), lambda i: (0,),
                         memory_space=pltpu.MemorySpace.SMEM),
        ],
        out_specs=pl.BlockSpec((H, L), lambda i: (0, 0)),
        compiler_params=pltpu.CompilerParams(
            dimension_semantics=("arbitrary",),
            vmem_limit_bytes=32 * 1024 * 1024),
    )(x_l, wm1, wm2, cmask, params)

    return jnp.transpose(out_l.reshape(H, N, C, W), (1, 2, 0, 3))


def residual_block_ref(x, w1, b1, g1, be1, w2, b2, g2, be2, alpha):
    """Pure-JAX reference (NCHW) mirroring the PyTorch forward in train mode."""
    def conv(v, w, b):
        o = jax.lax.conv_general_dilated(
            v, w, window_strides=(1, 1), padding=((1, 1), (1, 1)),
            dimension_numbers=("NCHW", "OIHW", "NCHW"),
            precision=jax.lax.Precision.HIGHEST)
        return o + b[None, :, None, None]

    def bn(v, g, be):
        m = jnp.mean(v, axis=(0, 2, 3), keepdims=True)
        var = jnp.mean((v - m) ** 2, axis=(0, 2, 3), keepdims=True)
        return (v - m) / jnp.sqrt(var + 1e-5) * g[None, :, None, None] \
               + be[None, :, None, None]

    r = conv(x, w1, b1)
    r = bn(r, g1, be1)
    r = jnp.where(r >= 0, r, alpha * r)
    r = conv(r, w2, b2)
    r = bn(r, g2, be2)
    return x + r


if __name__ == "__main__":
    N, C, H, W = 2, 4, 16, 16
    key = jax.random.PRNGKey(0)
    kx, kw1, kb1, kw2, kb2 = jax.random.split(key, 5)

    x = jax.random.normal(kx, (N, C, H, W), jnp.float32)
    w1 = jax.random.normal(kw1, (C, C, 3, 3), jnp.float32) * 0.1
    b1 = jax.random.normal(kb1, (C,), jnp.float32) * 0.1
    w2 = jax.random.normal(kw2, (C, C, 3, 3), jnp.float32) * 0.1
    b2 = jax.random.normal(kb2, (C,), jnp.float32) * 0.1
    g1 = jnp.ones((C,), jnp.float32)      # BatchNorm2d default init
    be1 = jnp.zeros((C,), jnp.float32)
    g2 = jnp.ones((C,), jnp.float32)
    be2 = jnp.zeros((C,), jnp.float32)
    alpha = jnp.float32(0.25)             # PReLU default init

    out = residual_block(x, w1, b1, g1, be1, w2, b2, g2, be2, alpha)
    out = jax.block_until_ready(out)

    ref = residual_block_ref(x, w1, b1, g1, be1, w2, b2, g2, be2, alpha)
    assert out.shape == (N, C, H, W)
    err = float(jnp.max(jnp.abs(out - ref)))
    assert jnp.allclose(out, ref, atol=1e-3, rtol=1e-3), err

    print("KERNEL_OK")
</pallas_src>

<mosaic_0001>
module attributes {stable_mosaic.version = 11 : i64} {
  func.func @_resblock_kernel(%arg0: i32, %arg1: memref<16x128xf32, #tpu.memory_space<vmem>>, %arg2: memref<63x128xf32, #tpu.memory_space<vmem>>, %arg3: memref<63x128xf32, #tpu.memory_space<vmem>>, %arg4: memref<4x128xf32, #tpu.memory_space<vmem>>, %arg5: memref<17xf32, #tpu.memory_space<smem>>, %arg6: memref<16x128xf32, #tpu.memory_space<vmem>>) attributes {dimension_semantics = [#tpu.dimension_semantics<arbitrary>], iteration_bounds = array<i64: 1>, scalar_prefetch = 0 : i64, scratch_operands = 0 : i64, tpu.core_type = #tpu.core_type<tc>, window_params = [{pipeline_mode = #tpu.pipeline_mode<synchronous>, transform_indices = @transform_0, window_bounds = array<i64: 16, 128>}, {pipeline_mode = #tpu.pipeline_mode<synchronous>, transform_indices = @transform_1, window_bounds = array<i64: 63, 128>}, {pipeline_mode = #tpu.pipeline_mode<synchronous>, transform_indices = @transform_2, window_bounds = array<i64: 63, 128>}, {pipeline_mode = #tpu.pipeline_mode<synchronous>, transform_indices = @transform_3, window_bounds = array<i64: 4, 128>}, {transform_indices = @transform_4, window_bounds = array<i64: 17>}, {pipeline_mode = #tpu.pipeline_mode<synchronous>, transform_indices = @transform_5, window_bounds = array<i64: 16, 128>}]} {
    %c16 = arith.constant 16 : index
    %0 = memref.load %arg5[%c16] : memref<17xf32, #tpu.memory_space<smem>>
    %c0 = arith.constant 0 : index
    %c0_0 = arith.constant 0 : index
    %1 = vector.load %arg1[%c0, %c0_0] : memref<16x128xf32, #tpu.memory_space<vmem>>, vector<16x128xf32>
    %cst = arith.constant 0.000000e+00 : f32
    %2 = vector.broadcast %cst : f32 to vector<1x128xf32>
    %3 = vector.extract_strided_slice %1 {offsets = [0, 0], sizes = [15, 128], strides = [1, 1]} : vector<16x128xf32> to vector<15x128xf32>
    %4 = tpu.concatenate %2, %3 in 0 : vector<1x128xf32>, vector<15x128xf32> -> vector<16x128xf32>
    %5 = vector.extract_strided_slice %1 {offsets = [1, 0], sizes = [15, 128], strides = [1, 1]} : vector<16x128xf32> to vector<15x128xf32>
    %6 = tpu.concatenate %5, %2 in 0 : vector<15x128xf32>, vector<1x128xf32> -> vector<16x128xf32>
    %cst_1 = arith.constant 0.000000e+00 : f32
    %7 = vector.broadcast %cst_1 : f32 to vector<16x128xf32>
    %c81_i32 = arith.constant 81 : i32
    %8 = tpu.dynamic_rotate %4 by %c81_i32 dim 1 : vector<16x128xf32>, i32 -> vector<16x128xf32>
    %c0_2 = arith.constant 0 : index
    %c0_3 = arith.constant 0 : index
    %9 = vector.load %arg2[%c0_2, %c0_3] : memref<63x128xf32, #tpu.memory_space<vmem>>, vector<1x128xf32>
    %10 = vector.broadcast %9 : vector<1x128xf32> to vector<16x128xf32>
    %11 = arith.mulf %10, %8 : vector<16x128xf32>
    %12 = arith.addf %7, %11 : vector<16x128xf32>
    %c80_i32 = arith.constant 80 : i32
    %13 = tpu.dynamic_rotate %4 by %c80_i32 dim 1 : vector<16x128xf32>, i32 -> vector<16x128xf32>
    %c1 = arith.constant 1 : index
    %c0_4 = arith.constant 0 : index
    %14 = vector.load %arg2[%c1, %c0_4] : memref<63x128xf32, #tpu.memory_space<vmem>>, vector<1x128xf32>
    %15 = vector.broadcast %14 : vector<1x128xf32> to vector<16x128xf32>
    %16 = arith.mulf %15, %13 : vector<16x128xf32>
    %17 = arith.addf %12, %16 : vector<16x128xf32>
    %c79_i32 = arith.constant 79 : i32
    %18 = tpu.dynamic_rotate %4 by %c79_i32 dim 1 : vector<16x128xf32>, i32 -> vector<16x128xf32>
    %c2 = arith.constant 2 : index
    %c0_5 = arith.constant 0 : index
    %19 = vector.load %arg2[%c2, %c0_5] : memref<63x128xf32, #tpu.memory_space<vmem>>, vector<1x128xf32>
    %20 = vector.broadcast %19 : vector<1x128xf32> to vector<16x128xf32>
    %21 = arith.mulf %20, %18 : vector<16x128xf32>
    %22 = arith.addf %17, %21 : vector<16x128xf32>
    %c81_i32_6 = arith.constant 81 : i32
    %23 = tpu.dynamic_rotate %1 by %c81_i32_6 dim 1 : vector<16x128xf32>, i32 -> vector<16x128xf32>
    %c3 = arith.constant 3 : index
    %c0_7 = arith.constant 0 : index
    %24 = vector.load %arg2[%c3, %c0_7] : memref<63x128xf32, #tpu.memory_space<vmem>>, vector<1x128xf32>
    %25 = vector.broadcast %24 : vector<1x128xf32> to vector<16x128xf32>
    %26 = arith.mulf %25, %23 : vector<16x128xf32>
    %27 = arith.addf %22, %26 : vector<16x128xf32>
    %c80_i32_8 = arith.constant 80 : i32
    %28 = tpu.dynamic_rotate %1 by %c80_i32_8 dim 1 : vector<16x128xf32>, i32 -> vector<16x128xf32>
    %c4 = arith.constant 4 : index
    %c0_9 = arith.constant 0 : index
    %29 = vector.load %arg2[%c4, %c0_9] : memref<63x128xf32, #tpu.memory_space<vmem>>, vector<1x128xf32>
    %30 = vector.broadcast %29 : vector<1x128xf32> to vector<16x128xf32>
    %31 = arith.mulf %30, %28 : vector<16x128xf32>
    %32 = arith.addf %27, %31 : vector<16x128xf32>
    %c79_i32_10 = arith.constant 79 : i32
    %33 = tpu.dynamic_rotate %1 by %c79_i32_10 dim 1 : vector<16x128xf32>, i32 -> vector<16x128xf32>
    %c5 = arith.constant 5 : index
    %c0_11 = arith.constant 0 : index
    %34 = vector.load %arg2[%c5, %c0_11] : memref<63x128xf32, #tpu.memory_space<vmem>>, vector<1x128xf32>
    %35 = vector.broadcast %34 : vector<1x128xf32> to vector<16x128xf32>
    %36 = arith.mulf %35, %33 : vector<16x128xf32>
    %37 = arith.addf %32, %36 : vector<16x128xf32>
    %c81_i32_12 = arith.constant 81 : i32
    %38 = tpu.dynamic_rotate %6 by %c81_i32_12 dim 1 : vector<16x128xf32>, i32 -> vector<16x128xf32>
    %c6 = arith.constant 6 : index
    %c0_13 = arith.constant 0 : index
    %39 = vector.load %arg2[%c6, %c0_13] : memref<63x128xf32, #tpu.memory_space<vmem>>, vector<1x128xf32>
    %40 = vector.broadcast %39 : vector<1x128xf32> to vector<16x128xf32>
    %41 = arith.mulf %40, %38 : vector<16x128xf32>
    %42 = arith.addf %37, %41 : vector<16x128xf32>
    %c80_i32_14 = arith.constant 80 : i32
    %43 = tpu.dynamic_rotate %6 by %c80_i32_14 dim 1 : vector<16x128xf32>, i32 -> vector<16x128xf32>
    %c7 = arith.constant 7 : index
    %c0_15 = arith.constant 0 : index
    %44 = vector.load %arg2[%c7, %c0_15] : memref<63x128xf32, #tpu.memory_space<vmem>>, vector<1x128xf32>
    %45 = vector.broadcast %44 : vector<1x128xf32> to vector<16x128xf32>
    %46 = arith.mulf %45, %43 : vector<16x128xf32>
    %47 = arith.addf %42, %46 : vector<16x128xf32>
    %c79_i32_16 = arith.constant 79 : i32
    %48 = tpu.dynamic_rotate %6 by %c79_i32_16 dim 1 : vector<16x128xf32>, i32 -> vector<16x128xf32>
    %c8 = arith.constant 8 : index
    %c0_17 = arith.constant 0 : index
    %49 = vector.load %arg2[%c8, %c0_17] : memref<63x128xf32, #tpu.memory_space<vmem>>, vector<1x128xf32>
    %50 = vector.broadcast %49 : vector<1x128xf32> to vector<16x128xf32>
    %51 = arith.mulf %50, %48 : vector<16x128xf32>
    %52 = arith.addf %47, %51 : vector<16x128xf32>
    %c97_i32 = arith.constant 97 : i32
    %53 = tpu.dynamic_rotate %4 by %c97_i32 dim 1 : vector<16x128xf32>, i32 -> vector<16x128xf32>
    %c9 = arith.constant 9 : index
    %c0_18 = arith.constant 0 : index
    %54 = vector.load %arg2[%c9, %c0_18] : memref<63x128xf32, #tpu.memory_space<vmem>>, vector<1x128xf32>
    %55 = vector.broadcast %54 : vector<1x128xf32> to vector<16x128xf32>
    %56 = arith.mulf %55, %53 : vector<16x128xf32>
    %57 = arith.addf %52, %56 : vector<16x128xf32>
    %c96_i32 = arith.constant 96 : i32
    %58 = tpu.dynamic_rotate %4 by %c96_i32 dim 1 : vector<16x128xf32>, i32 -> vector<16x128xf32>
    %c10 = arith.constant 10 : index
    %c0_19 = arith.constant 0 : index
    %59 = vector.load %arg2[%c10, %c0_19] : memref<63x128xf32, #tpu.memory_space<vmem>>, vector<1x128xf32>
    %60 = vector.broadcast %59 : vector<1x128xf32> to vector<16x128xf32>
    %61 = arith.mulf %60, %58 : vector<16x128xf32>
    %62 = arith.addf %57, %61 : vector<16x128xf32>
    %c95_i32 = arith.constant 95 : i32
    %63 = tpu.dynamic_rotate %4 by %c95_i32 dim 1 : vector<16x128xf32>, i32 -> vector<16x128xf32>
    %c11 = arith.constant 11 : index
    %c0_20 = arith.constant 0 : index
    %64 = vector.load %arg2[%c11, %c0_20] : memref<63x128xf32, #tpu.memory_space<vmem>>, vector<1x128xf32>
    %65 = vector.broadcast %64 : vector<1x128xf32> to vector<16x128xf32>
    %66 = arith.mulf %65, %63 : vector<16x128xf32>
    %67 = arith.addf %62, %66 : vector<16x128xf32>
    %c97_i32_21 = arith.constant 97 : i32
    %68 = tpu.dynamic_rotate %1 by %c97_i32_21 dim 1 : vector<16x128xf32>, i32 -> vector<16x128xf32>
    %c12 = arith.constant 12 : index
    %c0_22 = arith.constant 0 : index
    %69 = vector.load %arg2[%c12, %c0_22] : memref<63x128xf32, #tpu.memory_space<vmem>>, vector<1x128xf32>
    %70 = vector.broadcast %69 : vector<1x128xf32> to vector<16x128xf32>
    %71 = arith.mulf %70, %68 : vector<16x128xf32>
    %72 = arith.addf %67, %71 : vector<16x128xf32>
    %c96_i32_23 = arith.constant 96 : i32
    %73 = tpu.dynamic_rotate %1 by %c96_i32_23 dim 1 : vector<16x128xf32>, i32 -> vector<16x128xf32>
    %c13 = arith.constant 13 : index
    %c0_24 = arith.constant 0 : index
    %74 = vector.load %arg2[%c13, %c0_24] : memref<63x128xf32, #tpu.memory_space<vmem>>, vector<1x128xf32>
    %75 = vector.broadcast %74 : vector<1x128xf32> to vector<16x128xf32>
    %76 = arith.mulf %75, %73 : vector<16x128xf32>
    %77 = arith.addf %72, %76 : vector<16x128xf32>
    %c95_i32_25 = arith.constant 95 : i32
    %78 = tpu.dynamic_rotate %1 by %c95_i32_25 dim 1 : vector<16x128xf32>, i32 -> vector<16x128xf32>
    %c14 = arith.constant 14 : index
    %c0_26 = arith.constant 0 : index
    %79 = vector.load %arg2[%c14, %c0_26] : memref<63x128xf32, #tpu.memory_space<vmem>>, vector<1x128xf32>
    %80 = vector.broadcast %79 : vector<1x128xf32> to vector<16x128xf32>
    %81 = arith.mulf %80, %78 : vector<16x128xf32>
    %82 = arith.addf %77, %81 : vector<16x128xf32>
    %c97_i32_27 = arith.constant 97 : i32
    %83 = tpu.dynamic_rotate %6 by %c97_i32_27 dim 1 : vector<16x128xf32>, i32 -> vector<16x128xf32>
    %c15 = arith.constant 15 : index
    %c0_28 = arith.constant 0 : index
    %84 = vector.load %arg2[%c15, %c0_28] : memref<63x128xf32, #tpu.memory_space<vmem>>, vector<1x128xf32>
    %85 = vector.broadcast %84 : vector<1x128xf32> to vector<16x128xf32>
    %86 = arith.mulf %85, %83 : vector<16x128xf32>
    %87 = arith.addf %82, %86 : vector<16x128xf32>
    %c96_i32_29 = arith.constant 96 : i32
    %88 = tpu.dynamic_rotate %6 by %c96_i32_29 dim 1 : vector<16x128xf32>, i32 -> vector<16x128xf32>
    %c16_30 = arith.constant 16 : index
    %c0_31 = arith.constant 0 : index
    %89 = vector.load %arg2[%c16_30, %c0_31] : memref<63x128xf32, #tpu.memory_space<vmem>>, vector<1x128xf32>
    %90 = vector.broadcast %89 : vector<1x128xf32> to vector<16x128xf32>
    %91 = arith.mulf %90, %88 : vector<16x128xf32>
    %92 = arith.addf %87, %91 : vector<16x128xf32>
    %c95_i32_32 = arith.constant 95 : i32
    %93 = tpu.dynamic_rotate %6 by %c95_i32_32 dim 1 : vector<16x128xf32>, i32 -> vector<16x128xf32>
    %c17 = arith.constant 17 : index
    %c0_33 = arith.constant 0 : index
    %94 = vector.load %arg2[%c17, %c0_33] : memref<63x128xf32, #tpu.memory_space<vmem>>, vector<1x128xf32>
    %95 = vector.broadcast %94 : vector<1x128xf32> to vector<16x128xf32>
    %96 = arith.mulf %95, %93 : vector<16x128xf32>
    %97 = arith.addf %92, %96 : vector<16x128xf32>
    %c113_i32 = arith.constant 113 : i32
    %98 = tpu.dynamic_rotate %4 by %c113_i32 dim 1 : vector<16x128xf32>, i32 -> vector<16x128xf32>
    %c18 = arith.constant 18 : index
    %c0_34 = arith.constant 0 : index
    %99 = vector.load %arg2[%c18, %c0_34] : memref<63x128xf32, #tpu.memory_space<vmem>>, vector<1x128xf32>
    %100 = vector.broadcast %99 : vector<1x128xf32> to vector<16x128xf32>
    %101 = arith.mulf %100, %98 : vector<16x128xf32>
    %102 = arith.addf %97, %101 : vector<16x128xf32>
    %c112_i32 = arith.constant 112 : i32
    %103 = tpu.dynamic_rotate %4 by %c112_i32 dim 1 : vector<16x128xf32>, i32 -> vector<16x128xf32>
    %c19 = arith.constant 19 : index
    %c0_35 = arith.constant 0 : index
    %104 = vector.load %arg2[%c19, %c0_35] : memref<63x128xf32, #tpu.memory_space<vmem>>, vector<1x128xf32>
    %105 = vector.broadcast %104 : vector<1x128xf32> to vector<16x128xf32>
    %106 = arith.mulf %105, %103 : vector<16x128xf32>
    %107 = arith.addf %102, %106 : vector<16x128xf32>
    %c111_i32 = arith.constant 111 : i32
    %108 = tpu.dynamic_rotate %4 by %c111_i32 dim 1 : vector<16x128xf32>, i32 -> vector<16x128xf32>
    %c20 = arith.constant 20 : index
    %c0_36 = arith.constant 0 : index
    %109 = vector.load %arg2[%c20, %c0_36] : memref<63x128xf32, #tpu.memory_space<vmem>>, vector<1x128xf32>
    %110 = vector.broadcast %109 : vector<1x128xf32> to vector<16x128xf32>
    %111 = arith.mulf %110, %108 : vector<16x128xf32>
    %112 = arith.addf %107, %111 : vector<16x128xf32>
    %c113_i32_37 = arith.constant 113 : i32
    %113 = tpu.dynamic_rotate %1 by %c113_i32_37 dim 1 : vector<16x128xf32>, i32 -> vector<16x128xf32>
    %c21 = arith.constant 21 : index
    %c0_38 = arith.constant 0 : index
    %114 = vector.load %arg2[%c21, %c0_38] : memref<63x128xf32, #tpu.memory_space<vmem>>, vector<1x128xf32>
    %115 = vector.broadcast %114 : vector<1x128xf32> to vector<16x128xf32>
    %116 = arith.mulf %115, %113 : vector<16x128xf32>
    %117 = arith.addf %112, %116 : vector<16x128xf32>
    %c112_i32_39 = arith.constant 112 : i32
    %118 = tpu.dynamic_rotate %1 by %c112_i32_39 dim 1 : vector<16x128xf32>, i32 -> vector<16x128xf32>
    %c22 = arith.constant 22 : index
    %c0_40 = arith.constant 0 : index
    %119 = vector.load %arg2[%c22, %c0_40] : memref<63x128xf32, #tpu.memory_space<vmem>>, vector<1x128xf32>
    %120 = vector.broadcast %119 : vector<1x128xf32> to vector<16x128xf32>
    %121 = arith.mulf %120, %118 : vector<16x128xf32>
    %122 = arith.addf %117, %121 : vector<16x128xf32>
    %c111_i32_41 = arith.constant 111 : i32
    %123 = tpu.dynamic_rotate %1 by %c111_i32_41 dim 1 : vector<16x128xf32>, i32 -> vector<16x128xf32>
    %c23 = arith.constant 23 : index
    %c0_42 = arith.constant 0 : index
    %124 = vector.load %arg2[%c23, %c0_42] : memref<63x128xf32, #tpu.memory_space<vmem>>, vector<1x128xf32>
    %125 = vector.broadcast %124 : vector<1x128xf32> to vector<16x128xf32>
    %126 = arith.mulf %125, %123 : vector<16x128xf32>
    %127 = arith.addf %122, %126 : vector<16x128xf32>
    %c113_i32_43 = arith.constant 113 : i32
    %128 = tpu.dynamic_rotate %6 by %c113_i32_43 dim 1 : vector<16x128xf32>, i32 -> vector<16x128xf32>
    %c24 = arith.constant 24 : index
    %c0_44 = arith.constant 0 : index
    %129 = vector.load %arg2[%c24, %c0_44] : memref<63x128xf32, #tpu.memory_space<vmem>>, vector<1x128xf32>
    %130 = vector.broadcast %129 : vector<1x128xf32> to vector<16x128xf32>
    %131 = arith.mulf %130, %128 : vector<16x128xf32>
    %132 = arith.addf %127, %131 : vector<16x128xf32>
    %c112_i32_45 = arith.constant 112 : i32
    %133 = tpu.dynamic_rotate %6 by %c112_i32_45 dim 1 : vector<16x128xf32>, i32 -> vector<16x128xf32>
    %c25 = arith.constant 25 : index
    %c0_46 = arith.constant 0 : index
    %134 = vector.load %arg2[%c25, %c0_46] : memref<63x128xf32, #tpu.memory_space<vmem>>, vector<1x128xf32>
    %135 = vector.broadcast %134 : vector<1x128xf32> to vector<16x128xf32>
    %136 = arith.mulf %135, %133 : vector<16x128xf32>
    %137 = arith.addf %132, %136 : vector<16x128xf32>
    %c111_i32_47 = arith.constant 111 : i32
    %138 = tpu.dynamic_rotate %6 by %c111_i32_47 dim 1 : vector<16x128xf32>, i32 -> vector<16x128xf32>
    %c26 = arith.constant 26 : index
    %c0_48 = arith.constant 0 : index
    %139 = vector.load %arg2[%c26, %c0_48] : memref<63x128xf32, #tpu.memory_space<vmem>>, vector<1x128xf32>
    %140 = vector.broadcast %139 : vector<1x128xf32> to vector<16x128xf32>
    %141 = arith.mulf %140, %138 : vector<16x128xf32>
    %142 = arith.addf %137, %141 : vector<16x128xf32>
    %c1_i32 = arith.constant 1 : i32
    %143 = tpu.dynamic_rotate %4 by %c1_i32 dim 1 : vector<16x128xf32>, i32 -> vector<16x128xf32>
    %c27 = arith.constant 27 : index
    %c0_49 = arith.constant 0 : index
    %144 = vector.load %arg2[%c27, %c0_49] : memref<63x128xf32, #tpu.memory_space<vmem>>, vector<1x128xf32>
    %145 = vector.broadcast %144 : vector<1x128xf32> to vector<16x128xf32>
    %146 = arith.mulf %145, %143 : vector<16x128xf32>
    %147 = arith.addf %142, %146 : vector<16x128xf32>
    %c28 = arith.constant 28 : index
    %c0_50 = arith.constant 0 : index
    %148 = vector.load %arg2[%c28, %c0_50] : memref<63x128xf32, #tpu.memory_space<vmem>>, vector<1x128xf32>
    %149 = vector.broadcast %148 : vector<1x128xf32> to vector<16x128xf32>
    %150 = arith.mulf %149, %4 : vector<16x128xf32>
    %151 = arith.addf %147, %150 : vector<16x128xf32>
    %c127_i32 = arith.constant 127 : i32
    %152 = tpu.dynamic_rotate %4 by %c127_i32 dim 1 : vector<16x128xf32>, i32 -> vector<16x128xf32>
    %c29 = arith.constant 29 : index
    %c0_51 = arith.constant 0 : index
    %153 = vector.load %arg2[%c29, %c0_51] : memref<63x128xf32, #tpu.memory_space<vmem>>, vector<1x128xf32>
    %154 = vector.broadcast %153 : vector<1x128xf32> to vector<16x128xf32>
    %155 = arith.mulf %154, %152 : vector<16x128xf32>
    %156 = arith.addf %151, %155 : vector<16x128xf32>
    %c1_i32_52 = arith.constant 1 : i32
    %157 = tpu.dynamic_rotate %1 by %c1_i32_52 dim 1 : vector<16x128xf32>, i32 -> vector<16x128xf32>
    %c30 = arith.constant 30 : index
    %c0_53 = arith.constant 0 : index
    %158 = vector.load %arg2[%c30, %c0_53] : memref<63x128xf32, #tpu.memory_space<vmem>>, vector<1x128xf32>
    %159 = vector.broadcast %158 : vector<1x128xf32> to vector<16x128xf32>
    %160 = arith.mulf %159, %157 : vector<16x128xf32>
    %161 = arith.addf %156, %160 : vector<16x128xf32>
    %c31 = arith.constant 31 : index
    %c0_54 = arith.constant 0 : index
    %162 = vector.load %arg2[%c31, %c0_54] : memref<63x128xf32, #tpu.memory_space<vmem>>, vector<1x128xf32>
    %163 = vector.broadcast %162 : vector<1x128xf32> to vector<16x128xf32>
    %164 = arith.mulf %163, %1 : vector<16x128xf32>
    %165 = arith.addf %161, %164 : vector<16x128xf32>
    %c127_i32_55 = arith.constant 127 : i32
    %166 = tpu.dynamic_rotate %1 by %c127_i32_55 dim 1 : vector<16x128xf32>, i32 -> vector<16x128xf32>
    %c32 = arith.constant 32 : index
    %c0_56 = arith.constant 0 : index
    %167 = vector.load %arg2[%c32, %c0_56] : memref<63x128xf32, #tpu.memory_space<vmem>>, vector<1x128xf32>
    %168 = vector.broadcast %167 : vector<1x128xf32> to vector<16x128xf32>
    %169 = arith.mulf %168, %166 : vector<16x128xf32>
    %170 = arith.addf %165, %169 : vector<16x128xf32>
    %c1_i32_57 = arith.constant 1 : i32
    %171 = tpu.dynamic_rotate %6 by %c1_i32_57 dim 1 : vector<16x128xf32>, i32 -> vector<16x128xf32>
    %c33 = arith.constant 33 : index
    %c0_58 = arith.constant 0 : index
    %172 = vector.load %arg2[%c33, %c0_58] : memref<63x128xf32, #tpu.memory_space<vmem>>, vector<1x128xf32>
    %173 = vector.broadcast %172 : vector<1x128xf32> to vector<16x128xf32>
    %174 = arith.mulf %173, %171 : vector<16x128xf32>
    %175 = arith.addf %170, %174 : vector<16x128xf32>
    %c34 = arith.constant 34 : index
    %c0_59 = arith.constant 0 : index
    %176 = vector.load %arg2[%c34, %c0_59] : memref<63x128xf32, #tpu.memory_space<vmem>>, vector<1x128xf32>
    %177 = vector.broadcast %176 : vector<1x128xf32> to vector<16x128xf32>
    %178 = arith.mulf %177, %6 : vector<16x128xf32>
    %179 = arith.addf %175, %178 : vector<16x128xf32>
    %c127_i32_60 = arith.constant 127 : i32
    %180 = tpu.dynamic_rotate %6 by %c127_i32_60 dim 1 : vector<16x128xf32>, i32 -> vector<16x128xf32>
    %c35 = arith.constant 35 : index
    %c0_61 = arith.constant 0 : index
    %181 = vector.load %arg2[%c35, %c0_61] : memref<63x128xf32, #tpu.memory_space<vmem>>, vector<1x128xf32>
    %182 = vector.broadcast %181 : vector<1x128xf32> to vector<16x128xf32>
    %183 = arith.mulf %182, %180 : vector<16x128xf32>
    %184 = arith.addf %179, %183 : vector<16x128xf32>
    %c17_i32 = arith.constant 17 : i32
    %185 = tpu.dynamic_rotate %4 by %c17_i32 dim 1 : vector<16x128xf32>, i32 -> vector<16x128xf32>
    %c36 = arith.constant 36 : index
    %c0_62 = arith.constant 0 : index
    %186 = vector.load %arg2[%c36, %c0_62] : memref<63x128xf32, #tpu.memory_space<vmem>>, vector<1x128xf32>
    %187 = vector.broadcast %186 : vector<1x128xf32> to vector<16x128xf32>
    %188 = arith.mulf %187, %185 : vector<16x128xf32>
    %189 = arith.addf %184, %188 : vector<16x128xf32>
    %c16_i32 = arith.constant 16 : i32
    %190 = tpu.dynamic_rotate %4 by %c16_i32 dim 1 : vector<16x128xf32>, i32 -> vector<16x128xf32>
    %c37 = arith.constant 37 : index
    %c0_63 = arith.constant 0 : index
    %191 = vector.load %arg2[%c37, %c0_63] : memref<63x128xf32, #tpu.memory_space<vmem>>, vector<1x128xf32>
    %192 = vector.broadcast %191 : vector<1x128xf32> to vector<16x128xf32>
    %193 = arith.mulf %192, %190 : vector<16x128xf32>
    %194 = arith.addf %189, %193 : vector<16x128xf32>
    %c15_i32 = arith.constant 15 : i32
    %195 = tpu.dynamic_rotate %4 by %c15_i32 dim 1 : vector<16x128xf32>, i32 -> vector<16x128xf32>
    %c38 = arith.constant 38 : index
    %c0_64 = arith.constant 0 : index
    %196 = vector.load %arg2[%c38, %c0_64] : memref<63x128xf32, #tpu.memory_space<vmem>>, vector<1x128xf32>
    %197 = vector.broadcast %196 : vector<1x128xf32> to vector<16x128xf32>
    %198 = arith.mulf %197, %195 : vector<16x128xf32>
    %199 = arith.addf %194, %198 : vector<16x128xf32>
    %c17_i32_65 = arith.constant 17 : i32
    %200 = tpu.dynamic_rotate %1 by %c17_i32_65 dim 1 : vector<16x128xf32>, i32 -> vector<16x128xf32>
    %c39 = arith.constant 39 : index
    %c0_66 = arith.constant 0 : index
    %201 = vector.load %arg2[%c39, %c0_66] : memref<63x128xf32, #tpu.memory_space<vmem>>, vector<1x128xf32>
    %202 = vector.broadcast %201 : vector<1x128xf32> to vector<16x128xf32>
    %203 = arith.mulf %202, %200 : vector<16x128xf32>
    %204 = arith.addf %199, %203 : vector<16x128xf32>
    %c16_i32_67 = arith.constant 16 : i32
    %205 = tpu.dynamic_rotate %1 by %c16_i32_67 dim 1 : vector<16x128xf32>, i32 -> vector<16x128xf32>
    %c40 = arith.constant 40 : index
    %c0_68 = arith.constant 0 : index
    %206 = vector.load %arg2[%c40, %c0_68] : memref<63x128xf32, #tpu.memory_space<vmem>>, vector<1x128xf32>
    %207 = vector.broadcast %206 : vector<1x128xf32> to vector<16x128xf32>
    %208 = arith.mulf %207, %205 : vector<16x128xf32>
    %209 = arith.addf %204, %208 : vector<16x128xf32>
    %c15_i32_69 = arith.constant 15 : i32
    %210 = tpu.dynamic_rotate %1 by %c15_i32_69 dim 1 : vector<16x128xf32>, i32 -> vector<16x128xf32>
    %c41 = arith.constant 41 : index
    %c0_70 = arith.constant 0 : index
    %211 = vector.load %arg2[%c41, %c0_70] : memref<63x128xf32, #tpu.memory_space<vmem>>, vector<1x128xf32>
    %212 = vector.broadcast %211 : vector<1x128xf32> to vector<16x128xf32>
    %213 = arith.mulf %212, %210 : vector<16x128xf32>
    %214 = arith.addf %209, %213 : vector<16x128xf32>
    %c17_i32_71 = arith.constant 17 : i32
    %215 = tpu.dynamic_rotate %6 by %c17_i32_71 dim 1 : vector<16x128xf32>, i32 -> vector<16x128xf32>
    %c42 = arith.constant 42 : index
    %c0_72 = arith.constant 0 : index
    %216 = vector.load %arg2[%c42, %c0_72] : memref<63x128xf32, #tpu.memory_space<vmem>>, vector<1x128xf32>
    %217 = vector.broadcast %216 : vector<1x128xf32> to vector<16x128xf32>
    %218 = arith.mulf %217, %215 : vector<16x128xf32>
    %219 = arith.addf %214, %218 : vector<16x128xf32>
    %c16_i32_73 = arith.constant 16 : i32
    %220 = tpu.dynamic_rotate %6 by %c16_i32_73 dim 1 : vector<16x128xf32>, i32 -> vector<16x128xf32>
    %c43 = arith.constant 43 : index
    %c0_74 = arith.constant 0 : index
    %221 = vector.load %arg2[%c43, %c0_74] : memref<63x128xf32, #tpu.memory_space<vmem>>, vector<1x128xf32>
    %222 = vector.broadcast %221 : vector<1x128xf32> to vector<16x128xf32>
    %223 = arith.mulf %222, %220 : vector<16x128xf32>
    %224 = arith.addf %219, %223 : vector<16x128xf32>
    %c15_i32_75 = arith.constant 15 : i32
    %225 = tpu.dynamic_rotate %6 by %c15_i32_75 dim 1 : vector<16x128xf32>, i32 -> vector<16x128xf32>
    %c44 = arith.constant 44 : index
    %c0_76 = arith.constant 0 : index
    %226 = vector.load %arg2[%c44, %c0_76] : memref<63x128xf32, #tpu.memory_space<vmem>>, vector<1x128xf32>
    %227 = vector.broadcast %226 : vector<1x128xf32> to vector<16x128xf32>
    %228 = arith.mulf %227, %225 : vector<16x128xf32>
    %229 = arith.addf %224, %228 : vector<16x128xf32>
    %c33_i32 = arith.constant 33 : i32
    %230 = tpu.dynamic_rotate %4 by %c33_i32 dim 1 : vector<16x128xf32>, i32 -> vector<16x128xf32>
    %c45 = arith.constant 45 : index
    %c0_77 = arith.constant 0 : index
    %231 = vector.load %arg2[%c45, %c0_77] : memref<63x128xf32, #tpu.memory_space<vmem>>, vector<1x128xf32>
    %232 = vector.broadcast %231 : vector<1x128xf32> to vector<16x128xf32>
    %233 = arith.mulf %232, %230 : vector<16x128xf32>
    %234 = arith.addf %229, %233 : vector<16x128xf32>
    %c32_i32 = arith.constant 32 : i32
    %235 = tpu.dynamic_rotate %4 by %c32_i32 dim 1 : vector<16x128xf32>, i32 -> vector<16x128xf32>
    %c46 = arith.constant 46 : index
    %c0_78 = arith.constant 0 : index
    %236 = vector.load %arg2[%c46, %c0_78] : memref<63x128xf32, #tpu.memory_space<vmem>>, vector<1x128xf32>
    %237 = vector.broadcast %236 : vector<1x128xf32> to vector<16x128xf32>
    %238 = arith.mulf %237, %235 : vector<16x128xf32>
    %239 = arith.addf %234, %238 : vector<16x128xf32>
    %c31_i32 = arith.constant 31 : i32
    %240 = tpu.dynamic_rotate %4 by %c31_i32 dim 1 : vector<16x128xf32>, i32 -> vector<16x128xf32>
    %c47 = arith.constant 47 : index
    %c0_79 = arith.constant 0 : index
    %241 = vector.load %arg2[%c47, %c0_79] : memref<63x128xf32, #tpu.memory_space<vmem>>, vector<1x128xf32>
    %242 = vector.broadcast %241 : vector<1x128xf32> to vector<16x128xf32>
    %243 = arith.mulf %242, %240 : vector<16x128xf32>
    %244 = arith.addf %239, %243 : vector<16x128xf32>
    %c33_i32_80 = arith.constant 33 : i32
    %245 = tpu.dynamic_rotate %1 by %c33_i32_80 dim 1 : vector<16x128xf32>, i32 -> vector<16x128xf32>
    %c48 = arith.constant 48 : index
    %c0_81 = arith.constant 0 : index
    %246 = vector.load %arg2[%c48, %c0_81] : memref<63x128xf32, #tpu.memory_space<vmem>>, vector<1x128xf32>
    %247 = vector.broadcast %246 : vector<1x128xf32> to vector<16x128xf32>
    %248 = arith.mulf %247, %245 : vector<16x128xf32>
    %249 = arith.addf %244, %248 : vector<16x128xf32>
    %c32_i32_82 = arith.constant 32 : i32
    %250 = tpu.dynamic_rotate %1 by %c32_i32_82 dim 1 : vector<16x128xf32>, i32 -> vector<16x128xf32>
    %c49 = arith.constant 49 : index
    %c0_83 = arith.constant 0 : index
    %251 = vector.load %arg2[%c49, %c0_83] : memref<63x128xf32, #tpu.memory_space<vmem>>, vector<1x128xf32>
    %252 = vector.broadcast %251 : vector<1x128xf32> to vector<16x128xf32>
    %253 = arith.mulf %252, %250 : vector<16x128xf32>
    %254 = arith.addf %249, %253 : vector<16x128xf32>
    %c31_i32_84 = arith.constant 31 : i32
    %255 = tpu.dynamic_rotate %1 by %c31_i32_84 dim 1 : vector<16x128xf32>, i32 -> vector<16x128xf32>
    %c50 = arith.constant 50 : index
    %c0_85 = arith.constant 0 : index
    %256 = vector.load %arg2[%c50, %c0_85] : memref<63x128xf32, #tpu.memory_space<vmem>>, vector<1x128xf32>
    %257 = vector.broadcast %256 : vector<1x128xf32> to vector<16x128xf32>
    %258 = arith.mulf %257, %255 : vector<16x128xf32>
    %259 = arith.addf %254, %258 : vector<16x128xf32>
    %c33_i32_86 = arith.constant 33 : i32
    %260 = tpu.dynamic_rotate %6 by %c33_i32_86 dim 1 : vector<16x128xf32>, i32 -> vector<16x128xf32>
    %c51 = arith.constant 51 : index
    %c0_87 = arith.constant 0 : index
    %261 = vector.load %arg2[%c51, %c0_87] : memref<63x128xf32, #tpu.memory_space<vmem>>, vector<1x128xf32>
    %262 = vector.broadcast %261 : vector<1x128xf32> to vector<16x128xf32>
    %263 = arith.mulf %262, %260 : vector<16x128xf32>
    %264 = arith.addf %259, %263 : vector<16x128xf32>
    %c32_i32_88 = arith.constant 32 : i32
    %265 = tpu.dynamic_rotate %6 by %c32_i32_88 dim 1 : vector<16x128xf32>, i32 -> vector<16x128xf32>
    %c52 = arith.constant 52 : index
    %c0_89 = arith.constant 0 : index
    %266 = vector.load %arg2[%c52, %c0_89] : memref<63x128xf32, #tpu.memory_space<vmem>>, vector<1x128xf32>
    %267 = vector.broadcast %266 : vector<1x128xf32> to vector<16x128xf32>
    %268 = arith.mulf %267, %265 : vector<16x128xf32>
    %269 = arith.addf %264, %268 : vector<16x128xf32>
    %c31_i32_90 = arith.constant 31 : i32
    %270 = tpu.dynamic_rotate %6 by %c31_i32_90 dim 1 : vector<16x128xf32>, i32 -> vector<16x128xf32>
    %c53 = arith.constant 53 : index
    %c0_91 = arith.constant 0 : index
    %271 = vector.load %arg2[%c53, %c0_91] : memref<63x128xf32, #tpu.memory_space<vmem>>, vector<1x128xf32>
    %272 = vector.broadcast %271 : vector<1x128xf32> to vector<16x128xf32>
    %273 = arith.mulf %272, %270 : vector<16x128xf32>
    %274 = arith.addf %269, %273 : vector<16x128xf32>
    %c49_i32 = arith.constant 49 : i32
    %275 = tpu.dynamic_rotate %4 by %c49_i32 dim 1 : vector<16x128xf32>, i32 -> vector<16x128xf32>
    %c54 = arith.constant 54 : index
    %c0_92 = arith.constant 0 : index
    %276 = vector.load %arg2[%c54, %c0_92] : memref<63x128xf32, #tpu.memory_space<vmem>>, vector<1x128xf32>
    %277 = vector.broadcast %276 : vector<1x128xf32> to vector<16x128xf32>
    %278 = arith.mulf %277, %275 : vector<16x128xf32>
    %279 = arith.addf %274, %278 : vector<16x128xf32>
    %c48_i32 = arith.constant 48 : i32
    %280 = tpu.dynamic_rotate %4 by %c48_i32 dim 1 : vector<16x128xf32>, i32 -> vector<16x128xf32>
    %c55 = arith.constant 55 : index
    %c0_93 = arith.constant 0 : index
    %281 = vector.load %arg2[%c55, %c0_93] : memref<63x128xf32, #tpu.memory_space<vmem>>, vector<1x128xf32>
    %282 = vector.broadcast %281 : vector<1x128xf32> to vector<16x128xf32>
    %283 = arith.mulf %282, %280 : vector<16x128xf32>
    %284 = arith.addf %279, %283 : vector<16x128xf32>
    %c47_i32 = arith.constant 47 : i32
    %285 = tpu.dynamic_rotate %4 by %c47_i32 dim 1 : vector<16x128xf32>, i32 -> vector<16x128xf32>
    %c56 = arith.constant 56 : index
    %c0_94 = arith.constant 0 : index
    %286 = vector.load %arg2[%c56, %c0_94] : memref<63x128xf32, #tpu.memory_space<vmem>>, vector<1x128xf32>
    %287 = vector.broadcast %286 : vector<1x128xf32> to vector<16x128xf32>
    %288 = arith.mulf %287, %285 : vector<16x128xf32>
    %289 = arith.addf %284, %288 : vector<16x128xf32>
    %c49_i32_95 = arith.constant 49 : i32
    %290 = tpu.dynamic_rotate %1 by %c49_i32_95 dim 1 : vector<16x128xf32>, i32 -> vector<16x128xf32>
    %c57 = arith.constant 57 : index
    %c0_96 = arith.constant 0 : index
    %291 = vector.load %arg2[%c57, %c0_96] : memref<63x128xf32, #tpu.memory_space<vmem>>, vector<1x128xf32>
    %292 = vector.broadcast %291 : vector<1x128xf32> to vector<16x128xf32>
    %293 = arith.mulf %292, %290 : vector<16x128xf32>
    %294 = arith.addf %289, %293 : vector<16x128xf32>
    %c48_i32_97 = arith.constant 48 : i32
    %295 = tpu.dynamic_rotate %1 by %c48_i32_97 dim 1 : vector<16x128xf32>, i32 -> vector<16x128xf32>
    %c58 = arith.constant 58 : index
    %c0_98 = arith.constant 0 : index
    %296 = vector.load %arg2[%c58, %c0_98] : memref<63x128xf32, #tpu.memory_space<vmem>>, vector<1x128xf32>
    %297 = vector.broadcast %296 : vector<1x128xf32> to vector<16x128xf32>
    %298 = arith.mulf %297, %295 : vector<16x128xf32>
    %299 = arith.addf %294, %298 : vector<16x128xf32>
    %c47_i32_99 = arith.constant 47 : i32
    %300 = tpu.dynamic_rotate %1 by %c47_i32_99 dim 1 : vector<16x128xf32>, i32 -> vector<16x128xf32>
    %c59 = arith.constant 59 : index
    %c0_100 = arith.constant 0 : index
    %301 = vector.load %arg2[%c59, %c0_100] : memref<63x128xf32, #tpu.memory_space<vmem>>, vector<1x128xf32>
    %302 = vector.broadcast %301 : vector<1x128xf32> to vector<16x128xf32>
    %303 = arith.mulf %302, %300 : vector<16x128xf32>
    %304 = arith.addf %299, %303 : vector<16x128xf32>
    %c49_i32_101 = arith.constant 49 : i32
    %305 = tpu.dynamic_rotate %6 by %c49_i32_101 dim 1 : vector<16x128xf32>, i32 -> vector<16x128xf32>
    %c60 = arith.constant 60 : index
    %c0_102 = arith.constant 0 : index
    %306 = vector.load %arg2[%c60, %c0_102] : memref<63x128xf32, #tpu.memory_space<vmem>>, vector<1x128xf32>
    %307 = vector.broadcast %306 : vector<1x128xf32> to vector<16x128xf32>
    %308 = arith.mulf %307, %305 : vector<16x128xf32>
    %309 = arith.addf %304, %308 : vector<16x128xf32>
    %c48_i32_103 = arith.constant 48 : i32
    %310 = tpu.dynamic_rotate %6 by %c48_i32_103 dim 1 : vector<16x128xf32>, i32 -> vector<16x128xf32>
    %c61 = arith.constant 61 : index
    %c0_104 = arith.constant 0 : index
    %311 = vector.load %arg2[%c61, %c0_104] : memref<63x128xf32, #tpu.memory_space<vmem>>, vector<1x128xf32>
    %312 = vector.broadcast %311 : vector<1x128xf32> to vector<16x128xf32>
    %313 = arith.mulf %312, %310 : vector<16x128xf32>
    %314 = arith.addf %309, %313 : vector<16x128xf32>
    %c47_i32_105 = arith.constant 47 : i32
    %315 = tpu.dynamic_rotate %6 by %c47_i32_105 dim 1 : vector<16x128xf32>, i32 -> vector<16x128xf32>
    %c62 = arith.constant 62 : index
    %c0_106 = arith.constant 0 : index
    %316 = vector.load %arg2[%c62, %c0_106] : memref<63x128xf32, #tpu.memory_space<vmem>>, vector<1x128xf32>
    %317 = vector.broadcast %316 : vector<1x128xf32> to vector<16x128xf32>
    %318 = arith.mulf %317, %315 : vector<16x128xf32>
    %319 = arith.addf %314, %318 : vector<16x128xf32>
    %cst_107 = arith.constant dense<0.000000e+00> : vector<128xf32>
    %320 = vector.multi_reduction <add>, %319, %cst_107 [0] : vector<16x128xf32> to vector<128xf32>
    %321 = vector.shape_cast %320 : vector<128xf32> to vector<1x128xf32>
    %322 = arith.mulf %319, %319 : vector<16x128xf32>
    %cst_108 = arith.constant dense<0.000000e+00> : vector<128xf32>
    %323 = vector.multi_reduction <add>, %322, %cst_108 [0] : vector<16x128xf32> to vector<128xf32>
    %324 = vector.shape_cast %323 : vector<128xf32> to vector<1x128xf32>
    %cst_109 = arith.constant 0.000000e+00 : f32
    %325 = vector.broadcast %cst_109 : f32 to vector<1x128xf32>
    %cst_110 = arith.constant 0.000000e+00 : f32
    %326 = vector.broadcast %cst_110 : f32 to vector<1x128xf32>
    %c0_111 = arith.constant 0 : index
    %c0_112 = arith.constant 0 : index
    %327 = vector.load %arg4[%c0_111, %c0_112] : memref<4x128xf32, #tpu.memory_space<vmem>>, vector<1x128xf32>
    %328 = arith.mulf %321, %327 : vector<1x128xf32>
    %329 = vector.shape_cast %328 : vector<1x128xf32> to vector<1x1x128xf32>
    %cst_113 = arith.constant dense<0.000000e+00> : vector<1xf32>
    %330 = vector.multi_reduction <add>, %329, %cst_113 [1, 2] : vector<1x1x128xf32> to vector<1xf32>
    %331 = vector.shape_cast %330 : vector<1xf32> to vector<1x1x1xf32>
    %332 = vector.extract %331[0, 0, 0] : f32 from vector<1x1x1xf32>
    %333 = arith.mulf %324, %327 : vector<1x128xf32>
    %334 = vector.shape_cast %333 : vector<1x128xf32> to vector<1x1x128xf32>
    %cst_114 = arith.constant dense<0.000000e+00> : vector<1xf32>
    %335 = vector.multi_reduction <add>, %334, %cst_114 [1, 2] : vector<1x1x128xf32> to vector<1xf32>
    %336 = vector.shape_cast %335 : vector<1xf32> to vector<1x1x1xf32>
    %337 = vector.extract %336[0, 0, 0] : f32 from vector<1x1x1xf32>
    %cst_115 = arith.constant 0.001953125 : f32
    %338 = arith.mulf %332, %cst_115 : f32
    %cst_116 = arith.constant 0.001953125 : f32
    %339 = arith.mulf %337, %cst_116 : f32
    %340 = arith.mulf %338, %338 : f32
    %341 = arith.subf %339, %340 : f32
    %cst_117 = arith.constant 9.99999974E-6 : f32
    %342 = arith.addf %341, %cst_117 : f32
    %343 = math.rsqrt %342 : f32
    %c0_118 = arith.constant 0 : index
    %344 = memref.load %arg5[%c0_118] : memref<17xf32, #tpu.memory_space<smem>>
    %345 = arith.mulf %343, %344 : f32
    %c4_119 = arith.constant 4 : index
    %346 = memref.load %arg5[%c4_119] : memref<17xf32, #tpu.memory_space<smem>>
    %347 = arith.mulf %338, %345 : f32
    %348 = arith.subf %346, %347 : f32
    %349 = vector.broadcast %345 : f32 to vector<1x128xf32>
    %350 = arith.mulf %349, %327 : vector<1x128xf32>
    %351 = arith.addf %325, %350 : vector<1x128xf32>
    %352 = vector.broadcast %348 : f32 to vector<1x128xf32>
    %353 = arith.mulf %352, %327 : vector<1x128xf32>
    %354 = arith.addf %326, %353 : vector<1x128xf32>
    %c1_120 = arith.constant 1 : index
    %c0_121 = arith.constant 0 : index
    %355 = vector.load %arg4[%c1_120, %c0_121] : memref<4x128xf32, #tpu.memory_space<vmem>>, vector<1x128xf32>
    %356 = arith.mulf %321, %355 : vector<1x128xf32>
    %357 = vector.shape_cast %356 : vector<1x128xf32> to vector<1x1x128xf32>
    %cst_122 = arith.constant dense<0.000000e+00> : vector<1xf32>
    %358 = vector.multi_reduction <add>, %357, %cst_122 [1, 2] : vector<1x1x128xf32> to vector<1xf32>
    %359 = vector.shape_cast %358 : vector<1xf32> to vector<1x1x1xf32>
    %360 = vector.extract %359[0, 0, 0] : f32 from vector<1x1x1xf32>
    %361 = arith.mulf %324, %355 : vector<1x128xf32>
    %362 = vector.shape_cast %361 : vector<1x128xf32> to vector<1x1x128xf32>
    %cst_123 = arith.constant dense<0.000000e+00> : vector<1xf32>
    %363 = vector.multi_reduction <add>, %362, %cst_123 [1, 2] : vector<1x1x128xf32> to vector<1xf32>
    %364 = vector.shape_cast %363 : vector<1xf32> to vector<1x1x1xf32>
    %365 = vector.extract %364[0, 0, 0] : f32 from vector<1x1x1xf32>
    %cst_124 = arith.constant 0.001953125 : f32
    %366 = arith.mulf %360, %cst_124 : f32
    %cst_125 = arith.constant 0.001953125 : f32
    %367 = arith.mulf %365, %cst_125 : f32
    %368 = arith.mulf %366, %366 : f32
    %369 = arith.subf %367, %368 : f32
    %cst_126 = arith.constant 9.99999974E-6 : f32
    %370 = arith.addf %369, %cst_126 : f32
    %371 = math.rsqrt %370 : f32
    %c1_127 = arith.constant 1 : index
    %372 = memref.load %arg5[%c1_127] : memref<17xf32, #tpu.memory_space<smem>>
    %373 = arith.mulf %371, %372 : f32
    %c5_128 = arith.constant 5 : index
    %374 = memref.load %arg5[%c5_128] : memref<17xf32, #tpu.memory_space<smem>>
    %375 = arith.mulf %366, %373 : f32
    %376 = arith.subf %374, %375 : f32
    %377 = vector.broadcast %373 : f32 to vector<1x128xf32>
    %378 = arith.mulf %377, %355 : vector<1x128xf32>
    %379 = arith.addf %351, %378 : vector<1x128xf32>
    %380 = vector.broadcast %376 : f32 to vector<1x128xf32>
    %381 = arith.mulf %380, %355 : vector<1x128xf32>
    %382 = arith.addf %354, %381 : vector<1x128xf32>
    %c2_129 = arith.constant 2 : index
    %c0_130 = arith.constant 0 : index
    %383 = vector.load %arg4[%c2_129, %c0_130] : memref<4x128xf32, #tpu.memory_space<vmem>>, vector<1x128xf32>
    %384 = arith.mulf %321, %383 : vector<1x128xf32>
    %385 = vector.shape_cast %384 : vector<1x128xf32> to vector<1x1x128xf32>
    %cst_131 = arith.constant dense<0.000000e+00> : vector<1xf32>
    %386 = vector.multi_reduction <add>, %385, %cst_131 [1, 2] : vector<1x1x128xf32> to vector<1xf32>
    %387 = vector.shape_cast %386 : vector<1xf32> to vector<1x1x1xf32>
    %388 = vector.extract %387[0, 0, 0] : f32 from vector<1x1x1xf32>
    %389 = arith.mulf %324, %383 : vector<1x128xf32>
    %390 = vector.shape_cast %389 : vector<1x128xf32> to vector<1x1x128xf32>
    %cst_132 = arith.constant dense<0.000000e+00> : vector<1xf32>
    %391 = vector.multi_reduction <add>, %390, %cst_132 [1, 2] : vector<1x1x128xf32> to vector<1xf32>
    %392 = vector.shape_cast %391 : vector<1xf32> to vector<1x1x1xf32>
    %393 = vector.extract %392[0, 0, 0] : f32 from vector<1x1x1xf32>
    %cst_133 = arith.constant 0.001953125 : f32
    %394 = arith.mulf %388, %cst_133 : f32
    %cst_134 = arith.constant 0.001953125 : f32
    %395 = arith.mulf %393, %cst_134 : f32
    %396 = arith.mulf %394, %394 : f32
    %397 = arith.subf %395, %396 : f32
    %cst_135 = arith.constant 9.99999974E-6 : f32
    %398 = arith.addf %397, %cst_135 : f32
    %399 = math.rsqrt %398 : f32
    %c2_136 = arith.constant 2 : index
    %400 = memref.load %arg5[%c2_136] : memref<17xf32, #tpu.memory_space<smem>>
    %401 = arith.mulf %399, %400 : f32
    %c6_137 = arith.constant 6 : index
    %402 = memref.load %arg5[%c6_137] : memref<17xf32, #tpu.memory_space<smem>>
    %403 = arith.mulf %394, %401 : f32
    %404 = arith.subf %402, %403 : f32
    %405 = vector.broadcast %401 : f32 to vector<1x128xf32>
    %406 = arith.mulf %405, %383 : vector<1x128xf32>
    %407 = arith.addf %379, %406 : vector<1x128xf32>
    %408 = vector.broadcast %404 : f32 to vector<1x128xf32>
    %409 = arith.mulf %408, %383 : vector<1x128xf32>
    %410 = arith.addf %382, %409 : vector<1x128xf32>
    %c3_138 = arith.constant 3 : index
    %c0_139 = arith.constant 0 : index
    %411 = vector.load %arg4[%c3_138, %c0_139] : memref<4x128xf32, #tpu.memory_space<vmem>>, vector<1x128xf32>
    %412 = arith.mulf %321, %411 : vector<1x128xf32>
    %413 = vector.shape_cast %412 : vector<1x128xf32> to vector<1x1x128xf32>
    %cst_140 = arith.constant dense<0.000000e+00> : vector<1xf32>
    %414 = vector.multi_reduction <add>, %413, %cst_140 [1, 2] : vector<1x1x128xf32> to vector<1xf32>
    %415 = vector.shape_cast %414 : vector<1xf32> to vector<1x1x1xf32>
    %416 = vector.extract %415[0, 0, 0] : f32 from vector<1x1x1xf32>
    %417 = arith.mulf %324, %411 : vector<1x128xf32>
    %418 = vector.shape_cast %417 : vector<1x128xf32> to vector<1x1x128xf32>
    %cst_141 = arith.constant dense<0.000000e+00> : vector<1xf32>
    %419 = vector.multi_reduction <add>, %418, %cst_141 [1, 2] : vector<1x1x128xf32> to vector<1xf32>
    %420 = vector.shape_cast %419 : vector<1xf32> to vector<1x1x1xf32>
    %421 = vector.extract %420[0, 0, 0] : f32 from vector<1x1x1xf32>
    %cst_142 = arith.constant 0.001953125 : f32
    %422 = arith.mulf %416, %cst_142 : f32
    %cst_143 = arith.constant 0.001953125 : f32
    %423 = arith.mulf %421, %cst_143 : f32
    %424 = arith.mulf %422, %422 : f32
    %425 = arith.subf %423, %424 : f32
    %cst_144 = arith.constant 9.99999974E-6 : f32
    %426 = arith.addf %425, %cst_144 : f32
    %427 = math.rsqrt %426 : f32
    %c3_145 = arith.constant 3 : index
    %428 = memref.load %arg5[%c3_145] : memref<17xf32, #tpu.memory_space<smem>>
    %429 = arith.mulf %427, %428 : f32
    %c7_146 = arith.constant 7 : index
    %430 = memref.load %arg5[%c7_146] : memref<17xf32, #tpu.memory_space<smem>>
    %431 = arith.mulf %422, %429 : f32
    %432 = arith.subf %430, %431 : f32
    %433 = vector.broadcast %429 : f32 to vector<1x128xf32>
    %434 = arith.mulf %433, %411 : vector<1x128xf32>
    %435 = arith.addf %407, %434 : vector<1x128xf32>
    %436 = vector.broadcast %432 : f32 to vector<1x128xf32>
    %437 = arith.mulf %436, %411 : vector<1x128xf32>
    %438 = arith.addf %410, %437 : vector<1x128xf32>
    %439 = vector.broadcast %435 : vector<1x128xf32> to vector<16x128xf32>
    %440 = arith.mulf %319, %439 : vector<16x128xf32>
    %441 = vector.broadcast %438 : vector<1x128xf32> to vector<16x128xf32>
    %442 = arith.addf %440, %441 : vector<16x128xf32>
    %cst_147 = arith.constant 0.000000e+00 : f32
    %443 = vector.broadcast %cst_147 : f32 to vector<16x128xf32>
    %444 = arith.cmpf oge, %442, %443 : vector<16x128xf32>
    %445 = vector.broadcast %0 : f32 to vector<16x128xf32>
    %446 = arith.mulf %445, %442 : vector<16x128xf32>
    %447 = arith.select %444, %442, %446 : vector<16x128xi1>, vector<16x128xf32>
    %cst_148 = arith.constant 0.000000e+00 : f32
    %448 = vector.broadcast %cst_148 : f32 to vector<1x128xf32>
    %449 = vector.extract_strided_slice %447 {offsets = [0, 0], sizes = [15, 128], strides = [1, 1]} : vector<16x128xf32> to vector<15x128xf32>
    %450 = tpu.concatenate %448, %449 in 0 : vector<1x128xf32>, vector<15x128xf32> -> vector<16x128xf32>
    %451 = vector.extract_strided_slice %447 {offsets = [1, 0], sizes = [15, 128], strides = [1, 1]} : vector<16x128xf32> to vector<15x128xf32>
    %452 = tpu.concatenate %451, %448 in 0 : vector<15x128xf32>, vector<1x128xf32> -> vector<16x128xf32>
    %cst_149 = arith.constant 0.000000e+00 : f32
    %453 = vector.broadcast %cst_149 : f32 to vector<16x128xf32>
    %c81_i32_150 = arith.constant 81 : i32
    %454 = tpu.dynamic_rotate %450 by %c81_i32_150 dim 1 : vector<16x128xf32>, i32 -> vector<16x128xf32>
    %c0_151 = arith.constant 0 : index
    %c0_152 = arith.constant 0 : index
    %455 = vector.load %arg3[%c0_151, %c0_152] : memref<63x128xf32, #tpu.memory_space<vmem>>, vector<1x128xf32>
    %456 = vector.broadcast %455 : vector<1x128xf32> to vector<16x128xf32>
    %457 = arith.mulf %456, %454 : vector<16x128xf32>
    %458 = arith.addf %453, %457 : vector<16x128xf32>
    %c80_i32_153 = arith.constant 80 : i32
    %459 = tpu.dynamic_rotate %450 by %c80_i32_153 dim 1 : vector<16x128xf32>, i32 -> vector<16x128xf32>
    %c1_154 = arith.constant 1 : index
    %c0_155 = arith.constant 0 : index
    %460 = vector.load %arg3[%c1_154, %c0_155] : memref<63x128xf32, #tpu.memory_space<vmem>>, vector<1x128xf32>
    %461 = vector.broadcast %460 : vector<1x128xf32> to vector<16x128xf32>
    %462 = arith.mulf %461, %459 : vector<16x128xf32>
    %463 = arith.addf %458, %462 : vector<16x128xf32>
    %c79_i32_156 = arith.constant 79 : i32
    %464 = tpu.dynamic_rotate %450 by %c79_i32_156 dim 1 : vector<16x128xf32>, i32 -> vector<16x128xf32>
    %c2_157 = arith.constant 2 : index
    %c0_158 = arith.constant 0 : index
    %465 = vector.load %arg3[%c2_157, %c0_158] : memref<63x128xf32, #tpu.memory_space<vmem>>, vector<1x128xf32>
    %466 = vector.broadcast %465 : vector<1x128xf32> to vector<16x128xf32>
    %467 = arith.mulf %466, %464 : vector<16x128xf32>
    %468 = arith.addf %463, %467 : vector<16x128xf32>
    %c81_i32_159 = arith.constant 81 : i32
    %469 = tpu.dynamic_rotate %447 by %c81_i32_159 dim 1 : vector<16x128xf32>, i32 -> vector<16x128xf32>
    %c3_160 = arith.constant 3 : index
    %c0_161 = arith.constant 0 : index
    %470 = vector.load %arg3[%c3_160, %c0_161] : memref<63x128xf32, #tpu.memory_space<vmem>>, vector<1x128xf32>
    %471 = vector.broadcast %470 : vector<1x128xf32> to vector<16x128xf32>
    %472 = arith.mulf %471, %469 : vector<16x128xf32>
    %473 = arith.addf %468, %472 : vector<16x128xf32>
    %c80_i32_162 = arith.constant 80 : i32
    %474 = tpu.dynamic_rotate %447 by %c80_i32_162 dim 1 : vector<16x128xf32>, i32 -> vector<16x128xf32>
    %c4_163 = arith.constant 4 : index
    %c0_164 = arith.constant 0 : index
    %475 = vector.load %arg3[%c4_163, %c0_164] : memref<63x128xf32, #tpu.memory_space<vmem>>, vector<1x128xf32>
    %476 = vector.broadcast %475 : vector<1x128xf32> to vector<16x128xf32>
    %477 = arith.mulf %476, %474 : vector<16x128xf32>
    %478 = arith.addf %473, %477 : vector<16x128xf32>
    %c79_i32_165 = arith.constant 79 : i32
    %479 = tpu.dynamic_rotate %447 by %c79_i32_165 dim 1 : vector<16x128xf32>, i32 -> vector<16x128xf32>
    %c5_166 = arith.constant 5 : index
    %c0_167 = arith.constant 0 : index
    %480 = vector.load %arg3[%c5_166, %c0_167] : memref<63x128xf32, #tpu.memory_space<vmem>>, vector<1x128xf32>
    %481 = vector.broadcast %480 : vector<1x128xf32> to vector<16x128xf32>
    %482 = arith.mulf %481, %479 : vector<16x128xf32>
    %483 = arith.addf %478, %482 : vector<16x128xf32>
    %c81_i32_168 = arith.constant 81 : i32
    %484 = tpu.dynamic_rotate %452 by %c81_i32_168 dim 1 : vector<16x128xf32>, i32 -> vector<16x128xf32>
    %c6_169 = arith.constant 6 : index
    %c0_170 = arith.constant 0 : index
    %485 = vector.load %arg3[%c6_169, %c0_170] : memref<63x128xf32, #tpu.memory_space<vmem>>, vector<1x128xf32>
    %486 = vector.broadcast %485 : vector<1x128xf32> to vector<16x128xf32>
    %487 = arith.mulf %486, %484 : vector<16x128xf32>
    %488 = arith.addf %483, %487 : vector<16x128xf32>
    %c80_i32_171 = arith.constant 80 : i32
    %489 = tpu.dynamic_rotate %452 by %c80_i32_171 dim 1 : vector<16x128xf32>, i32 -> vector<16x128xf32>
    %c7_172 = arith.constant 7 : index
    %c0_173 = arith.constant 0 : index
    %490 = vector.load %arg3[%c7_172, %c0_173] : memref<63x128xf32, #tpu.memory_space<vmem>>, vector<1x128xf32>
    %491 = vector.broadcast %490 : vector<1x128xf32> to vector<16x128xf32>
    %492 = arith.mulf %491, %489 : vector<16x128xf32>
    %493 = arith.addf %488, %492 : vector<16x128xf32>
    %c79_i32_174 = arith.constant 79 : i32
    %494 = tpu.dynamic_rotate %452 by %c79_i32_174 dim 1 : vector<16x128xf32>, i32 -> vector<16x128xf32>
    %c8_175 = arith.constant 8 : index
    %c0_176 = arith.constant 0 : index
    %495 = vector.load %arg3[%c8_175, %c0_176] : memref<63x128xf32, #tpu.memory_space<vmem>>, vector<1x128xf32>
    %496 = vector.broadcast %495 : vector<1x128xf32> to vector<16x128xf32>
    %497 = arith.mulf %496, %494 : vector<16x128xf32>
    %498 = arith.addf %493, %497 : vector<16x128xf32>
    %c97_i32_177 = arith.constant 97 : i32
    %499 = tpu.dynamic_rotate %450 by %c97_i32_177 dim 1 : vector<16x128xf32>, i32 -> vector<16x128xf32>
    %c9_178 = arith.constant 9 : index
    %c0_179 = arith.constant 0 : index
    %500 = vector.load %arg3[%c9_178, %c0_179] : memref<63x128xf32, #tpu.memory_space<vmem>>, vector<1x128xf32>
    %501 = vector.broadcast %500 : vector<1x128xf32> to vector<16x128xf32>
    %502 = arith.mulf %501, %499 : vector<16x128xf32>
    %503 = arith.addf %498, %502 : vector<16x128xf32>
    %c96_i32_180 = arith.constant 96 : i32
    %504 = tpu.dynamic_rotate %450 by %c96_i32_180 dim 1 : vector<16x128xf32>, i32 -> vector<16x128xf32>
    %c10_181 = arith.constant 10 : index
    %c0_182 = arith.constant 0 : index
    %505 = vector.load %arg3[%c10_181, %c0_182] : memref<63x128xf32, #tpu.memory_space<vmem>>, vector<1x128xf32>
    %506 = vector.broadcast %505 : vector<1x128xf32> to vector<16x128xf32>
    %507 = arith.mulf %506, %504 : vector<16x128xf32>
    %508 = arith.addf %503, %507 : vector<16x128xf32>
    %c95_i32_183 = arith.constant 95 : i32
    %509 = tpu.dynamic_rotate %450 by %c95_i32_183 dim 1 : vector<16x128xf32>, i32 -> vector<16x128xf32>
    %c11_184 = arith.constant 11 : index
    %c0_185 = arith.constant 0 : index
    %510 = vector.load %arg3[%c11_184, %c0_185] : memref<63x128xf32, #tpu.memory_space<vmem>>, vector<1x128xf32>
    %511 = vector.broadcast %510 : vector<1x128xf32> to vector<16x128xf32>
    %512 = arith.mulf %511, %509 : vector<16x128xf32>
    %513 = arith.addf %508, %512 : vector<16x128xf32>
    %c97_i32_186 = arith.constant 97 : i32
    %514 = tpu.dynamic_rotate %447 by %c97_i32_186 dim 1 : vector<16x128xf32>, i32 -> vector<16x128xf32>
    %c12_187 = arith.constant 12 : index
    %c0_188 = arith.constant 0 : index
    %515 = vector.load %arg3[%c12_187, %c0_188] : memref<63x128xf32, #tpu.memory_space<vmem>>, vector<1x128xf32>
    %516 = vector.broadcast %515 : vector<1x128xf32> to vector<16x128xf32>
    %517 = arith.mulf %516, %514 : vector<16x128xf32>
    %518 = arith.addf %513, %517 : vector<16x128xf32>
    %c96_i32_189 = arith.constant 96 : i32
    %519 = tpu.dynamic_rotate %447 by %c96_i32_189 dim 1 : vector<16x128xf32>, i32 -> vector<16x128xf32>
    %c13_190 = arith.constant 13 : index
    %c0_191 = arith.constant 0 : index
    %520 = vector.load %arg3[%c13_190, %c0_191] : memref<63x128xf32, #tpu.memory_space<vmem>>, vector<1x128xf32>
    %521 = vector.broadcast %520 : vector<1x128xf32> to vector<16x128xf32>
    %522 = arith.mulf %521, %519 : vector<16x128xf32>
    %523 = arith.addf %518, %522 : vector<16x128xf32>
    %c95_i32_192 = arith.constant 95 : i32
    %524 = tpu.dynamic_rotate %447 by %c95_i32_192 dim 1 : vector<16x128xf32>, i32 -> vector<16x128xf32>
    %c14_193 = arith.constant 14 : index
    %c0_194 = arith.constant 0 : index
    %525 = vector.load %arg3[%c14_193, %c0_194] : memref<63x128xf32, #tpu.memory_space<vmem>>, vector<1x128xf32>
    %526 = vector.broadcast %525 : vector<1x128xf32> to vector<16x128xf32>
    %527 = arith.mulf %526, %524 : vector<16x128xf32>
    %528 = arith.addf %523, %527 : vector<16x128xf32>
    %c97_i32_195 = arith.constant 97 : i32
    %529 = tpu.dynamic_rotate %452 by %c97_i32_195 dim 1 : vector<16x128xf32>, i32 -> vector<16x128xf32>
    %c15_196 = arith.constant 15 : index
    %c0_197 = arith.constant 0 : index
    %530 = vector.load %arg3[%c15_196, %c0_197] : memref<63x128xf32, #tpu.memory_space<vmem>>, vector<1x128xf32>
    %531 = vector.broadcast %530 : vector<1x128xf32> to vector<16x128xf32>
    %532 = arith.mulf %531, %529 : vector<16x128xf32>
    %533 = arith.addf %528, %532 : vector<16x128xf32>
    %c96_i32_198 = arith.constant 96 : i32
    %534 = tpu.dynamic_rotate %452 by %c96_i32_198 dim 1 : vector<16x128xf32>, i32 -> vector<16x128xf32>
    %c16_199 = arith.constant 16 : index
    %c0_200 = arith.constant 0 : index
    %535 = vector.load %arg3[%c16_199, %c0_200] : memref<63x128xf32, #tpu.memory_space<vmem>>, vector<1x128xf32>
    %536 = vector.broadcast %535 : vector<1x128xf32> to vector<16x128xf32>
    %537 = arith.mulf %536, %534 : vector<16x128xf32>
    %538 = arith.addf %533, %537 : vector<16x128xf32>
    %c95_i32_201 = arith.constant 95 : i32
    %539 = tpu.dynamic_rotate %452 by %c95_i32_201 dim 1 : vector<16x128xf32>, i32 -> vector<16x128xf32>
    %c17_202 = arith.constant 17 : index
    %c0_203 = arith.constant 0 : index
    %540 = vector.load %arg3[%c17_202, %c0_203] : memref<63x128xf32, #tpu.memory_space<vmem>>, vector<1x128xf32>
    %541 = vector.broadcast %540 : vector<1x128xf32> to vector<16x128xf32>
    %542 = arith.mulf %541, %539 : vector<16x128xf32>
    %543 = arith.addf %538, %542 : vector<16x128xf32>
    %c113_i32_204 = arith.constant 113 : i32
    %544 = tpu.dynamic_rotate %450 by %c113_i32_204 dim 1 : vector<16x128xf32>, i32 -> vector<16x128xf32>
    %c18_205 = arith.constant 18 : index
    %c0_206 = arith.constant 0 : index
    %545 = vector.load %arg3[%c18_205, %c0_206] : memref<63x128xf32, #tpu.memory_space<vmem>>, vector<1x128xf32>
    %546 = vector.broadcast %545 : vector<1x128xf32> to vector<16x128xf32>
    %547 = arith.mulf %546, %544 : vector<16x128xf32>
    %548 = arith.addf %543, %547 : vector<16x128xf32>
    %c112_i32_207 = arith.constant 112 : i32
    %549 = tpu.dynamic_rotate %450 by %c112_i32_207 dim 1 : vector<16x128xf32>, i32 -> vector<16x128xf32>
    %c19_208 = arith.constant 19 : index
    %c0_209 = arith.constant 0 : index
    %550 = vector.load %arg3[%c19_208, %c0_209] : memref<63x128xf32, #tpu.memory_space<vmem>>, vector<1x128xf32>
    %551 = vector.broadcast %550 : vector<1x128xf32> to vector<16x128xf32>
    %552 = arith.mulf %551, %549 : vector<16x128xf32>
    %553 = arith.addf %548, %552 : vector<16x128xf32>
    %c111_i32_210 = arith.constant 111 : i32
    %554 = tpu.dynamic_rotate %450 by %c111_i32_210 dim 1 : vector<16x128xf32>, i32 -> vector<16x128xf32>
    %c20_211 = arith.constant 20 : index
    %c0_212 = arith.constant 0 : index
    %555 = vector.load %arg3[%c20_211, %c0_212] : memref<63x128xf32, #tpu.memory_space<vmem>>, vector<1x128xf32>
    %556 = vector.broadcast %555 : vector<1x128xf32> to vector<16x128xf32>
    %557 = arith.mulf %556, %554 : vector<16x128xf32>
    %558 = arith.addf %553, %557 : vector<16x128xf32>
    %c113_i32_213 = arith.constant 113 : i32
    %559 = tpu.dynamic_rotate %447 by %c113_i32_213 dim 1 : vector<16x128xf32>, i32 -> vector<16x128xf32>
    %c21_214 = arith.constant 21 : index
    %c0_215 = arith.constant 0 : index
    %560 = vector.load %arg3[%c21_214, %c0_215] : memref<63x128xf32, #tpu.memory_space<vmem>>, vector<1x128xf32>
    %561 = vector.broadcast %560 : vector<1x128xf32> to vector<16x128xf32>
    %562 = arith.mulf %561, %559 : vector<16x128xf32>
    %563 = arith.addf %558, %562 : vector<16x128xf32>
    %c112_i32_216 = arith.constant 112 : i32
    %564 = tpu.dynamic_rotate %447 by %c112_i32_216 dim 1 : vector<16x128xf32>, i32 -> vector<16x128xf32>
    %c22_217 = arith.constant 22 : index
    %c0_218 = arith.constant 0 : index
    %565 = vector.load %arg3[%c22_217, %c0_218] : memref<63x128xf32, #tpu.memory_space<vmem>>, vector<1x128xf32>
    %566 = vector.broadcast %565 : vector<1x128xf32> to vector<16x128xf32>
    %567 = arith.mulf %566, %564 : vector<16x128xf32>
    %568 = arith.addf %563, %567 : vector<16x128xf32>
    %c111_i32_219 = arith.constant 111 : i32
    %569 = tpu.dynamic_rotate %447 by %c111_i32_219 dim 1 : vector<16x128xf32>, i32 -> vector<16x128xf32>
    %c23_220 = arith.constant 23 : index
    %c0_221 = arith.constant 0 : index
    %570 = vector.load %arg3[%c23_220, %c0_221] : memref<63x128xf32, #tpu.memory_space<vmem>>, vector<1x128xf32>
    %571 = vector.broadcast %570 : vector<1x128xf32> to vector<16x128xf32>
    %572 = arith.mulf %571, %569 : vector<16x128xf32>
    %573 = arith.addf %568, %572 : vector<16x128xf32>
    %c113_i32_222 = arith.constant 113 : i32
    %574 = tpu.dynamic_rotate %452 by %c113_i32_222 dim 1 : vector<16x128xf32>, i32 -> vector<16x128xf32>
    %c24_223 = arith.constant 24 : index
    %c0_224 = arith.constant 0 : index
    %575 = vector.load %arg3[%c24_223, %c0_224] : memref<63x128xf32, #tpu.memory_space<vmem>>, vector<1x128xf32>
    %576 = vector.broadcast %575 : vector<1x128xf32> to vector<16x128xf32>
    %577 = arith.mulf %576, %574 : vector<16x128xf32>
    %578 = arith.addf %573, %577 : vector<16x128xf32>
    %c112_i32_225 = arith.constant 112 : i32
    %579 = tpu.dynamic_rotate %452 by %c112_i32_225 dim 1 : vector<16x128xf32>, i32 -> vector<16x128xf32>
    %c25_226 = arith.constant 25 : index
    %c0_227 = arith.constant 0 : index
    %580 = vector.load %arg3[%c25_226, %c0_227] : memref<63x128xf32, #tpu.memory_space<vmem>>, vector<1x128xf32>
    %581 = vector.broadcast %580 : vector<1x128xf32> to vector<16x128xf32>
    %582 = arith.mulf %581, %579 : vector<16x128xf32>
    %583 = arith.addf %578, %582 : vector<16x128xf32>
    %c111_i32_228 = arith.constant 111 : i32
    %584 = tpu.dynamic_rotate %452 by %c111_i32_228 dim 1 : vector<16x128xf32>, i32 -> vector<16x128xf32>
    %c26_229 = arith.constant 26 : index
    %c0_230 = arith.constant 0 : index
    %585 = vector.load %arg3[%c26_229, %c0_230] : memref<63x128xf32, #tpu.memory_space<vmem>>, vector<1x128xf32>
    %586 = vector.broadcast %585 : vector<1x128xf32> to vector<16x128xf32>
    %587 = arith.mulf %586, %584 : vector<16x128xf32>
    %588 = arith.addf %583, %587 : vector<16x128xf32>
    %c1_i32_231 = arith.constant 1 : i32
    %589 = tpu.dynamic_rotate %450 by %c1_i32_231 dim 1 : vector<16x128xf32>, i32 -> vector<16x128xf32>
    %c27_232 = arith.constant 27 : index
    %c0_233 = arith.constant 0 : index
    %590 = vector.load %arg3[%c27_232, %c0_233] : memref<63x128xf32, #tpu.memory_space<vmem>>, vector<1x128xf32>
    %591 = vector.broadcast %590 : vector<1x128xf32> to vector<16x128xf32>
    %592 = arith.mulf %591, %589 : vector<16x128xf32>
    %593 = arith.addf %588, %592 : vector<16x128xf32>
    %c28_234 = arith.constant 28 : index
    %c0_235 = arith.constant 0 : index
    %594 = vector.load %arg3[%c28_234, %c0_235] : memref<63x128xf32, #tpu.memory_space<vmem>>, vector<1x128xf32>
    %595 = vector.broadcast %594 : vector<1x128xf32> to vector<16x128xf32>
    %596 = arith.mulf %595, %450 : vector<16x128xf32>
    %597 = arith.addf %593, %596 : vector<16x128xf32>
    %c127_i32_236 = arith.constant 127 : i32
    %598 = tpu.dynamic_rotate %450 by %c127_i32_236 dim 1 : vector<16x128xf32>, i32 -> vector<16x128xf32>
    %c29_237 = arith.constant 29 : index
    %c0_238 = arith.constant 0 : index
    %599 = vector.load %arg3[%c29_237, %c0_238] : memref<63x128xf32, #tpu.memory_space<vmem>>, vector<1x128xf32>
    %600 = vector.broadcast %599 : vector<1x128xf32> to vector<16x128xf32>
    %601 = arith.mulf %600, %598 : vector<16x128xf32>
    %602 = arith.addf %597, %601 : vector<16x128xf32>
    %c1_i32_239 = arith.constant 1 : i32
    %603 = tpu.dynamic_rotate %447 by %c1_i32_239 dim 1 : vector<16x128xf32>, i32 -> vector<16x128xf32>
    %c30_240 = arith.constant 30 : index
    %c0_241 = arith.constant 0 : index
    %604 = vector.load %arg3[%c30_240, %c0_241] : memref<63x128xf32, #tpu.memory_space<vmem>>, vector<1x128xf32>
    %605 = vector.broadcast %604 : vector<1x128xf32> to vector<16x128xf32>
    %606 = arith.mulf %605, %603 : vector<16x128xf32>
    %607 = arith.addf %602, %606 : vector<16x128xf32>
    %c31_242 = arith.constant 31 : index
    %c0_243 = arith.constant 0 : index
    %608 = vector.load %arg3[%c31_242, %c0_243] : memref<63x128xf32, #tpu.memory_space<vmem>>, vector<1x128xf32>
    %609 = vector.broadcast %608 : vector<1x128xf32> to vector<16x128xf32>
    %610 = arith.mulf %609, %447 : vector<16x128xf32>
    %611 = arith.addf %607, %610 : vector<16x128xf32>
    %c127_i32_244 = arith.constant 127 : i32
    %612 = tpu.dynamic_rotate %447 by %c127_i32_244 dim 1 : vector<16x128xf32>, i32 -> vector<16x128xf32>
    %c32_245 = arith.constant 32 : index
    %c0_246 = arith.constant 0 : index
    %613 = vector.load %arg3[%c32_245, %c0_246] : memref<63x128xf32, #tpu.memory_space<vmem>>, vector<1x128xf32>
    %614 = vector.broadcast %613 : vector<1x128xf32> to vector<16x128xf32>
    %615 = arith.mulf %614, %612 : vector<16x128xf32>
    %616 = arith.addf %611, %615 : vector<16x128xf32>
    %c1_i32_247 = arith.constant 1 : i32
    %617 = tpu.dynamic_rotate %452 by %c1_i32_247 dim 1 : vector<16x128xf32>, i32 -> vector<16x128xf32>
    %c33_248 = arith.constant 33 : index
    %c0_249 = arith.constant 0 : index
    %618 = vector.load %arg3[%c33_248, %c0_249] : memref<63x128xf32, #tpu.memory_space<vmem>>, vector<1x128xf32>
    %619 = vector.broadcast %618 : vector<1x128xf32> to vector<16x128xf32>
    %620 = arith.mulf %619, %617 : vector<16x128xf32>
    %621 = arith.addf %616, %620 : vector<16x128xf32>
    %c34_250 = arith.constant 34 : index
    %c0_251 = arith.constant 0 : index
    %622 = vector.load %arg3[%c34_250, %c0_251] : memref<63x128xf32, #tpu.memory_space<vmem>>, vector<1x128xf32>
    %623 = vector.broadcast %622 : vector<1x128xf32> to vector<16x128xf32>
    %624 = arith.mulf %623, %452 : vector<16x128xf32>
    %625 = arith.addf %621, %624 : vector<16x128xf32>
    %c127_i32_252 = arith.constant 127 : i32
    %626 = tpu.dynamic_rotate %452 by %c127_i32_252 dim 1 : vector<16x128xf32>, i32 -> vector<16x128xf32>
    %c35_253 = arith.constant 35 : index
    %c0_254 = arith.constant 0 : index
    %627 = vector.load %arg3[%c35_253, %c0_254] : memref<63x128xf32, #tpu.memory_space<vmem>>, vector<1x128xf32>
    %628 = vector.broadcast %627 : vector<1x128xf32> to vector<16x128xf32>
    %629 = arith.mulf %628, %626 : vector<16x128xf32>
    %630 = arith.addf %625, %629 : vector<16x128xf32>
    %c17_i32_255 = arith.constant 17 : i32
    %631 = tpu.dynamic_rotate %450 by %c17_i32_255 dim 1 : vector<16x128xf32>, i32 -> vector<16x128xf32>
    %c36_256 = arith.constant 36 : index
    %c0_257 = arith.constant 0 : index
    %632 = vector.load %arg3[%c36_256, %c0_257] : memref<63x128xf32, #tpu.memory_space<vmem>>, vector<1x128xf32>
    %633 = vector.broadcast %632 : vector<1x128xf32> to vector<16x128xf32>
    %634 = arith.mulf %633, %631 : vector<16x128xf32>
    %635 = arith.addf %630, %634 : vector<16x128xf32>
    %c16_i32_258 = arith.constant 16 : i32
    %636 = tpu.dynamic_rotate %450 by %c16_i32_258 dim 1 : vector<16x128xf32>, i32 -> vector<16x128xf32>
    %c37_259 = arith.constant 37 : index
    %c0_260 = arith.constant 0 : index
    %637 = vector.load %arg3[%c37_259, %c0_260] : memref<63x128xf32, #tpu.memory_space<vmem>>, vector<1x128xf32>
    %638 = vector.broadcast %637 : vector<1x128xf32> to vector<16x128xf32>
    %639 = arith.mulf %638, %636 : vector<16x128xf32>
    %640 = arith.addf %635, %639 : vector<16x128xf32>
    %c15_i32_261 = arith.constant 15 : i32
    %641 = tpu.dynamic_rotate %450 by %c15_i32_261 dim 1 : vector<16x128xf32>, i32 -> vector<16x128xf32>
    %c38_262 = arith.constant 38 : index
    %c0_263 = arith.constant 0 : index
    %642 = vector.load %arg3[%c38_262, %c0_263] : memref<63x128xf32, #tpu.memory_space<vmem>>, vector<1x128xf32>
    %643 = vector.broadcast %642 : vector<1x128xf32> to vector<16x128xf32>
    %644 = arith.mulf %643, %641 : vector<16x128xf32>
    %645 = arith.addf %640, %644 : vector<16x128xf32>
    %c17_i32_264 = arith.constant 17 : i32
    %646 = tpu.dynamic_rotate %447 by %c17_i32_264 dim 1 : vector<16x128xf32>, i32 -> vector<16x128xf32>
    %c39_265 = arith.constant 39 : index
    %c0_266 = arith.constant 0 : index
    %647 = vector.load %arg3[%c39_265, %c0_266] : memref<63x128xf32, #tpu.memory_space<vmem>>, vector<1x128xf32>
    %648 = vector.broadcast %647 : vector<1x128xf32> to vector<16x128xf32>
    %649 = arith.mulf %648, %646 : vector<16x128xf32>
    %650 = arith.addf %645, %649 : vector<16x128xf32>
    %c16_i32_267 = arith.constant 16 : i32
    %651 = tpu.dynamic_rotate %447 by %c16_i32_267 dim 1 : vector<16x128xf32>, i32 -> vector<16x128xf32>
    %c40_268 = arith.constant 40 : index
    %c0_269 = arith.constant 0 : index
    %652 = vector.load %arg3[%c40_268, %c0_269] : memref<63x128xf32, #tpu.memory_space<vmem>>, vector<1x128xf32>
    %653 = vector.broadcast %652 : vector<1x128xf32> to vector<16x128xf32>
    %654 = arith.mulf %653, %651 : vector<16x128xf32>
    %655 = arith.addf %650, %654 : vector<16x128xf32>
    %c15_i32_270 = arith.constant 15 : i32
    %656 = tpu.dynamic_rotate %447 by %c15_i32_270 dim 1 : vector<16x128xf32>, i32 -> vector<16x128xf32>
    %c41_271 = arith.constant 41 : index
    %c0_272 = arith.constant 0 : index
    %657 = vector.load %arg3[%c41_271, %c0_272] : memref<63x128xf32, #tpu.memory_space<vmem>>, vector<1x128xf32>
    %658 = vector.broadcast %657 : vector<1x128xf32> to vector<16x128xf32>
    %659 = arith.mulf %658, %656 : vector<16x128xf32>
    %660 = arith.addf %655, %659 : vector<16x128xf32>
    %c17_i32_273 = arith.constant 17 : i32
    %661 = tpu.dynamic_rotate %452 by %c17_i32_273 dim 1 : vector<16x128xf32>, i32 -> vector<16x128xf32>
    %c42_274 = arith.constant 42 : index
    %c0_275 = arith.constant 0 : index
    %662 = vector.load %arg3[%c42_274, %c0_275] : memref<63x128xf32, #tpu.memory_space<vmem>>, vector<1x128xf32>
    %663 = vector.broadcast %662 : vector<1x128xf32> to vector<16x128xf32>
    %664 = arith.mulf %663, %661 : vector<16x128xf32>
    %665 = arith.addf %660, %664 : vector<16x128xf32>
    %c16_i32_276 = arith.constant 16 : i32
    %666 = tpu.dynamic_rotate %452 by %c16_i32_276 dim 1 : vector<16x128xf32>, i32 -> vector<16x128xf32>
    %c43_277 = arith.constant 43 : index
    %c0_278 = arith.constant 0 : index
    %667 = vector.load %arg3[%c43_277, %c0_278] : memref<63x128xf32, #tpu.memory_space<vmem>>, vector<1x128xf32>
    %668 = vector.broadcast %667 : vector<1x128xf32> to vector<16x128xf32>
    %669 = arith.mulf %668, %666 : vector<16x128xf32>
    %670 = arith.addf %665, %669 : vector<16x128xf32>
    %c15_i32_279 = arith.constant 15 : i32
    %671 = tpu.dynamic_rotate %452 by %c15_i32_279 dim 1 : vector<16x128xf32>, i32 -> vector<16x128xf32>
    %c44_280 = arith.constant 44 : index
    %c0_281 = arith.constant 0 : index
    %672 = vector.load %arg3[%c44_280, %c0_281] : memref<63x128xf32, #tpu.memory_space<vmem>>, vector<1x128xf32>
    %673 = vector.broadcast %672 : vector<1x128xf32> to vector<16x128xf32>
    %674 = arith.mulf %673, %671 : vector<16x128xf32>
    %675 = arith.addf %670, %674 : vector<16x128xf32>
    %c33_i32_282 = arith.constant 33 : i32
    %676 = tpu.dynamic_rotate %450 by %c33_i32_282 dim 1 : vector<16x128xf32>, i32 -> vector<16x128xf32>
    %c45_283 = arith.constant 45 : index
    %c0_284 = arith.constant 0 : index
    %677 = vector.load %arg3[%c45_283, %c0_284] : memref<63x128xf32, #tpu.memory_space<vmem>>, vector<1x128xf32>
    %678 = vector.broadcast %677 : vector<1x128xf32> to vector<16x128xf32>
    %679 = arith.mulf %678, %676 : vector<16x128xf32>
    %680 = arith.addf %675, %679 : vector<16x128xf32>
    %c32_i32_285 = arith.constant 32 : i32
    %681 = tpu.dynamic_rotate %450 by %c32_i32_285 dim 1 : vector<16x128xf32>, i32 -> vector<16x128xf32>
    %c46_286 = arith.constant 46 : index
    %c0_287 = arith.constant 0 : index
    %682 = vector.load %arg3[%c46_286, %c0_287] : memref<63x128xf32, #tpu.memory_space<vmem>>, vector<1x128xf32>
    %683 = vector.broadcast %682 : vector<1x128xf32> to vector<16x128xf32>
    %684 = arith.mulf %683, %681 : vector<16x128xf32>
    %685 = arith.addf %680, %684 : vector<16x128xf32>
    %c31_i32_288 = arith.constant 31 : i32
    %686 = tpu.dynamic_rotate %450 by %c31_i32_288 dim 1 : vector<16x128xf32>, i32 -> vector<16x128xf32>
    %c47_289 = arith.constant 47 : index
    %c0_290 = arith.constant 0 : index
    %687 = vector.load %arg3[%c47_289, %c0_290] : memref<63x128xf32, #tpu.memory_space<vmem>>, vector<1x128xf32>
    %688 = vector.broadcast %687 : vector<1x128xf32> to vector<16x128xf32>
    %689 = arith.mulf %688, %686 : vector<16x128xf32>
    %690 = arith.addf %685, %689 : vector<16x128xf32>
    %c33_i32_291 = arith.constant 33 : i32
    %691 = tpu.dynamic_rotate %447 by %c33_i32_291 dim 1 : vector<16x128xf32>, i32 -> vector<16x128xf32>
    %c48_292 = arith.constant 48 : index
    %c0_293 = arith.constant 0 : index
    %692 = vector.load %arg3[%c48_292, %c0_293] : memref<63x128xf32, #tpu.memory_space<vmem>>, vector<1x128xf32>
    %693 = vector.broadcast %692 : vector<1x128xf32> to vector<16x128xf32>
    %694 = arith.mulf %693, %691 : vector<16x128xf32>
    %695 = arith.addf %690, %694 : vector<16x128xf32>
    %c32_i32_294 = arith.constant 32 : i32
    %696 = tpu.dynamic_rotate %447 by %c32_i32_294 dim 1 : vector<16x128xf32>, i32 -> vector<16x128xf32>
    %c49_295 = arith.constant 49 : index
    %c0_296 = arith.constant 0 : index
    %697 = vector.load %arg3[%c49_295, %c0_296] : memref<63x128xf32, #tpu.memory_space<vmem>>, vector<1x128xf32>
    %698 = vector.broadcast %697 : vector<1x128xf32> to vector<16x128xf32>
    %699 = arith.mulf %698, %696 : vector<16x128xf32>
    %700 = arith.addf %695, %699 : vector<16x128xf32>
    %c31_i32_297 = arith.constant 31 : i32
    %701 = tpu.dynamic_rotate %447 by %c31_i32_297 dim 1 : vector<16x128xf32>, i32 -> vector<16x128xf32>
    %c50_298 = arith.constant 50 : index
    %c0_299 = arith.constant 0 : index
    %702 = vector.load %arg3[%c50_298, %c0_299] : memref<63x128xf32, #tpu.memory_space<vmem>>, vector<1x128xf32>
    %703 = vector.broadcast %702 : vector<1x128xf32> to vector<16x128xf32>
    %704 = arith.mulf %703, %701 : vector<16x128xf32>
    %705 = arith.addf %700, %704 : vector<16x128xf32>
    %c33_i32_300 = arith.constant 33 : i32
    %706 = tpu.dynamic_rotate %452 by %c33_i32_300 dim 1 : vector<16x128xf32>, i32 -> vector<16x128xf32>
    %c51_301 = arith.constant 51 : index
    %c0_302 = arith.constant 0 : index
    %707 = vector.load %arg3[%c51_301, %c0_302] : memref<63x128xf32, #tpu.memory_space<vmem>>, vector<1x128xf32>
    %708 = vector.broadcast %707 : vector<1x128xf32> to vector<16x128xf32>
    %709 = arith.mulf %708, %706 : vector<16x128xf32>
    %710 = arith.addf %705, %709 : vector<16x128xf32>
    %c32_i32_303 = arith.constant 32 : i32
    %711 = tpu.dynamic_rotate %452 by %c32_i32_303 dim 1 : vector<16x128xf32>, i32 -> vector<16x128xf32>
    %c52_304 = arith.constant 52 : index
    %c0_305 = arith.constant 0 : index
    %712 = vector.load %arg3[%c52_304, %c0_305] : memref<63x128xf32, #tpu.memory_space<vmem>>, vector<1x128xf32>
    %713 = vector.broadcast %712 : vector<1x128xf32> to vector<16x128xf32>
    %714 = arith.mulf %713, %711 : vector<16x128xf32>
    %715 = arith.addf %710, %714 : vector<16x128xf32>
    %c31_i32_306 = arith.constant 31 : i32
    %716 = tpu.dynamic_rotate %452 by %c31_i32_306 dim 1 : vector<16x128xf32>, i32 -> vector<16x128xf32>
    %c53_307 = arith.constant 53 : index
    %c0_308 = arith.constant 0 : index
    %717 = vector.load %arg3[%c53_307, %c0_308] : memref<63x128xf32, #tpu.memory_space<vmem>>, vector<1x128xf32>
    %718 = vector.broadcast %717 : vector<1x128xf32> to vector<16x128xf32>
    %719 = arith.mulf %718, %716 : vector<16x128xf32>
    %720 = arith.addf %715, %719 : vector<16x128xf32>
    %c49_i32_309 = arith.constant 49 : i32
    %721 = tpu.dynamic_rotate %450 by %c49_i32_309 dim 1 : vector<16x128xf32>, i32 -> vector<16x128xf32>
    %c54_310 = arith.constant 54 : index
    %c0_311 = arith.constant 0 : index
    %722 = vector.load %arg3[%c54_310, %c0_311] : memref<63x128xf32, #tpu.memory_space<vmem>>, vector<1x128xf32>
    %723 = vector.broadcast %722 : vector<1x128xf32> to vector<16x128xf32>
    %724 = arith.mulf %723, %721 : vector<16x128xf32>
    %725 = arith.addf %720, %724 : vector<16x128xf32>
    %c48_i32_312 = arith.constant 48 : i32
    %726 = tpu.dynamic_rotate %450 by %c48_i32_312 dim 1 : vector<16x128xf32>, i32 -> vector<16x128xf32>
    %c55_313 = arith.constant 55 : index
    %c0_314 = arith.constant 0 : index
    %727 = vector.load %arg3[%c55_313, %c0_314] : memref<63x128xf32, #tpu.memory_space<vmem>>, vector<1x128xf32>
    %728 = vector.broadcast %727 : vector<1x128xf32> to vector<16x128xf32>
    %729 = arith.mulf %728, %726 : vector<16x128xf32>
    %730 = arith.addf %725, %729 : vector<16x128xf32>
    %c47_i32_315 = arith.constant 47 : i32
    %731 = tpu.dynamic_rotate %450 by %c47_i32_315 dim 1 : vector<16x128xf32>, i32 -> vector<16x128xf32>
    %c56_316 = arith.constant 56 : index
    %c0_317 = arith.constant 0 : index
    %732 = vector.load %arg3[%c56_316, %c0_317] : memref<63x128xf32, #tpu.memory_space<vmem>>, vector<1x128xf32>
    %733 = vector.broadcast %732 : vector<1x128xf32> to vector<16x128xf32>
    %734 = arith.mulf %733, %731 : vector<16x128xf32>
    %735 = arith.addf %730, %734 : vector<16x128xf32>
    %c49_i32_318 = arith.constant 49 : i32
    %736 = tpu.dynamic_rotate %447 by %c49_i32_318 dim 1 : vector<16x128xf32>, i32 -> vector<16x128xf32>
    %c57_319 = arith.constant 57 : index
    %c0_320 = arith.constant 0 : index
    %737 = vector.load %arg3[%c57_319, %c0_320] : memref<63x128xf32, #tpu.memory_space<vmem>>, vector<1x128xf32>
    %738 = vector.broadcast %737 : vector<1x128xf32> to vector<16x128xf32>
    %739 = arith.mulf %738, %736 : vector<16x128xf32>
    %740 = arith.addf %735, %739 : vector<16x128xf32>
    %c48_i32_321 = arith.constant 48 : i32
    %741 = tpu.dynamic_rotate %447 by %c48_i32_321 dim 1 : vector<16x128xf32>, i32 -> vector<16x128xf32>
    %c58_322 = arith.constant 58 : index
    %c0_323 = arith.constant 0 : index
    %742 = vector.load %arg3[%c58_322, %c0_323] : memref<63x128xf32, #tpu.memory_space<vmem>>, vector<1x128xf32>
    %743 = vector.broadcast %742 : vector<1x128xf32> to vector<16x128xf32>
    %744 = arith.mulf %743, %741 : vector<16x128xf32>
    %745 = arith.addf %740, %744 : vector<16x128xf32>
    %c47_i32_324 = arith.constant 47 : i32
    %746 = tpu.dynamic_rotate %447 by %c47_i32_324 dim 1 : vector<16x128xf32>, i32 -> vector<16x128xf32>
    %c59_325 = arith.constant 59 : index
    %c0_326 = arith.constant 0 : index
    %747 = vector.load %arg3[%c59_325, %c0_326] : memref<63x128xf32, #tpu.memory_space<vmem>>, vector<1x128xf32>
    %748 = vector.broadcast %747 : vector<1x128xf32> to vector<16x128xf32>
    %749 = arith.mulf %748, %746 : vector<16x128xf32>
    %750 = arith.addf %745, %749 : vector<16x128xf32>
    %c49_i32_327 = arith.constant 49 : i32
    %751 = tpu.dynamic_rotate %452 by %c49_i32_327 dim 1 : vector<16x128xf32>, i32 -> vector<16x128xf32>
    %c60_328 = arith.constant 60 : index
    %c0_329 = arith.constant 0 : index
    %752 = vector.load %arg3[%c60_328, %c0_329] : memref<63x128xf32, #tpu.memory_space<vmem>>, vector<1x128xf32>
    %753 = vector.broadcast %752 : vector<1x128xf32> to vector<16x128xf32>
    %754 = arith.mulf %753, %751 : vector<16x128xf32>
    %755 = arith.addf %750, %754 : vector<16x128xf32>
    %c48_i32_330 = arith.constant 48 : i32
    %756 = tpu.dynamic_rotate %452 by %c48_i32_330 dim 1 : vector<16x128xf32>, i32 -> vector<16x128xf32>
    %c61_331 = arith.constant 61 : index
    %c0_332 = arith.constant 0 : index
    %757 = vector.load %arg3[%c61_331, %c0_332] : memref<63x128xf32, #tpu.memory_space<vmem>>, vector<1x128xf32>
    %758 = vector.broadcast %757 : vector<1x128xf32> to vector<16x128xf32>
    %759 = arith.mulf %758, %756 : vector<16x128xf32>
    %760 = arith.addf %755, %759 : vector<16x128xf32>
    %c47_i32_333 = arith.constant 47 : i32
    %761 = tpu.dynamic_rotate %452 by %c47_i32_333 dim 1 : vector<16x128xf32>, i32 -> vector<16x128xf32>
    %c62_334 = arith.constant 62 : index
    %c0_335 = arith.constant 0 : index
    %762 = vector.load %arg3[%c62_334, %c0_335] : memref<63x128xf32, #tpu.memory_space<vmem>>, vector<1x128xf32>
    %763 = vector.broadcast %762 : vector<1x128xf32> to vector<16x128xf32>
    %764 = arith.mulf %763, %761 : vector<16x128xf32>
    %765 = arith.addf %760, %764 : vector<16x128xf32>
    %cst_336 = arith.constant dense<0.000000e+00> : vector<128xf32>
    %766 = vector.multi_reduction <add>, %765, %cst_336 [0] : vector<16x128xf32> to vector<128xf32>
    %767 = vector.shape_cast %766 : vector<128xf32> to vector<1x128xf32>
    %768 = arith.mulf %765, %765 : vector<16x128xf32>
    %cst_337 = arith.constant dense<0.000000e+00> : vector<128xf32>
    %769 = vector.multi_reduction <add>, %768, %cst_337 [0] : vector<16x128xf32> to vector<128xf32>
    %770 = vector.shape_cast %769 : vector<128xf32> to vector<1x128xf32>
    %cst_338 = arith.constant 0.000000e+00 : f32
    %771 = vector.broadcast %cst_338 : f32 to vector<1x128xf32>
    %cst_339 = arith.constant 0.000000e+00 : f32
    %772 = vector.broadcast %cst_339 : f32 to vector<1x128xf32>
    %c0_340 = arith.constant 0 : index
    %c0_341 = arith.constant 0 : index
    %773 = vector.load %arg4[%c0_340, %c0_341] : memref<4x128xf32, #tpu.memory_space<vmem>>, vector<1x128xf32>
    %774 = arith.mulf %767, %773 : vector<1x128xf32>
    %775 = vector.shape_cast %774 : vector<1x128xf32> to vector<1x1x128xf32>
    %cst_342 = arith.constant dense<0.000000e+00> : vector<1xf32>
    %776 = vector.multi_reduction <add>, %775, %cst_342 [1, 2] : vector<1x1x128xf32> to vector<1xf32>
    %777 = vector.shape_cast %776 : vector<1xf32> to vector<1x1x1xf32>
    %778 = vector.extract %777[0, 0, 0] : f32 from vector<1x1x1xf32>
    %779 = arith.mulf %770, %773 : vector<1x128xf32>
    %780 = vector.shape_cast %779 : vector<1x128xf32> to vector<1x1x128xf32>
    %cst_343 = arith.constant dense<0.000000e+00> : vector<1xf32>
    %781 = vector.multi_reduction <add>, %780, %cst_343 [1, 2] : vector<1x1x128xf32> to vector<1xf32>
    %782 = vector.shape_cast %781 : vector<1xf32> to vector<1x1x1xf32>
    %783 = vector.extract %782[0, 0, 0] : f32 from vector<1x1x1xf32>
    %cst_344 = arith.constant 0.001953125 : f32
    %784 = arith.mulf %778, %cst_344 : f32
    %cst_345 = arith.constant 0.001953125 : f32
    %785 = arith.mulf %783, %cst_345 : f32
    %786 = arith.mulf %784, %784 : f32
    %787 = arith.subf %785, %786 : f32
    %cst_346 = arith.constant 9.99999974E-6 : f32
    %788 = arith.addf %787, %cst_346 : f32
    %789 = math.rsqrt %788 : f32
    %c8_347 = arith.constant 8 : index
    %790 = memref.load %arg5[%c8_347] : memref<17xf32, #tpu.memory_space<smem>>
    %791 = arith.mulf %789, %790 : f32
    %c12_348 = arith.constant 12 : index
    %792 = memref.load %arg5[%c12_348] : memref<17xf32, #tpu.memory_space<smem>>
    %793 = arith.mulf %784, %791 : f32
    %794 = arith.subf %792, %793 : f32
    %795 = vector.broadcast %791 : f32 to vector<1x128xf32>
    %796 = arith.mulf %795, %773 : vector<1x128xf32>
    %797 = arith.addf %771, %796 : vector<1x128xf32>
    %798 = vector.broadcast %794 : f32 to vector<1x128xf32>
    %799 = arith.mulf %798, %773 : vector<1x128xf32>
    %800 = arith.addf %772, %799 : vector<1x128xf32>
    %c1_349 = arith.constant 1 : index
    %c0_350 = arith.constant 0 : index
    %801 = vector.load %arg4[%c1_349, %c0_350] : memref<4x128xf32, #tpu.memory_space<vmem>>, vector<1x128xf32>
    %802 = arith.mulf %767, %801 : vector<1x128xf32>
    %803 = vector.shape_cast %802 : vector<1x128xf32> to vector<1x1x128xf32>
    %cst_351 = arith.constant dense<0.000000e+00> : vector<1xf32>
    %804 = vector.multi_reduction <add>, %803, %cst_351 [1, 2] : vector<1x1x128xf32> to vector<1xf32>
    %805 = vector.shape_cast %804 : vector<1xf32> to vector<1x1x1xf32>
    %806 = vector.extract %805[0, 0, 0] : f32 from vector<1x1x1xf32>
    %807 = arith.mulf %770, %801 : vector<1x128xf32>
    %808 = vector.shape_cast %807 : vector<1x128xf32> to vector<1x1x128xf32>
    %cst_352 = arith.constant dense<0.000000e+00> : vector<1xf32>
    %809 = vector.multi_reduction <add>, %808, %cst_352 [1, 2] : vector<1x1x128xf32> to vector<1xf32>
    %810 = vector.shape_cast %809 : vector<1xf32> to vector<1x1x1xf32>
    %811 = vector.extract %810[0, 0, 0] : f32 from vector<1x1x1xf32>
    %cst_353 = arith.constant 0.001953125 : f32
    %812 = arith.mulf %806, %cst_353 : f32
    %cst_354 = arith.constant 0.001953125 : f32
    %813 = arith.mulf %811, %cst_354 : f32
    %814 = arith.mulf %812, %812 : f32
    %815 = arith.subf %813, %814 : f32
    %cst_355 = arith.constant 9.99999974E-6 : f32
    %816 = arith.addf %815, %cst_355 : f32
    %817 = math.rsqrt %816 : f32
    %c9_356 = arith.constant 9 : index
    %818 = memref.load %arg5[%c9_356] : memref<17xf32, #tpu.memory_space<smem>>
    %819 = arith.mulf %817, %818 : f32
    %c13_357 = arith.constant 13 : index
    %820 = memref.load %arg5[%c13_357] : memref<17xf32, #tpu.memory_space<smem>>
    %821 = arith.mulf %812, %819 : f32
    %822 = arith.subf %820, %821 : f32
    %823 = vector.broadcast %819 : f32 to vector<1x128xf32>
    %824 = arith.mulf %823, %801 : vector<1x128xf32>
    %825 = arith.addf %797, %824 : vector<1x128xf32>
    %826 = vector.broadcast %822 : f32 to vector<1x128xf32>
    %827 = arith.mulf %826, %801 : vector<1x128xf32>
    %828 = arith.addf %800, %827 : vector<1x128xf32>
    %c2_358 = arith.constant 2 : index
    %c0_359 = arith.constant 0 : index
    %829 = vector.load %arg4[%c2_358, %c0_359] : memref<4x128xf32, #tpu.memory_space<vmem>>, vector<1x128xf32>
    %830 = arith.mulf %767, %829 : vector<1x128xf32>
    %831 = vector.shape_cast %830 : vector<1x128xf32> to vector<1x1x128xf32>
    %cst_360 = arith.constant dense<0.000000e+00> : vector<1xf32>
    %832 = vector.multi_reduction <add>, %831, %cst_360 [1, 2] : vector<1x1x128xf32> to vector<1xf32>
    %833 = vector.shape_cast %832 : vector<1xf32> to vector<1x1x1xf32>
    %834 = vector.extract %833[0, 0, 0] : f32 from vector<1x1x1xf32>
    %835 = arith.mulf %770, %829 : vector<1x128xf32>
    %836 = vector.shape_cast %835 : vector<1x128xf32> to vector<1x1x128xf32>
    %cst_361 = arith.constant dense<0.000000e+00> : vector<1xf32>
    %837 = vector.multi_reduction <add>, %836, %cst_361 [1, 2] : vector<1x1x128xf32> to vector<1xf32>
    %838 = vector.shape_cast %837 : vector<1xf32> to vector<1x1x1xf32>
    %839 = vector.extract %838[0, 0, 0] : f32 from vector<1x1x1xf32>
    %cst_362 = arith.constant 0.001953125 : f32
    %840 = arith.mulf %834, %cst_362 : f32
    %cst_363 = arith.constant 0.001953125 : f32
    %841 = arith.mulf %839, %cst_363 : f32
    %842 = arith.mulf %840, %840 : f32
    %843 = arith.subf %841, %842 : f32
    %cst_364 = arith.constant 9.99999974E-6 : f32
    %844 = arith.addf %843, %cst_364 : f32
    %845 = math.rsqrt %844 : f32
    %c10_365 = arith.constant 10 : index
    %846 = memref.load %arg5[%c10_365] : memref<17xf32, #tpu.memory_space<smem>>
    %847 = arith.mulf %845, %846 : f32
    %c14_366 = arith.constant 14 : index
    %848 = memref.load %arg5[%c14_366] : memref<17xf32, #tpu.memory_space<smem>>
    %849 = arith.mulf %840, %847 : f32
    %850 = arith.subf %848, %849 : f32
    %851 = vector.broadcast %847 : f32 to vector<1x128xf32>
    %852 = arith.mulf %851, %829 : vector<1x128xf32>
    %853 = arith.addf %825, %852 : vector<1x128xf32>
    %854 = vector.broadcast %850 : f32 to vector<1x128xf32>
    %855 = arith.mulf %854, %829 : vector<1x128xf32>
    %856 = arith.addf %828, %855 : vector<1x128xf32>
    %c3_367 = arith.constant 3 : index
    %c0_368 = arith.constant 0 : index
    %857 = vector.load %arg4[%c3_367, %c0_368] : memref<4x128xf32, #tpu.memory_space<vmem>>, vector<1x128xf32>
    %858 = arith.mulf %767, %857 : vector<1x128xf32>
    %859 = vector.shape_cast %858 : vector<1x128xf32> to vector<1x1x128xf32>
    %cst_369 = arith.constant dense<0.000000e+00> : vector<1xf32>
    %860 = vector.multi_reduction <add>, %859, %cst_369 [1, 2] : vector<1x1x128xf32> to vector<1xf32>
    %861 = vector.shape_cast %860 : vector<1xf32> to vector<1x1x1xf32>
    %862 = vector.extract %861[0, 0, 0] : f32 from vector<1x1x1xf32>
    %863 = arith.mulf %770, %857 : vector<1x128xf32>
    %864 = vector.shape_cast %863 : vector<1x128xf32> to vector<1x1x128xf32>
    %cst_370 = arith.constant dense<0.000000e+00> : vector<1xf32>
    %865 = vector.multi_reduction <add>, %864, %cst_370 [1, 2] : vector<1x1x128xf32> to vector<1xf32>
    %866 = vector.shape_cast %865 : vector<1xf32> to vector<1x1x1xf32>
    %867 = vector.extract %866[0, 0, 0] : f32 from vector<1x1x1xf32>
    %cst_371 = arith.constant 0.001953125 : f32
    %868 = arith.mulf %862, %cst_371 : f32
    %cst_372 = arith.constant 0.001953125 : f32
    %869 = arith.mulf %867, %cst_372 : f32
    %870 = arith.mulf %868, %868 : f32
    %871 = arith.subf %869, %870 : f32
    %cst_373 = arith.constant 9.99999974E-6 : f32
    %872 = arith.addf %871, %cst_373 : f32
    %873 = math.rsqrt %872 : f32
    %c11_374 = arith.constant 11 : index
    %874 = memref.load %arg5[%c11_374] : memref<17xf32, #tpu.memory_space<smem>>
    %875 = arith.mulf %873, %874 : f32
    %c15_375 = arith.constant 15 : index
    %876 = memref.load %arg5[%c15_375] : memref<17xf32, #tpu.memory_space<smem>>
    %877 = arith.mulf %868, %875 : f32
    %878 = arith.subf %876, %877 : f32
    %879 = vector.broadcast %875 : f32 to vector<1x128xf32>
    %880 = arith.mulf %879, %857 : vector<1x128xf32>
    %881 = arith.addf %853, %880 : vector<1x128xf32>
    %882 = vector.broadcast %878 : f32 to vector<1x128xf32>
    %883 = arith.mulf %882, %857 : vector<1x128xf32>
    %884 = arith.addf %856, %883 : vector<1x128xf32>
    %885 = vector.broadcast %881 : vector<1x128xf32> to vector<16x128xf32>
    %886 = arith.mulf %765, %885 : vector<16x128xf32>
    %887 = vector.broadcast %884 : vector<1x128xf32> to vector<16x128xf32>
    %888 = arith.addf %886, %887 : vector<16x128xf32>
    %889 = arith.addf %1, %888 : vector<16x128xf32>
    %c0_376 = arith.constant 0 : index
    %c0_377 = arith.constant 0 : index
    %890 = vector.load %arg6[%c0_376, %c0_377] : memref<16x128xf32, #tpu.memory_space<vmem>>, vector<16x128xf32>
    tpu.vector_store %arg6[%c0_376, %c0_377], %889 {strides = array<i32>} : memref<16x128xf32, #tpu.memory_space<vmem>>, vector<16x128xf32>,
    return
  }
  func.func @transform_0(%arg0: i32) -> (i32, i32) {
    %c0_i32 = arith.constant 0 : i32
    %c0_i32_0 = arith.constant 0 : i32
    %c0_i32_1 = arith.constant 0 : i32
    return %c0_i32, %c0_i32_0 : i32, i32
  }
  func.func @transform_1(%arg0: i32) -> (i32, i32) {
    %c0_i32 = arith.constant 0 : i32
    %c0_i32_0 = arith.constant 0 : i32
    %c0_i32_1 = arith.constant 0 : i32
    return %c0_i32, %c0_i32_0 : i32, i32
  }
  func.func @transform_2(%arg0: i32) -> (i32, i32) {
    %c0_i32 = arith.constant 0 : i32
    %c0_i32_0 = arith.constant 0 : i32
    %c0_i32_1 = arith.constant 0 : i32
    return %c0_i32, %c0_i32_0 : i32, i32
  }
  func.func @transform_3(%arg0: i32) -> (i32, i32) {
    %c0_i32 = arith.constant 0 : i32
    %c0_i32_0 = arith.constant 0 : i32
    %c0_i32_1 = arith.constant 0 : i32
    return %c0_i32, %c0_i32_0 : i32, i32
  }
  func.func @transform_4(%arg0: i32) -> i32 {
    %c0_i32 = arith.constant 0 : i32
    %c0_i32_0 = arith.constant 0 : i32
    return %c0_i32 : i32
  }
  func.func @transform_5(%arg0: i32) -> (i32, i32) {
    %c0_i32 = arith.constant 0 : i32
    %c0_i32_0 = arith.constant 0 : i32
    %c0_i32_1 = arith.constant 0 : i32
    return %c0_i32, %c0_i32_0 : i32, i32
  }
}

</mosaic_0001>

<llo_original>
// kernel: tpu_custom_call.1
$region0: #{tpu_custom_call.1}
  #allocation0 [shape = 'u32[]', space=smem, size = 0x4, offset = 0x4, fixed_abs, tag = 'smem constant byte address 0x4 - core index']
  #allocation1 [shape = 'u32[144,128]{1,0:T(1,128)}', space=vmem, size = 0x12000, scoped, tag = 'internal scratch']
  %s0 = inlined_call_operand.hbm [shape: f32[16,128], index: 0, kind: input, shape index: {}]
  %s1 = inlined_call_operand.hbm [shape: f32[63,128], index: 1, kind: input, shape index: {}]
  %s2 = inlined_call_operand.hbm [shape: f32[63,128], index: 2, kind: input, shape index: {}]
  %s3 = inlined_call_operand.vmem [shape: f32[4,128], index: 3, kind: input, shape index: {}]
  %s4 = inlined_call_operand.vmem [shape: f32[17], index: 4, kind: input, shape index: {}]
  %s5 = inlined_call_operand.hbm [shape: f32[16,128], index: 5, kind: output, shape index: {}]
  %s6 = sld [smem:[#allocation0]]
  $region46: #{tpu_custom_call.1} parent=0
    _
  %s8 = ssub.s32 1, %s6
  %s9 = scalar_select 0, %s8, %s6
  $region1: #{tpu_custom_call.1} parent=0
    #allocation2 [shape = 'u8[8192]{0}', space=vmem, size = 0x2000, scoped, tag = 'input window, operand 0, single buffered']
    #allocation3 [shape = 's32[1]{0}', space=sflag, size = 0x4, scoped, tag = 'scoped memory for tpu_custom_call.1']
    #allocation4 [shape = 's32[1]{0}', space=sflag, size = 0x4, scoped, tag = 'scoped memory for tpu_custom_call.1']
    #allocation5 [shape = 's32[1]{0}', space=sflag, size = 0x4, scoped, tag = 'scoped memory for tpu_custom_call.1']
    #allocation6 [shape = 'u8[32768]{0}', space=vmem, size = 0x8000, scoped, tag = 'input window, operand 1, single buffered']
    #allocation7 [shape = 's32[1]{0}', space=sflag, size = 0x4, scoped, tag = 'scoped memory for tpu_custom_call.1']
    #allocation8 [shape = 'u8[32768]{0}', space=vmem, size = 0x8000, scoped, tag = 'input window, operand 2, single buffered']
    #allocation9 [shape = 'u8[512]{0}', space=smem, size = 0x200, scoped, tag = 'input window, operand 4, single buffered']
    #allocation10 [shape = 'u8[8192]{0}', space=vmem, size = 0x2000, scoped, tag = 'output window, operand 0, single buffered']
    %10 = vsyncpa [#allocation3], 0
    %11 = vsyncpa [#allocation7], 0
    %12 = vsyncpa [#allocation5], 0
    %13 = vsyncpa [#allocation4], 0
    // Predicated region
    $region2: #{tpu_custom_call.1} parent=1 // pred_check
      _
    $region3: #{tpu_custom_call.1} parent=1 // pred_check_branch
      %15 = sbr.rel (0) target = $region5
    $region4: #{tpu_custom_call.1} parent=1 // pred_region
      %s17 = ssub.s32 256, 256
      %18 = vsyncadd [#allocation3], %s17
      %s19 = sshll.u32 [#allocation2], 4
      %s20 = int_to_ptr.vmem [resolvable:$true] %s19
      %25 = dma.hbm_to_vmem [thread:$0]  %s0, 256, %s20, [#allocation3], 128, 128, 8
    $region5: #{tpu_custom_call.1} parent=1 // pred_fallthru
      _
    // Predicated region
    $region6: #{tpu_custom_call.1} parent=1 // pred_check
      _
    $region7: #{tpu_custom_call.1} parent=1 // pred_check_branch
      %27 = sbr.rel (0) target = $region9
    $region8: #{tpu_custom_call.1} parent=1 // pred_region
      %s29 = ssub.s32 1024, 1024
      %30 = vsyncadd [#allocation7], %s29
      %s31 = sshll.u32 [#allocation6], 4
      %s32 = int_to_ptr.vmem [resolvable:$true] %s31
      %37 = dma.hbm_to_vmem [thread:$0]  %s1, 1024, %s32, [#allocation7], 128, 128, 8
    $region9: #{tpu_custom_call.1} parent=1 // pred_fallthru
      _
    // Predicated region
    $region10: #{tpu_custom_call.1} parent=1 // pred_check
      _
    $region11: #{tpu_custom_call.1} parent=1 // pred_check_branch
      %39 = sbr.rel (0) target = $region13
    $region12: #{tpu_custom_call.1} parent=1 // pred_region
      %s41 = ssub.s32 1024, 1024
      %42 = vsyncadd [#allocation7], %s41
      %s43 = sshll.u32 [#allocation8], 4
      %s44 = int_to_ptr.vmem [resolvable:$true] %s43
      %49 = dma.hbm_to_vmem [thread:$0]  %s2, 1024, %s44, [#allocation7], 128, 128, 8
    $region13: #{tpu_custom_call.1} parent=1 // pred_fallthru
      _
    // Predicated region
    $region14: #{tpu_custom_call.1} parent=1 // pred_check
      _
    $region15: #{tpu_custom_call.1} parent=1 // pred_check_branch
      %51 = sbr.rel (0) target = $region17
    $region16: #{tpu_custom_call.1} parent=1 // pred_region
      _
    $region17: #{tpu_custom_call.1} parent=1 // pred_fallthru
      _
    // Predicated region
    $region18: #{tpu_custom_call.1} parent=1 // pred_check
      _
    $region19: #{tpu_custom_call.1} parent=1 // pred_check_branch
      %53 = sbr.rel (0) target = $region21
    $region20: #{tpu_custom_call.1} parent=1 // pred_region
      %s55 = ssub.s32 16, 16
      %56 = vsyncadd [#allocation5], %s55
      %s58 = sshll.u32 %s4, 4
      %s59 = int_to_ptr.vmem [resolvable:$true] %s58
      %61 = dma.vmem_to_smem %s59, 16, [#allocation9], [#allocation5]
    $region21: #{tpu_custom_call.1} parent=1 // pred_fallthru
      _
    // Predicated region
    $region22: #{tpu_custom_call.1} parent=1 // pred_check
      _
    $region23: #{tpu_custom_call.1} parent=1 // pred_check_branch
      %63 = sbr.rel (0) target = $region25
    $region24: #{tpu_custom_call.1} parent=1 // pred_region
      %64 = dma.done [#allocation3], 256
    $region25: #{tpu_custom_call.1} parent=1 // pred_fallthru
      _
    // Predicated region
    $region26: #{tpu_custom_call.1} parent=1 // pred_check
      _
    $region27: #{tpu_custom_call.1} parent=1 // pred_check_branch
      %66 = sbr.rel (0) target = $region29
    $region28: #{tpu_custom_call.1} parent=1 // pred_region
      %67 = dma.done [#allocation7], 1024
    $region29: #{tpu_custom_call.1} parent=1 // pred_fallthru
      _
    // Predicated region
    $region30: #{tpu_custom_call.1} parent=1 // pred_check
      _
    $region31: #{tpu_custom_call.1} parent=1 // pred_check_branch
      %69 = sbr.rel (0) target = $region33
    $region32: #{tpu_custom_call.1} parent=1 // pred_region
      %70 = dma.done [#allocation7], 1024
    $region33: #{tpu_custom_call.1} parent=1 // pred_fallthru
      _
    // Predicated region
    $region34: #{tpu_custom_call.1} parent=1 // pred_check
      _
    $region35: #{tpu_custom_call.1} parent=1 // pred_check_branch
      %72 = sbr.rel (0) target = $region37
    $region36: #{tpu_custom_call.1} parent=1 // pred_region
      %73 = dma.done [#allocation5], 16
    $region37: #{tpu_custom_call.1} parent=1 // pred_fallthru
      _
    %74 = sfence
    %s75 = sld [smem:[#allocation9 + $0x10]]
    %v76 = vld [vmem:[#allocation2] sm:$0xff]
    %v77 = vld [vmem:[#allocation2 + $0x8] sm:$0xff]
    %vm80 = vcmask 1040384
    %v81 = vrot.slane %v76, 7
    %v82 = vrot.slane %v77, 7
    %v83 = vsel %vm80, %v81, %v82
    %v86 = vsel %vm80, 0.0, %v81
    %vm87 = vcmask 1046528
    %v88 = vrot.slane %v76, 1
    %v89 = vrot.slane %v77, 1
    %v90 = vsel %vm87, %v88, %v89
    %v93 = vsel %vm87, %v89, 0.0
    %94 = vrot.lane.b32.xlu0 %v86, 81
    %v95 = vpop.permute.xlu0 %94
    %96 = vrot.lane.b32.xlu0 %v83, 81
    %v97 = vpop.permute.xlu0 %96
    %v98 = vld [vmem:[#allocation6] sm:$0x1]
    %v99 = vlaneseq
    %v100 = vshrl.u32 %v99, 7
    %v101 = vsub.s32 0, %v100
    %v102 = vrot.slane %v98, %v101
    %v103 = vmul.f32 %v102, %v95
    %v104 = vmul.f32 %v102, %v97
    %v105 = vadd.f32 %v103, 0.0
    %v106 = vadd.f32 %v104, 0.0
    %107 = vrot.lane.b32.xlu0 %v86, 80
    %v108 = vpop.permute.xlu0 %107
    %109 = vrot.lane.b32.xlu0 %v83, 80
    %v110 = vpop.permute.xlu0 %109
    %v111 = vld [vmem:[#allocation6 + $0x1] sm:$0x1]
    %v112 = vlaneseq
    %v113 = vshrl.u32 %v112, 7
    %v114 = vsub.s32 0, %v113
    %v115 = vrot.slane %v111, %v114
    %v116 = vmul.f32 %v115, %v108
    %v117 = vmul.f32 %v115, %v110
    %v118 = vadd.f32 %v105, %v116
    %v119 = vadd.f32 %v106, %v117
    %120 = vrot.lane.b32.xlu0 %v86, 79
    %v121 = vpop.permute.xlu0 %120
    %122 = vrot.lane.b32.xlu0 %v83, 79
    %v123 = vpop.permute.xlu0 %122
    %v124 = vld [vmem:[#allocation6 + $0x2] sm:$0x1]
    %v125 = vlaneseq
    %v126 = vshrl.u32 %v125, 7
    %v127 = vsub.s32 0, %v126
    %v128 = vrot.slane %v124, %v127
    %v129 = vmul.f32 %v128, %v121
    %v130 = vmul.f32 %v128, %v123
    %v131 = vadd.f32 %v118, %v129
    %v132 = vadd.f32 %v119, %v130
    %133 = vrot.lane.b32.xlu0 %v76, 81
    %v134 = vpop.permute.xlu0 %133
    %135 = vrot.lane.b32.xlu0 %v77, 81
    %v136 = vpop.permute.xlu0 %135
    %v137 = vld [vmem:[#allocation6 + $0x3] sm:$0x1]
    %v138 = vlaneseq
    %v139 = vshrl.u32 %v138, 7
    %v140 = vsub.s32 0, %v139
    %v141 = vrot.slane %v137, %v140
    %v142 = vmul.f32 %v141, %v134
    %v143 = vmul.f32 %v141, %v136
    %v144 = vadd.f32 %v131, %v142
    %v145 = vadd.f32 %v132, %v143
    %146 = vrot.lane.b32.xlu0 %v76, 80
    %v147 = vpop.permute.xlu0 %146
    %148 = vrot.lane.b32.xlu0 %v77, 80
    %v149 = vpop.permute.xlu0 %148
    %v150 = vld [vmem:[#allocation6 + $0x4] sm:$0x1]
    %v151 = vlaneseq
    %v152 = vshrl.u32 %v151, 7
    %v153 = vsub.s32 0, %v152
    %v154 = vrot.slane %v150, %v153
    %v155 = vmul.f32 %v154, %v147
    %v156 = vmul.f32 %v154, %v149
    %v157 = vadd.f32 %v144, %v155
    %v158 = vadd.f32 %v145, %v156
    %159 = vrot.lane.b32.xlu0 %v76, 79
    %v160 = vpop.permute.xlu0 %159
    %161 = vrot.lane.b32.xlu0 %v77, 79
    %v162 = vpop.permute.xlu0 %161
    %v163 = vld [vmem:[#allocation6 + $0x5] sm:$0x1]
    %v164 = vlaneseq
    %v165 = vshrl.u32 %v164, 7
    %v166 = vsub.s32 0, %v165
    %v167 = vrot.slane %v163, %v166
    %v168 = vmul.f32 %v167, %v160
    %v169 = vmul.f32 %v167, %v162
    %v170 = vadd.f32 %v157, %v168
    %v171 = vadd.f32 %v158, %v169
    %172 = vrot.lane.b32.xlu0 %v90, 81
    %v173 = vpop.permute.xlu0 %172
    %174 = vrot.lane.b32.xlu0 %v93, 81
    %v175 = vpop.permute.xlu0 %174
    %v176 = vld [vmem:[#allocation6 + $0x6] sm:$0x1]
    %v177 = vlaneseq
    %v178 = vshrl.u32 %v177, 7
    %v179 = vsub.s32 0, %v178
    %v180 = vrot.slane %v176, %v179
    %v181 = vmul.f32 %v180, %v173
    %v182 = vmul.f32 %v180, %v175
    %v183 = vadd.f32 %v170, %v181
    %v184 = vadd.f32 %v171, %v182
    %185 = vrot.lane.b32.xlu0 %v90, 80
    %v186 = vpop.permute.xlu0 %185
    %187 = vrot.lane.b32.xlu0 %v93, 80
    %v188 = vpop.permute.xlu0 %187
    %v189 = vld [vmem:[#allocation6 + $0x7] sm:$0x1]
    %v190 = vlaneseq
    %v191 = vshrl.u32 %v190, 7
    %v192 = vsub.s32 0, %v191
    %v193 = vrot.slane %v189, %v192
    %v194 = vmul.f32 %v193, %v186
    %v195 = vmul.f32 %v193, %v188
    %v196 = vadd.f32 %v183, %v194
    %v197 = vadd.f32 %v184, %v195
    %198 = vrot.lane.b32.xlu0 %v90, 79
    %v199 = vpop.permute.xlu0 %198
    %200 = vrot.lane.b32.xlu0 %v93, 79
    %v201 = vpop.permute.xlu0 %200
    %v202 = vld [vmem:[#allocation6 + $0x8] sm:$0x1]
    %v203 = vlaneseq
    %v204 = vshrl.u32 %v203, 7
    %v205 = vsub.s32 0, %v204
    %v206 = vrot.slane %v202, %v205
    %v207 = vmul.f32 %v206, %v199
    %v208 = vmul.f32 %v206, %v201
    %v209 = vadd.f32 %v196, %v207
    %v210 = vadd.f32 %v197, %v208
    %211 = vrot.lane.b32.xlu0 %v86, 97
    %v212 = vpop.permute.xlu0 %211
    %213 = vrot.lane.b32.xlu0 %v83, 97
    %v214 = vpop.permute.xlu0 %213
    %v215 = vld [vmem:[#allocation6 + $0x9] sm:$0x1]
    %v216 = vlaneseq
    %v217 = vshrl.u32 %v216, 7
    %v218 = vsub.s32 0, %v217
    %v219 = vrot.slane %v215, %v218
    %v220 = vmul.f32 %v219, %v212
    %v221 = vmul.f32 %v219, %v214
    %v222 = vadd.f32 %v209, %v220
    %v223 = vadd.f32 %v210, %v221
    %224 = vrot.lane.b32.xlu0 %v86, 96
    %v225 = vpop.permute.xlu0 %224
    %226 = vrot.lane.b32.xlu0 %v83, 96
    %v227 = vpop.permute.xlu0 %226
    %v228 = vld [vmem:[#allocation6 + $0xa] sm:$0x1]
    %v229 = vlaneseq
    %v230 = vshrl.u32 %v229, 7
    %v231 = vsub.s32 0, %v230
    %v232 = vrot.slane %v228, %v231
    %v233 = vmul.f32 %v232, %v225
    %v234 = vmul.f32 %v232, %v227
    %v235 = vadd.f32 %v222, %v233
    %v236 = vadd.f32 %v223, %v234
    %237 = vrot.lane.b32.xlu0 %v86, 95
    %v238 = vpop.permute.xlu0 %237
    %239 = vrot.lane.b32.xlu0 %v83, 95
    %v240 = vpop.permute.xlu0 %239
    %v241 = vld [vmem:[#allocation6 + $0xb] sm:$0x1]
    %v242 = vlaneseq
    %v243 = vshrl.u32 %v242, 7
    %v244 = vsub.s32 0, %v243
    %v245 = vrot.slane %v241, %v244
    %v246 = vmul.f32 %v245, %v238
    %v247 = vmul.f32 %v245, %v240
    %v248 = vadd.f32 %v235, %v246
    %v249 = vadd.f32 %v236, %v247
    %250 = vrot.lane.b32.xlu0 %v76, 97
    %v251 = vpop.permute.xlu0 %250
    %252 = vrot.lane.b32.xlu0 %v77, 97
    %v253 = vpop.permute.xlu0 %252
    %v254 = vld [vmem:[#allocation6 + $0xc] sm:$0x1]
    %v255 = vlaneseq
    %v256 = vshrl.u32 %v255, 7
    %v257 = vsub.s32 0, %v256
    %v258 = vrot.slane %v254, %v257
    %v259 = vmul.f32 %v258, %v251
    %v260 = vmul.f32 %v258, %v253
    %v261 = vadd.f32 %v248, %v259
    %v262 = vadd.f32 %v249, %v260
    %263 = vrot.lane.b32.xlu0 %v76, 96
    %v264 = vpop.permute.xlu0 %263
    %265 = vrot.lane.b32.xlu0 %v77, 96
    %v266 = vpop.permute.xlu0 %265
    %v267 = vld [vmem:[#allocation6 + $0xd] sm:$0x1]
    %v268 = vlaneseq
    %v269 = vshrl.u32 %v268, 7
    %v270 = vsub.s32 0, %v269
    %v271 = vrot.slane %v267, %v270
    %v272 = vmul.f32 %v271, %v264
    %v273 = vmul.f32 %v271, %v266
    %v274 = vadd.f32 %v261, %v272
    %v275 = vadd.f32 %v262, %v273
    %276 = vrot.lane.b32.xlu0 %v76, 95
    %v277 = vpop.permute.xlu0 %276
    %278 = vrot.lane.b32.xlu0 %v77, 95
    %v279 = vpop.permute.xlu0 %278
    %v280 = vld [vmem:[#allocation6 + $0xe] sm:$0x1]
    %v281 = vlaneseq
    %v282 = vshrl.u32 %v281, 7
    %v283 = vsub.s32 0, %v282
    %v284 = vrot.slane %v280, %v283
    %v285 = vmul.f32 %v284, %v277
    %v286 = vmul.f32 %v284, %v279
    %v287 = vadd.f32 %v274, %v285
    %v288 = vadd.f32 %v275, %v286
    %289 = vrot.lane.b32.xlu0 %v90, 97
    %v290 = vpop.permute.xlu0 %289
    %291 = vrot.lane.b32.xlu0 %v93, 97
    %v292 = vpop.permute.xlu0 %291
    %v293 = vld [vmem:[#allocation6 + $0xf] sm:$0x1]
    %v294 = vlaneseq
    %v295 = vshrl.u32 %v294, 7
    %v296 = vsub.s32 0, %v295
    %v297 = vrot.slane %v293, %v296
    %v298 = vmul.f32 %v297, %v290
    %v299 = vmul.f32 %v297, %v292
    %v300 = vadd.f32 %v287, %v298
    %v301 = vadd.f32 %v288, %v299
    %302 = vrot.lane.b32.xlu0 %v90, 96
    %v303 = vpop.permute.xlu0 %302
    %304 = vrot.lane.b32.xlu0 %v93, 96
    %v305 = vpop.permute.xlu0 %304
    %v306 = vld [vmem:[#allocation6 + $0x10] sm:$0x1]
    %v307 = vlaneseq
    %v308 = vshrl.u32 %v307, 7
    %v309 = vsub.s32 0, %v308
    %v310 = vrot.slane %v306, %v309
    %v311 = vmul.f32 %v310, %v303
    %v312 = vmul.f32 %v310, %v305
    %v313 = vadd.f32 %v300, %v311
    %v314 = vadd.f32 %v301, %v312
    %315 = vrot.lane.b32.xlu0 %v90, 95
    %v316 = vpop.permute.xlu0 %315
    %317 = vrot.lane.b32.xlu0 %v93, 95
    %v318 = vpop.permute.xlu0 %317
    %v319 = vld [vmem:[#allocation6 + $0x11] sm:$0x1]
    %v320 = vlaneseq
    %v321 = vshrl.u32 %v320, 7
    %v322 = vsub.s32 0, %v321
    %v323 = vrot.slane %v319, %v322
    %v324 = vmul.f32 %v323, %v316
    %v325 = vmul.f32 %v323, %v318
    %v326 = vadd.f32 %v313, %v324
    %v327 = vadd.f32 %v314, %v325
    %328 = vrot.lane.b32.xlu0 %v86, 113
    %v329 = vpop.permute.xlu0 %328
    %330 = vrot.lane.b32.xlu0 %v83, 113
    %v331 = vpop.permute.xlu0 %330
    %v332 = vld [vmem:[#allocation6 + $0x12] sm:$0x1]
    %v333 = vlaneseq
    %v334 = vshrl.u32 %v333, 7
    %v335 = vsub.s32 0, %v334
    %v336 = vrot.slane %v332, %v335
    %v337 = vmul.f32 %v336, %v329
    %v338 = vmul.f32 %v336, %v331
    %v339 = vadd.f32 %v326, %v337
    %v340 = vadd.f32 %v327, %v338
    %341 = vrot.lane.b32.xlu0 %v86, 112
    %v342 = vpop.permute.xlu0 %341
    %343 = vrot.lane.b32.xlu0 %v83, 112
    %v344 = vpop.permute.xlu0 %343
    %v345 = vld [vmem:[#allocation6 + $0x13] sm:$0x1]
    %v346 = vlaneseq
    %v347 = vshrl.u32 %v346, 7
    %v348 = vsub.s32 0, %v347
    %v349 = vrot.slane %v345, %v348
    %v350 = vmul.f32 %v349, %v342
    %v351 = vmul.f32 %v349, %v344
    %v352 = vadd.f32 %v339, %v350
    %v353 = vadd.f32 %v340, %v351
    %354 = vrot.lane.b32.xlu0 %v86, 111
    %v355 = vpop.permute.xlu0 %354
    %356 = vrot.lane.b32.xlu0 %v83, 111
    %v357 = vpop.permute.xlu0 %356
    %v358 = vld [vmem:[#allocation6 + $0x14] sm:$0x1]
    %v359 = vlaneseq
    %v360 = vshrl.u32 %v359, 7
    %v361 = vsub.s32 0, %v360
    %v362 = vrot.slane %v358, %v361
    %v363 = vmul.f32 %v362, %v355
    %v364 = vmul.f32 %v362, %v357
    %v365 = vadd.f32 %v352, %v363
    %v366 = vadd.f32 %v353, %v364
    %367 = vrot.lane.b32.xlu0 %v76, 113
    %v368 = vpop.permute.xlu0 %367
    %369 = vrot.lane.b32.xlu0 %v77, 113
    %v370 = vpop.permute.xlu0 %369
    %v371 = vld [vmem:[#allocation6 + $0x15] sm:$0x1]
    %v372 = vlaneseq
    %v373 = vshrl.u32 %v372, 7
    %v374 = vsub.s32 0, %v373
    %v375 = vrot.slane %v371, %v374
    %v376 = vmul.f32 %v375, %v368
    %v377 = vmul.f32 %v375, %v370
    %v378 = vadd.f32 %v365, %v376
    %v379 = vadd.f32 %v366, %v377
    %380 = vrot.lane.b32.xlu0 %v76, 112
    %v381 = vpop.permute.xlu0 %380
    %382 = vrot.lane.b32.xlu0 %v77, 112
    %v383 = vpop.permute.xlu0 %382
    %v384 = vld [vmem:[#allocation6 + $0x16] sm:$0x1]
    %v385 = vlaneseq
    %v386 = vshrl.u32 %v385, 7
    %v387 = vsub.s32 0, %v386
    %v388 = vrot.slane %v384, %v387
    %v389 = vmul.f32 %v388, %v381
    %v390 = vmul.f32 %v388, %v383
    %v391 = vadd.f32 %v378, %v389
    %v392 = vadd.f32 %v379, %v390
    %393 = vrot.lane.b32.xlu0 %v76, 111
    %v394 = vpop.permute.xlu0 %393
    %395 = vrot.lane.b32.xlu0 %v77, 111
    %v396 = vpop.permute.xlu0 %395
    %v397 = vld [vmem:[#allocation6 + $0x17] sm:$0x1]
    %v398 = vlaneseq
    %v399 = vshrl.u32 %v398, 7
    %v400 = vsub.s32 0, %v399
    %v401 = vrot.slane %v397, %v400
    %v402 = vmul.f32 %v401, %v394
    %v403 = vmul.f32 %v401, %v396
    %v404 = vadd.f32 %v391, %v402
    %v405 = vadd.f32 %v392, %v403
    %406 = vrot.lane.b32.xlu0 %v90, 113
    %v407 = vpop.permute.xlu0 %406
    %408 = vrot.lane.b32.xlu0 %v93, 113
    %v409 = vpop.permute.xlu0 %408
    %v410 = vld [vmem:[#allocation6 + $0x18] sm:$0x1]
    %v411 = vlaneseq
    %v412 = vshrl.u32 %v411, 7
    %v413 = vsub.s32 0, %v412
    %v414 = vrot.slane %v410, %v413
    %v415 = vmul.f32 %v414, %v407
    %v416 = vmul.f32 %v414, %v409
    %v417 = vadd.f32 %v404, %v415
    %v418 = vadd.f32 %v405, %v416
    %419 = vrot.lane.b32.xlu0 %v90, 112
    %v420 = vpop.permute.xlu0 %419
    %421 = vrot.lane.b32.xlu0 %v93, 112
    %v422 = vpop.permute.xlu0 %421
    %v423 = vld [vmem:[#allocation6 + $0x19] sm:$0x1]
    %v424 = vlaneseq
    %v425 = vshrl.u32 %v424, 7
    %v426 = vsub.s32 0, %v425
    %v427 = vrot.slane %v423, %v426
    %v428 = vmul.f32 %v427, %v420
    %v429 = vmul.f32 %v427, %v422
    %v430 = vadd.f32 %v417, %v428
    %v431 = vadd.f32 %v418, %v429
    %432 = vrot.lane.b32.xlu0 %v90, 111
    %v433 = vpop.permute.xlu0 %432
    %434 = vrot.lane.b32.xlu0 %v93, 111
    %v435 = vpop.permute.xlu0 %434
    %v436 = vld [vmem:[#allocation6 + $0x1a] sm:$0x1]
    %v437 = vlaneseq
    %v438 = vshrl.u32 %v437, 7
    %v439 = vsub.s32 0, %v438
    %v440 = vrot.slane %v436, %v439
    %v441 = vmul.f32 %v440, %v433
    %v442 = vmul.f32 %v440, %v435
    %v443 = vadd.f32 %v430, %v441
    %v444 = vadd.f32 %v431, %v442
    %445 = vrot.lane.b32.xlu0 %v86, 1
    %v446 = vpop.permute.xlu0 %445
    %447 = vrot.lane.b32.xlu0 %v83, 1
    %v448 = vpop.permute.xlu0 %447
    %v449 = vld [vmem:[#allocation6 + $0x1b] sm:$0x1]
    %v450 = vlaneseq
    %v451 = vshrl.u32 %v450, 7
    %v452 = vsub.s32 0, %v451
    %v453 = vrot.slane %v449, %v452
    %v454 = vmul.f32 %v453, %v446
    %v455 = vmul.f32 %v453, %v448
    %v456 = vadd.f32 %v443, %v454
    %v457 = vadd.f32 %v444, %v455
    %v458 = vld [vmem:[#allocation6 + $0x1c] sm:$0x1]
    %v459 = vlaneseq
    %v460 = vshrl.u32 %v459, 7
    %v461 = vsub.s32 0, %v460
    %v462 = vrot.slane %v458, %v461
    %v463 = vmul.f32 %v462, %v86
    %v464 = vmul.f32 %v462, %v83
    %v465 = vadd.f32 %v456, %v463
    %v466 = vadd.f32 %v457, %v464
    %467 = vrot.lane.b32.xlu0 %v86, 127
    %v468 = vpop.permute.xlu0 %467
    %469 = vrot.lane.b32.xlu0 %v83, 127
    %v470 = vpop.permute.xlu0 %469
    %v471 = vld [vmem:[#allocation6 + $0x1d] sm:$0x1]
    %v472 = vlaneseq
    %v473 = vshrl.u32 %v472, 7
    %v474 = vsub.s32 0, %v473
    %v475 = vrot.slane %v471, %v474
    %v476 = vmul.f32 %v475, %v468
    %v477 = vmul.f32 %v475, %v470
    %v478 = vadd.f32 %v465, %v476
    %v479 = vadd.f32 %v466, %v477
    %480 = vrot.lane.b32.xlu0 %v76, 1
    %v481 = vpop.permute.xlu0 %480
    %482 = vrot.lane.b32.xlu0 %v77, 1
    %v483 = vpop.permute.xlu0 %482
    %v484 = vld [vmem:[#allocation6 + $0x1e] sm:$0x1]
    %v485 = vlaneseq
    %v486 = vshrl.u32 %v485, 7
    %v487 = vsub.s32 0, %v486
    %v488 = vrot.slane %v484, %v487
    %v489 = vmul.f32 %v488, %v481
    %v490 = vmul.f32 %v488, %v483
    %v491 = vadd.f32 %v478, %v489
    %v492 = vadd.f32 %v479, %v490
    %v493 = vld [vmem:[#allocation6 + $0x1f] sm:$0x1]
    %v494 = vlaneseq
    %v495 = vshrl.u32 %v494, 7
    %v496 = vsub.s32 0, %v495
    %v497 = vrot.slane %v493, %v496
    %v498 = vmul.f32 %v497, %v76
    %v499 = vmul.f32 %v497, %v77
    %v500 = vadd.f32 %v491, %v498
    %v501 = vadd.f32 %v492, %v499
    %502 = vrot.lane.b32.xlu0 %v76, 127
    %v503 = vpop.permute.xlu0 %502
    %504 = vrot.lane.b32.xlu0 %v77, 127
    %v505 = vpop.permute.xlu0 %504
    %v506 = vld [vmem:[#allocation6 + $0x20] sm:$0x1]
    %v507 = vlaneseq
    %v508 = vshrl.u32 %v507, 7
    %v509 = vsub.s32 0, %v508
    %v510 = vrot.slane %v506, %v509
    %v511 = vmul.f32 %v510, %v503
    %v512 = vmul.f32 %v510, %v505
    %v513 = vadd.f32 %v500, %v511
    %v514 = vadd.f32 %v501, %v512
    %515 = vrot.lane.b32.xlu0 %v90, 1
    %v516 = vpop.permute.xlu0 %515
    %517 = vrot.lane.b32.xlu0 %v93, 1
    %v518 = vpop.permute.xlu0 %517
    %v519 = vld [vmem:[#allocation6 + $0x21] sm:$0x1]
    %v520 = vlaneseq
    %v521 = vshrl.u32 %v520, 7
    %v522 = vsub.s32 0, %v521
    %v523 = vrot.slane %v519, %v522
    %v524 = vmul.f32 %v523, %v516
    %v525 = vmul.f32 %v523, %v518
    %v526 = vadd.f32 %v513, %v524
    %v527 = vadd.f32 %v514, %v525
    %v528 = vld [vmem:[#allocation6 + $0x22] sm:$0x1]
    %v529 = vlaneseq
    %v530 = vshrl.u32 %v529, 7
    %v531 = vsub.s32 0, %v530
    %v532 = vrot.slane %v528, %v531
    %v533 = vmul.f32 %v532, %v90
    %v534 = vmul.f32 %v532, %v93
    %v535 = vadd.f32 %v526, %v533
    %v536 = vadd.f32 %v527, %v534
    %537 = vrot.lane.b32.xlu0 %v90, 127
    %v538 = vpop.permute.xlu0 %537
    %539 = vrot.lane.b32.xlu0 %v93, 127
    %v540 = vpop.permute.xlu0 %539
    %v541 = vld [vmem:[#allocation6 + $0x23] sm:$0x1]
    %v542 = vlaneseq
    %v543 = vshrl.u32 %v542, 7
    %v544 = vsub.s32 0, %v543
    %v545 = vrot.slane %v541, %v544
    %v546 = vmul.f32 %v545, %v538
    %v547 = vmul.f32 %v545, %v540
    %v548 = vadd.f32 %v535, %v546
    %v549 = vadd.f32 %v536, %v547
    %550 = vrot.lane.b32.xlu0 %v86, 17
    %v551 = vpop.permute.xlu0 %550
    %552 = vrot.lane.b32.xlu0 %v83, 17
    %v553 = vpop.permute.xlu0 %552
    %v554 = vld [vmem:[#allocation6 + $0x24] sm:$0x1]
    %v555 = vlaneseq
    %v556 = vshrl.u32 %v555, 7
    %v557 = vsub.s32 0, %v556
    %v558 = vrot.slane %v554, %v557
    %v559 = vmul.f32 %v558, %v551
    %v560 = vmul.f32 %v558, %v553
    %v561 = vadd.f32 %v548, %v559
    %v562 = vadd.f32 %v549, %v560
    %563 = vrot.lane.b32.xlu0 %v86, 16
    %v564 = vpop.permute.xlu0 %563
    %565 = vrot.lane.b32.xlu0 %v83, 16
    %v566 = vpop.permute.xlu0 %565
    %v567 = vld [vmem:[#allocation6 + $0x25] sm:$0x1]
    %v568 = vlaneseq
    %v569 = vshrl.u32 %v568, 7
    %v570 = vsub.s32 0, %v569
    %v571 = vrot.slane %v567, %v570
    %v572 = vmul.f32 %v571, %v564
    %v573 = vmul.f32 %v571, %v566
    %v574 = vadd.f32 %v561, %v572
    %v575 = vadd.f32 %v562, %v573
    %576 = vrot.lane.b32.xlu0 %v86, 15
    %v577 = vpop.permute.xlu0 %576
    %578 = vrot.lane.b32.xlu0 %v83, 15
    %v579 = vpop.permute.xlu0 %578
    %v580 = vld [vmem:[#allocation6 + $0x26] sm:$0x1]
    %v581 = vlaneseq
    %v582 = vshrl.u32 %v581, 7
    %v583 = vsub.s32 0, %v582
    %v584 = vrot.slane %v580, %v583
    %v585 = vmul.f32 %v584, %v577
    %v586 = vmul.f32 %v584, %v579
    %v587 = vadd.f32 %v574, %v585
    %v588 = vadd.f32 %v575, %v586
    %589 = vrot.lane.b32.xlu0 %v76, 17
    %v590 = vpop.permute.xlu0 %589
    %591 = vrot.lane.b32.xlu0 %v77, 17
    %v592 = vpop.permute.xlu0 %591
    %v593 = vld [vmem:[#allocation6 + $0x27] sm:$0x1]
    %v594 = vlaneseq
    %v595 = vshrl.u32 %v594, 7
    %v596 = vsub.s32 0, %v595
    %v597 = vrot.slane %v593, %v596
    %v598 = vmul.f32 %v597, %v590
    %v599 = vmul.f32 %v597, %v592
    %v600 = vadd.f32 %v587, %v598
    %v601 = vadd.f32 %v588, %v599
    %602 = vrot.lane.b32.xlu0 %v76, 16
    %v603 = vpop.permute.xlu0 %602
    %604 = vrot.lane.b32.xlu0 %v77, 16
    %v605 = vpop.permute.xlu0 %604
    %v606 = vld [vmem:[#allocation6 + $0x28] sm:$0x1]
    %v607 = vlaneseq
    %v608 = vshrl.u32 %v607, 7
    %v609 = vsub.s32 0, %v608
    %v610 = vrot.slane %v606, %v609
    %v611 = vmul.f32 %v610, %v603
    %v612 = vmul.f32 %v610, %v605
    %v613 = vadd.f32 %v600, %v611
    %v614 = vadd.f32 %v601, %v612
    %615 = vrot.lane.b32.xlu0 %v76, 15
    %v616 = vpop.permute.xlu0 %615
    %617 = vrot.lane.b32.xlu0 %v77, 15
    %v618 = vpop.permute.xlu0 %617
    %v619 = vld [vmem:[#allocation6 + $0x29] sm:$0x1]
    %v620 = vlaneseq
    %v621 = vshrl.u32 %v620, 7
    %v622 = vsub.s32 0, %v621
    %v623 = vrot.slane %v619, %v622
    %v624 = vmul.f32 %v623, %v616
    %v625 = vmul.f32 %v623, %v618
    %v626 = vadd.f32 %v613, %v624
    %v627 = vadd.f32 %v614, %v625
    %628 = vrot.lane.b32.xlu0 %v90, 17
    %v629 = vpop.permute.xlu0 %628
    %630 = vrot.lane.b32.xlu0 %v93, 17
    %v631 = vpop.permute.xlu0 %630
    %v632 = vld [vmem:[#allocation6 + $0x2a] sm:$0x1]
    %v633 = vlaneseq
    %v634 = vshrl.u32 %v633, 7
    %v635 = vsub.s32 0, %v634
    %v636 = vrot.slane %v632, %v635
    %v637 = vmul.f32 %v636, %v629
    %v638 = vmul.f32 %v636, %v631
    %v639 = vadd.f32 %v626, %v637
    %v640 = vadd.f32 %v627, %v638
    %641 = vrot.lane.b32.xlu0 %v90, 16
    %v642 = vpop.permute.xlu0 %641
    %643 = vrot.lane.b32.xlu0 %v93, 16
    %v644 = vpop.permute.xlu0 %643
    %v645 = vld [vmem:[#allocation6 + $0x2b] sm:$0x1]
    %v646 = vlaneseq
    %v647 = vshrl.u32 %v646, 7
    %v648 = vsub.s32 0, %v647
    %v649 = vrot.slane %v645, %v648
    %v650 = vmul.f32 %v649, %v642
    %v651 = vmul.f32 %v649, %v644
    %v652 = vadd.f32 %v639, %v650
    %v653 = vadd.f32 %v640, %v651
    %654 = vrot.lane.b32.xlu0 %v90, 15
    %v655 = vpop.permute.xlu0 %654
    %656 = vrot.lane.b32.xlu0 %v93, 15
    %v657 = vpop.permute.xlu0 %656
    %v658 = vld [vmem:[#allocation6 + $0x2c] sm:$0x1]
    %v659 = vlaneseq
    %v660 = vshrl.u32 %v659, 7
    %v661 = vsub.s32 0, %v660
    %v662 = vrot.slane %v658, %v661
    %v663 = vmul.f32 %v662, %v655
    %v664 = vmul.f32 %v662, %v657
    %v665 = vadd.f32 %v652, %v663
    %v666 = vadd.f32 %v653, %v664
    %667 = vrot.lane.b32.xlu0 %v86, 33
    %v668 = vpop.permute.xlu0 %667
    %669 = vrot.lane.b32.xlu0 %v83, 33
    %v670 = vpop.permute.xlu0 %669
    %v671 = vld [vmem:[#allocation6 + $0x2d] sm:$0x1]
    %v672 = vlaneseq
    %v673 = vshrl.u32 %v672, 7
    %v674 = vsub.s32 0, %v673
    %v675 = vrot.slane %v671, %v674
    %v676 = vmul.f32 %v675, %v668
    %v677 = vmul.f32 %v675, %v670
    %v678 = vadd.f32 %v665, %v676
    %v679 = vadd.f32 %v666, %v677
    %680 = vrot.lane.b32.xlu0 %v86, 32
    %v681 = vpop.permute.xlu0 %680
    %682 = vrot.lane.b32.xlu0 %v83, 32
    %v683 = vpop.permute.xlu0 %682
    %v684 = vld [vmem:[#allocation6 + $0x2e] sm:$0x1]
    %v685 = vlaneseq
    %v686 = vshrl.u32 %v685, 7
    %v687 = vsub.s32 0, %v686
    %v688 = vrot.slane %v684, %v687
    %v689 = vmul.f32 %v688, %v681
    %v690 = vmul.f32 %v688, %v683
    %v691 = vadd.f32 %v678, %v689
    %v692 = vadd.f32 %v679, %v690
    %693 = vrot.lane.b32.xlu0 %v86, 31
    %v694 = vpop.permute.xlu0 %693
    %695 = vrot.lane.b32.xlu0 %v83, 31
    %v696 = vpop.permute.xlu0 %695
    %v697 = vld [vmem:[#allocation6 + $0x2f] sm:$0x1]
    %v698 = vlaneseq
    %v699 = vshrl.u32 %v698, 7
    %v700 = vsub.s32 0, %v699
    %v701 = vrot.slane %v697, %v700
    %v702 = vmul.f32 %v701, %v694
    %v703 = vmul.f32 %v701, %v696
    %v704 = vadd.f32 %v691, %v702
    %v705 = vadd.f32 %v692, %v703
    %706 = vrot.lane.b32.xlu0 %v76, 33
    %v707 = vpop.permute.xlu0 %706
    %708 = vrot.lane.b32.xlu0 %v77, 33
    %v709 = vpop.permute.xlu0 %708
    %v710 = vld [vmem:[#allocation6 + $0x30] sm:$0x1]
    %v711 = vlaneseq
    %v712 = vshrl.u32 %v711, 7
    %v713 = vsub.s32 0, %v712
    %v714 = vrot.slane %v710, %v713
    %v715 = vmul.f32 %v714, %v707
    %v716 = vmul.f32 %v714, %v709
    %v717 = vadd.f32 %v704, %v715
    %v718 = vadd.f32 %v705, %v716
    %719 = vrot.lane.b32.xlu0 %v76, 32
    %v720 = vpop.permute.xlu0 %719
    %721 = vrot.lane.b32.xlu0 %v77, 32
    %v722 = vpop.permute.xlu0 %721
    %v723 = vld [vmem:[#allocation6 + $0x31] sm:$0x1]
    %v724 = vlaneseq
    %v725 = vshrl.u32 %v724, 7
    %v726 = vsub.s32 0, %v725
    %v727 = vrot.slane %v723, %v726
    %v728 = vmul.f32 %v727, %v720
    %v729 = vmul.f32 %v727, %v722
    %v730 = vadd.f32 %v717, %v728
    %v731 = vadd.f32 %v718, %v729
    %732 = vrot.lane.b32.xlu0 %v76, 31
    %v733 = vpop.permute.xlu0 %732
    %734 = vrot.lane.b32.xlu0 %v77, 31
    %v735 = vpop.permute.xlu0 %734
    %v736 = vld [vmem:[#allocation6 + $0x32] sm:$0x1]
    %v737 = vlaneseq
    %v738 = vshrl.u32 %v737, 7
    %v739 = vsub.s32 0, %v738
    %v740 = vrot.slane %v736, %v739
    %v741 = vmul.f32 %v740, %v733
    %v742 = vmul.f32 %v740, %v735
    %v743 = vadd.f32 %v730, %v741
    %v744 = vadd.f32 %v731, %v742
    %745 = vrot.lane.b32.xlu0 %v90, 33
    %v746 = vpop.permute.xlu0 %745
    %747 = vrot.lane.b32.xlu0 %v93, 33
    %v748 = vpop.permute.xlu0 %747
    %v749 = vld [vmem:[#allocation6 + $0x33] sm:$0x1]
    %v750 = vlaneseq
    %v751 = vshrl.u32 %v750, 7
    %v752 = vsub.s32 0, %v751
    %v753 = vrot.slane %v749, %v752
    %v754 = vmul.f32 %v753, %v746
    %v755 = vmul.f32 %v753, %v748
    %v756 = vadd.f32 %v743, %v754
    %v757 = vadd.f32 %v744, %v755
    %758 = vrot.lane.b32.xlu0 %v90, 32
    %v759 = vpop.permute.xlu0 %758
    %760 = vrot.lane.b32.xlu0 %v93, 32
    %v761 = vpop.permute.xlu0 %760
    %v762 = vld [vmem:[#allocation6 + $0x34] sm:$0x1]
    %v763 = vlaneseq
    %v764 = vshrl.u32 %v763, 7
    %v765 = vsub.s32 0, %v764
    %v766 = vrot.slane %v762, %v765
    %v767 = vmul.f32 %v766, %v759
    %v768 = vmul.f32 %v766, %v761
    %v769 = vadd.f32 %v756, %v767
    %v770 = vadd.f32 %v757, %v768
    %771 = vrot.lane.b32.xlu0 %v90, 31
    %v772 = vpop.permute.xlu0 %771
    %773 = vrot.lane.b32.xlu0 %v93, 31
    %v774 = vpop.permute.xlu0 %773
    %v775 = vld [vmem:[#allocation6 + $0x35] sm:$0x1]
    %v776 = vlaneseq
    %v777 = vshrl.u32 %v776, 7
    %v778 = vsub.s32 0, %v777
    %v779 = vrot.slane %v775, %v778
    %v780 = vmul.f32 %v779, %v772
    %v781 = vmul.f32 %v779, %v774
    %v782 = vadd.f32 %v769, %v780
    %v783 = vadd.f32 %v770, %v781
    %784 = vrot.lane.b32.xlu0 %v86, 49
    %v785 = vpop.permute.xlu0 %784
    %786 = vrot.lane.b32.xlu0 %v83, 49
    %v787 = vpop.permute.xlu0 %786
    %v788 = vld [vmem:[#allocation6 + $0x36] sm:$0x1]
    %v789 = vlaneseq
    %v790 = vshrl.u32 %v789, 7
    %v791 = vsub.s32 0, %v790
    %v792 = vrot.slane %v788, %v791
    %v793 = vmul.f32 %v792, %v785
    %v794 = vmul.f32 %v792, %v787
    %v795 = vadd.f32 %v782, %v793
    %v796 = vadd.f32 %v783, %v794
    %797 = vrot.lane.b32.xlu0 %v86, 48
    %v798 = vpop.permute.xlu0 %797
    %799 = vrot.lane.b32.xlu0 %v83, 48
    %v800 = vpop.permute.xlu0 %799
    %v801 = vld [vmem:[#allocation6 + $0x37] sm:$0x1]
    %v802 = vlaneseq
    %v803 = vshrl.u32 %v802, 7
    %v804 = vsub.s32 0, %v803
    %v805 = vrot.slane %v801, %v804
    %v806 = vmul.f32 %v805, %v798
    %v807 = vmul.f32 %v805, %v800
    %v808 = vadd.f32 %v795, %v806
    %v809 = vadd.f32 %v796, %v807
    %810 = vrot.lane.b32.xlu0 %v86, 47
    %v811 = vpop.permute.xlu0 %810
    %812 = vrot.lane.b32.xlu0 %v83, 47
    %v813 = vpop.permute.xlu0 %812
    %v814 = vld [vmem:[#allocation6 + $0x38] sm:$0x1]
    %v815 = vlaneseq
    %v816 = vshrl.u32 %v815, 7
    %v817 = vsub.s32 0, %v816
    %v818 = vrot.slane %v814, %v817
    %v819 = vmul.f32 %v818, %v811
    %v820 = vmul.f32 %v818, %v813
    %v821 = vadd.f32 %v808, %v819
    %v822 = vadd.f32 %v809, %v820
    %823 = vrot.lane.b32.xlu0 %v76, 49
    %v824 = vpop.permute.xlu0 %823
    %825 = vrot.lane.b32.xlu0 %v77, 49
    %v826 = vpop.permute.xlu0 %825
    %v827 = vld [vmem:[#allocation6 + $0x39] sm:$0x1]
    %v828 = vlaneseq
    %v829 = vshrl.u32 %v828, 7
    %v830 = vsub.s32 0, %v829
    %v831 = vrot.slane %v827, %v830
    %v832 = vmul.f32 %v831, %v824
    %v833 = vmul.f32 %v831, %v826
    %v834 = vadd.f32 %v821, %v832
    %v835 = vadd.f32 %v822, %v833
    %836 = vrot.lane.b32.xlu0 %v76, 48
    %v837 = vpop.permute.xlu0 %836
    %838 = vrot.lane.b32.xlu0 %v77, 48
    %v839 = vpop.permute.xlu0 %838
    %v840 = vld [vmem:[#allocation6 + $0x3a] sm:$0x1]
    %v841 = vlaneseq
    %v842 = vshrl.u32 %v841, 7
    %v843 = vsub.s32 0, %v842
    %v844 = vrot.slane %v840, %v843
    %v845 = vmul.f32 %v844, %v837
    %v846 = vmul.f32 %v844, %v839
    %v847 = vadd.f32 %v834, %v845
    %v848 = vadd.f32 %v835, %v846
    %849 = vrot.lane.b32.xlu0 %v76, 47
    %v850 = vpop.permute.xlu0 %849
    %851 = vrot.lane.b32.xlu0 %v77, 47
    %v852 = vpop.permute.xlu0 %851
    %v853 = vld [vmem:[#allocation6 + $0x3b] sm:$0x1]
    %v854 = vlaneseq
    %v855 = vshrl.u32 %v854, 7
    %v856 = vsub.s32 0, %v855
    %v857 = vrot.slane %v853, %v856
    %v858 = vmul.f32 %v857, %v850
    %v859 = vmul.f32 %v857, %v852
    %v860 = vadd.f32 %v847, %v858
    %v861 = vadd.f32 %v848, %v859
    %862 = vrot.lane.b32.xlu0 %v90, 49
    %v863 = vpop.permute.xlu0 %862
    %864 = vrot.lane.b32.xlu0 %v93, 49
    %v865 = vpop.permute.xlu0 %864
    %v866 = vld [vmem:[#allocation6 + $0x3c] sm:$0x1]
    %v867 = vlaneseq
    %v868 = vshrl.u32 %v867, 7
    %v869 = vsub.s32 0, %v868
    %v870 = vrot.slane %v866, %v869
    %v871 = vmul.f32 %v870, %v863
    %v872 = vmul.f32 %v870, %v865
    %v873 = vadd.f32 %v860, %v871
    %v874 = vadd.f32 %v861, %v872
    %875 = vrot.lane.b32.xlu0 %v90, 48
    %v876 = vpop.permute.xlu0 %875
    %877 = vrot.lane.b32.xlu0 %v93, 48
    %v878 = vpop.permute.xlu0 %877
    %v879 = vld [vmem:[#allocation6 + $0x3d] sm:$0x1]
    %v880 = vlaneseq
    %v881 = vshrl.u32 %v880, 7
    %v882 = vsub.s32 0, %v881
    %v883 = vrot.slane %v879, %v882
    %v884 = vmul.f32 %v883, %v876
    %v885 = vmul.f32 %v883, %v878
    %v886 = vadd.f32 %v873, %v884
    %v887 = vadd.f32 %v874, %v885
    %888 = vrot.lane.b32.xlu0 %v90, 47
    %v889 = vpop.permute.xlu0 %888
    %890 = vrot.lane.b32.xlu0 %v93, 47
    %v891 = vpop.permute.xlu0 %890
    %v892 = vld [vmem:[#allocation6 + $0x3e] sm:$0x1]
    %v893 = vlaneseq
    %v894 = vshrl.u32 %v893, 7
    %v895 = vsub.s32 0, %v894
    %v896 = vrot.slane %v892, %v895
    %v897 = vmul.f32 %v896, %v889
    %v898 = vmul.f32 %v896, %v891
    %v899 = vadd.f32 %v886, %v897
    %v900 = vadd.f32 %v887, %v898
    %v901 = vadd.f32 %v899, %v900
    %v902 = vrot.slane %v901, 4
    %v903 = vadd.f32 %v901, %v902
    %v904 = vrot.slane %v903, 2
    %v905 = vadd.f32 %v903, %v904
    %v906 = vrot.slane %v905, 1
    %v907 = vadd.f32 %v905, %v906
    %v908 = vmul.f32 %v899, %v899
    %v909 = vmul.f32 %v900, %v900
    %v910 = vadd.f32 %v908, %v909
    %v911 = vrot.slane %v910, 4
    %v912 = vadd.f32 %v910, %v911
    %v913 = vrot.slane %v912, 2
    %v914 = vadd.f32 %v912, %v913
    %v915 = vrot.slane %v914, 1
    %v916 = vadd.f32 %v914, %v915
    %v917 = vld [vmem:[%s3] sm:$0x1]
    %v918 = vmul.f32 %v907, %v917
    %v919 = vsel %vm80, %v918, 0.0
    %920 = vadd.xlane.f32.xlu0 %v919
    %v921 = vpop.xlane.xlu0 %920
    %v922 = vrot.slane %v921, 4
    %v923 = vadd.f32 %v921, %v922
    %v924 = vrot.slane %v923, 2
    %v925 = vadd.f32 %v923, %v924
    %v926 = vrot.slane %v925, 1
    %v927 = vadd.f32 %v925, %v926
    %s928 = vtos %v927
    %v929 = vmul.f32 %v916, %v917
    %v930 = vsel %vm80, %v929, 0.0
    %931 = vadd.xlane.f32.xlu0 %v930
    %v932 = vpop.xlane.xlu0 %931
    %v933 = vrot.slane %v932, 4
    %v934 = vadd.f32 %v932, %v933
    %v935 = vrot.slane %v934, 2
    %v936 = vadd.f32 %v934, %v935
    %v937 = vrot.slane %v936, 1
    %v938 = vadd.f32 %v936, %v937
    %s939 = vtos %v938
    %s940 = smul.f32 %s928, 0.001953125
    %s941 = smul.f32 %s939, 0.001953125
    %s942 = smul.f32 %s940, %s940
    %s943 = ssub.f32 %s941, %s942
    %s944 = sadd.f32 %s943, 1e-05
    %v945 = vstv %s944
    %v946 = vrsqrt.pop %v945
    %s947 = vtos %v946
    %s948 = sld [smem:[#allocation9]]
    %s949 = smul.f32 %s947, %s948
    %s950 = sld [smem:[#allocation9 + $0x4]]
    %s951 = smul.f32 %s940, %s949
    %s952 = ssub.f32 %s950, %s951
    %v953 = vstv %s949
    %v954 = vmul.f32 %v953, %v917
    %v955 = vadd.f32 %v954, 0.0
    %v956 = vstv %s952
    %v957 = vmul.f32 %v956, %v917
    %v958 = vadd.f32 %v957, 0.0
    %v959 = vld [vmem:[%s3 + $0x1] sm:$0x1]
    %v960 = vmul.f32 %v907, %v959
    %v961 = vsel %vm80, %v960, 0.0
    %962 = vadd.xlane.f32.xlu0 %v961
    %v963 = vpop.xlane.xlu0 %962
    %v964 = vrot.slane %v963, 4
    %v965 = vadd.f32 %v963, %v964
    %v966 = vrot.slane %v965, 2
    %v967 = vadd.f32 %v965, %v966
    %v968 = vrot.slane %v967, 1
    %v969 = vadd.f32 %v967, %v968
    %s970 = vtos %v969
    %v971 = vmul.f32 %v916, %v959
    %v972 = vsel %vm80, %v971, 0.0
    %973 = vadd.xlane.f32.xlu0 %v972
    %v974 = vpop.xlane.xlu0 %973
    %v975 = vrot.slane %v974, 4
    %v976 = vadd.f32 %v974, %v975
    %v977 = vrot.slane %v976, 2
    %v978 = vadd.f32 %v976, %v977
    %v979 = vrot.slane %v978, 1
    %v980 = vadd.f32 %v978, %v979
    %s981 = vtos %v980
    %s982 = smul.f32 %s970, 0.001953125
    %s983 = smul.f32 %s981, 0.001953125
    %s984 = smul.f32 %s982, %s982
    %s985 = ssub.f32 %s983, %s984
    %s986 = sadd.f32 %s985, 1e-05
    %v987 = vstv %s986
    %v988 = vrsqrt.pop %v987
    %s989 = vtos %v988
    %s990 = sld [smem:[#allocation9 + $0x1]]
    %s991 = smul.f32 %s989, %s990
    %s992 = sld [smem:[#allocation9 + $0x5]]
    %s993 = smul.f32 %s982, %s991
    %s994 = ssub.f32 %s992, %s993
    %v995 = vstv %s991
    %v996 = vmul.f32 %v995, %v959
    %v997 = vadd.f32 %v955, %v996
    %v998 = vstv %s994
    %v999 = vmul.f32 %v998, %v959
    %v1000 = vadd.f32 %v958, %v999
    %v1001 = vld [vmem:[%s3 + $0x2] sm:$0x1]
    %v1002 = vmul.f32 %v907, %v1001
    %v1003 = vsel %vm80, %v1002, 0.0
    %1004 = vadd.xlane.f32.xlu0 %v1003
    %v1005 = vpop.xlane.xlu0 %1004
    %v1006 = vrot.slane %v1005, 4
    %v1007 = vadd.f32 %v1005, %v1006
    %v1008 = vrot.slane %v1007, 2
    %v1009 = vadd.f32 %v1007, %v1008
    %v1010 = vrot.slane %v1009, 1
    %v1011 = vadd.f32 %v1009, %v1010
    %s1012 = vtos %v1011
    %v1013 = vmul.f32 %v916, %v1001
    %v1014 = vsel %vm80, %v1013, 0.0
    %1015 = vadd.xlane.f32.xlu0 %v1014
    %v1016 = vpop.xlane.xlu0 %1015
    %v1017 = vrot.slane %v1016, 4
    %v1018 = vadd.f32 %v1016, %v1017
    %v1019 = vrot.slane %v1018, 2
    %v1020 = vadd.f32 %v1018, %v1019
    %v1021 = vrot.slane %v1020, 1
    %v1022 = vadd.f32 %v1020, %v1021
    %s1023 = vtos %v1022
    %s1024 = smul.f32 %s1012, 0.001953125
    %s1025 = smul.f32 %s1023, 0.001953125
    %s1026 = smul.f32 %s1024, %s1024
    %s1027 = ssub.f32 %s1025, %s1026
    %s1028 = sadd.f32 %s1027, 1e-05
    %v1029 = vstv %s1028
    %v1030 = vrsqrt.pop %v1029
    %s1031 = vtos %v1030
    %s1032 = sld [smem:[#allocation9 + $0x2]]
    %s1033 = smul.f32 %s1031, %s1032
    %s1034 = sld [smem:[#allocation9 + $0x6]]
    %s1035 = smul.f32 %s1024, %s1033
    %s1036 = ssub.f32 %s1034, %s1035
    %v1037 = vstv %s1033
    %v1038 = vmul.f32 %v1037, %v1001
    %v1039 = vadd.f32 %v997, %v1038
    %v1040 = vstv %s1036
    %v1041 = vmul.f32 %v1040, %v1001
    %v1042 = vadd.f32 %v1000, %v1041
    %v1043 = vld [vmem:[%s3 + $0x3] sm:$0x1]
    %v1044 = vmul.f32 %v907, %v1043
    %v1045 = vsel %vm80, %v1044, 0.0
    %1046 = vadd.xlane.f32.xlu0 %v1045
    %v1047 = vpop.xlane.xlu0 %1046
    %v1048 = vrot.slane %v1047, 4
    %v1049 = vadd.f32 %v1047, %v1048
    %v1050 = vrot.slane %v1049, 2
    %v1051 = vadd.f32 %v1049, %v1050
    %v1052 = vrot.slane %v1051, 1
    %v1053 = vadd.f32 %v1051, %v1052
    %s1054 = vtos %v1053
    %v1055 = vmul.f32 %v916, %v1043
    %v1056 = vsel %vm80, %v1055, 0.0
    %1057 = vadd.xlane.f32.xlu0 %v1056
    %v1058 = vpop.xlane.xlu0 %1057
    %v1059 = vrot.slane %v1058, 4
    %v1060 = vadd.f32 %v1058, %v1059
    %v1061 = vrot.slane %v1060, 2
    %v1062 = vadd.f32 %v1060, %v1061
    %v1063 = vrot.slane %v1062, 1
    %v1064 = vadd.f32 %v1062, %v1063
    %s1065 = vtos %v1064
    %s1066 = smul.f32 %s1054, 0.001953125
    %s1067 = smul.f32 %s1065, 0.001953125
    %s1068 = smul.f32 %s1066, %s1066
    %s1069 = ssub.f32 %s1067, %s1068
    %s1070 = sadd.f32 %s1069, 1e-05
    %v1071 = vstv %s1070
    %v1072 = vrsqrt.pop %v1071
    %s1073 = vtos %v1072
    %s1074 = sld [smem:[#allocation9 + $0x3]]
    %s1075 = smul.f32 %s1073, %s1074
    %s1076 = sld [smem:[#allocation9 + $0x7]]
    %s1077 = smul.f32 %s1066, %s1075
    %s1078 = ssub.f32 %s1076, %s1077
    %v1079 = vstv %s1075
    %v1080 = vmul.f32 %v1079, %v1043
    %v1081 = vadd.f32 %v1039, %v1080
    %v1082 = vstv %s1078
    %v1083 = vmul.f32 %v1082, %v1043
    %v1084 = vadd.f32 %v1042, %v1083
    %v1085 = vlaneseq
    %v1086 = vshrl.u32 %v1085, 7
    %v1087 = vsub.s32 0, %v1086
    %v1088 = vrot.slane %v1081, %v1087
    %v1089 = vmul.f32 %v899, %v1088
    %v1090 = vmul.f32 %v900, %v1088
    %v1091 = vlaneseq
    %v1092 = vshrl.u32 %v1091, 7
    %v1093 = vsub.s32 0, %v1092
    %v1094 = vrot.slane %v1084, %v1093
    %v1095 = vadd.f32 %v1089, %v1094
    %v1096 = vadd.f32 %v1090, %v1094
    %vm1097 = vcmp.ge.f32.partialorder %v1095, 0.0
    %vm1098 = vcmp.ge.f32.partialorder %v1096, 0.0
    %v1099 = vstv %s75
    %v1100 = vmul.f32 %v1099, %v1095
    %v1101 = vmul.f32 %v1099, %v1096
    %v1102 = vsel %vm1097, %v1095, %v1100
    %v1103 = vsel %vm1098, %v1096, %v1101
    %v1106 = vrot.slane %v1102, 7
    %v1107 = vrot.slane %v1103, 7
    %v1108 = vsel %vm80, %v1106, %v1107
    %v1111 = vsel %vm80, 0.0, %v1106
    %v1112 = vrot.slane %v1102, 1
    %v1113 = vrot.slane %v1103, 1
    %v1114 = vsel %vm87, %v1112, %v1113
    %v1117 = vsel %vm87, %v1113, 0.0
    %1118 = vrot.lane.b32.xlu0 %v1111, 81
    %v1119 = vpop.permute.xlu0 %1118
    %1120 = vrot.lane.b32.xlu0 %v1108, 81
    %v1121 = vpop.permute.xlu0 %1120
    %v1122 = vld [vmem:[#allocation8] sm:$0x1]
    %v1123 = vlaneseq
    %v1124 = vshrl.u32 %v1123, 7
    %v1125 = vsub.s32 0, %v1124
    %v1126 = vrot.slane %v1122, %v1125
    %v1127 = vmul.f32 %v1126, %v1119
    %v1128 = vmul.f32 %v1126, %v1121
    %v1129 = vadd.f32 %v1127, 0.0
    %v1130 = vadd.f32 %v1128, 0.0
    %1131 = vrot.lane.b32.xlu0 %v1111, 80
    %v1132 = vpop.permute.xlu0 %1131
    %1133 = vrot.lane.b32.xlu0 %v1108, 80
    %v1134 = vpop.permute.xlu0 %1133
    %v1135 = vld [vmem:[#allocation8 + $0x1] sm:$0x1]
    %v1136 = vlaneseq
    %v1137 = vshrl.u32 %v1136, 7
    %v1138 = vsub.s32 0, %v1137
    %v1139 = vrot.slane %v1135, %v1138
    %v1140 = vmul.f32 %v1139, %v1132
    %v1141 = vmul.f32 %v1139, %v1134
    %v1142 = vadd.f32 %v1129, %v1140
    %v1143 = vadd.f32 %v1130, %v1141
    %1144 = vrot.lane.b32.xlu0 %v1111, 79
    %v1145 = vpop.permute.xlu0 %1144
    %1146 = vrot.lane.b32.xlu0 %v1108, 79
    %v1147 = vpop.permute.xlu0 %1146
    %v1148 = vld [vmem:[#allocation8 + $0x2] sm:$0x1]
    %v1149 = vlaneseq
    %v1150 = vshrl.u32 %v1149, 7
    %v1151 = vsub.s32 0, %v1150
    %v1152 = vrot.slane %v1148, %v1151
    %v1153 = vmul.f32 %v1152, %v1145
    %v1154 = vmul.f32 %v1152, %v1147
    %v1155 = vadd.f32 %v1142, %v1153
    %v1156 = vadd.f32 %v1143, %v1154
    %1157 = vrot.lane.b32.xlu0 %v1102, 81
    %v1158 = vpop.permute.xlu0 %1157
    %1159 = vrot.lane.b32.xlu0 %v1103, 81
    %v1160 = vpop.permute.xlu0 %1159
    %v1161 = vld [vmem:[#allocation8 + $0x3] sm:$0x1]
    %v1162 = vlaneseq
    %v1163 = vshrl.u32 %v1162, 7
    %v1164 = vsub.s32 0, %v1163
    %v1165 = vrot.slane %v1161, %v1164
    %v1166 = vmul.f32 %v1165, %v1158
    %v1167 = vmul.f32 %v1165, %v1160
    %v1168 = vadd.f32 %v1155, %v1166
    %v1169 = vadd.f32 %v1156, %v1167
    %1170 = vrot.lane.b32.xlu0 %v1102, 80
    %v1171 = vpop.permute.xlu0 %1170
    %1172 = vrot.lane.b32.xlu0 %v1103, 80
    %v1173 = vpop.permute.xlu0 %1172
    %v1174 = vld [vmem:[#allocation8 + $0x4] sm:$0x1]
    %v1175 = vlaneseq
    %v1176 = vshrl.u32 %v1175, 7
    %v1177 = vsub.s32 0, %v1176
    %v1178 = vrot.slane %v1174, %v1177
    %v1179 = vmul.f32 %v1178, %v1171
    %v1180 = vmul.f32 %v1178, %v1173
    %v1181 = vadd.f32 %v1168, %v1179
    %v1182 = vadd.f32 %v1169, %v1180
    %1183 = vrot.lane.b32.xlu0 %v1102, 79
    %v1184 = vpop.permute.xlu0 %1183
    %1185 = vrot.lane.b32.xlu0 %v1103, 79
    %v1186 = vpop.permute.xlu0 %1185
    %v1187 = vld [vmem:[#allocation8 + $0x5] sm:$0x1]
    %v1188 = vlaneseq
    %v1189 = vshrl.u32 %v1188, 7
    %v1190 = vsub.s32 0, %v1189
    %v1191 = vrot.slane %v1187, %v1190
    %v1192 = vmul.f32 %v1191, %v1184
    %v1193 = vmul.f32 %v1191, %v1186
    %v1194 = vadd.f32 %v1181, %v1192
    %v1195 = vadd.f32 %v1182, %v1193
    %1196 = vrot.lane.b32.xlu0 %v1114, 81
    %v1197 = vpop.permute.xlu0 %1196
    %1198 = vrot.lane.b32.xlu0 %v1117, 81
    %v1199 = vpop.permute.xlu0 %1198
    %v1200 = vld [vmem:[#allocation8 + $0x6] sm:$0x1]
    %v1201 = vlaneseq
    %v1202 = vshrl.u32 %v1201, 7
    %v1203 = vsub.s32 0, %v1202
    %v1204 = vrot.slane %v1200, %v1203
    %v1205 = vmul.f32 %v1204, %v1197
    %v1206 = vmul.f32 %v1204, %v1199
    %v1207 = vadd.f32 %v1194, %v1205
    %v1208 = vadd.f32 %v1195, %v1206
    %1209 = vrot.lane.b32.xlu0 %v1114, 80
    %v1210 = vpop.permute.xlu0 %1209
    %1211 = vrot.lane.b32.xlu0 %v1117, 80
    %v1212 = vpop.permute.xlu0 %1211
    %v1213 = vld [vmem:[#allocation8 + $0x7] sm:$0x1]
    %v1214 = vlaneseq
    %v1215 = vshrl.u32 %v1214, 7
    %v1216 = vsub.s32 0, %v1215
    %v1217 = vrot.slane %v1213, %v1216
    %v1218 = vmul.f32 %v1217, %v1210
    %v1219 = vmul.f32 %v1217, %v1212
    %v1220 = vadd.f32 %v1207, %v1218
    %v1221 = vadd.f32 %v1208, %v1219
    %1222 = vrot.lane.b32.xlu0 %v1114, 79
    %v1223 = vpop.permute.xlu0 %1222
    %1224 = vrot.lane.b32.xlu0 %v1117, 79
    %v1225 = vpop.permute.xlu0 %1224
    %v1226 = vld [vmem:[#allocation8 + $0x8] sm:$0x1]
    %v1227 = vlaneseq
    %v1228 = vshrl.u32 %v1227, 7
    %v1229 = vsub.s32 0, %v1228
    %v1230 = vrot.slane %v1226, %v1229
    %v1231 = vmul.f32 %v1230, %v1223
    %v1232 = vmul.f32 %v1230, %v1225
    %v1233 = vadd.f32 %v1220, %v1231
    %v1234 = vadd.f32 %v1221, %v1232
    %1235 = vrot.lane.b32.xlu0 %v1111, 97
    %v1236 = vpop.permute.xlu0 %1235
    %1237 = vrot.lane.b32.xlu0 %v1108, 97
    %v1238 = vpop.permute.xlu0 %1237
    %v1239 = vld [vmem:[#allocation8 + $0x9] sm:$0x1]
    %v1240 = vlaneseq
    %v1241 = vshrl.u32 %v1240, 7
    %v1242 = vsub.s32 0, %v1241
    %v1243 = vrot.slane %v1239, %v1242
    %v1244 = vmul.f32 %v1243, %v1236
    %v1245 = vmul.f32 %v1243, %v1238
    %v1246 = vadd.f32 %v1233, %v1244
    %v1247 = vadd.f32 %v1234, %v1245
    %1248 = vrot.lane.b32.xlu0 %v1111, 96
    %v1249 = vpop.permute.xlu0 %1248
    %1250 = vrot.lane.b32.xlu0 %v1108, 96
    %v1251 = vpop.permute.xlu0 %1250
    %v1252 = vld [vmem:[#allocation8 + $0xa] sm:$0x1]
    %v1253 = vlaneseq
    %v1254 = vshrl.u32 %v1253, 7
    %v1255 = vsub.s32 0, %v1254
    %v1256 = vrot.slane %v1252, %v1255
    %v1257 = vmul.f32 %v1256, %v1249
    %v1258 = vmul.f32 %v1256, %v1251
    %v1259 = vadd.f32 %v1246, %v1257
    %v1260 = vadd.f32 %v1247, %v1258
    %1261 = vrot.lane.b32.xlu0 %v1111, 95
    %v1262 = vpop.permute.xlu0 %1261
    %1263 = vrot.lane.b32.xlu0 %v1108, 95
    %v1264 = vpop.permute.xlu0 %1263
    %v1265 = vld [vmem:[#allocation8 + $0xb] sm:$0x1]
    %v1266 = vlaneseq
    %v1267 = vshrl.u32 %v1266, 7
    %v1268 = vsub.s32 0, %v1267
    %v1269 = vrot.slane %v1265, %v1268
    %v1270 = vmul.f32 %v1269, %v1262
    %v1271 = vmul.f32 %v1269, %v1264
    %v1272 = vadd.f32 %v1259, %v1270
    %v1273 = vadd.f32 %v1260, %v1271
    %1274 = vrot.lane.b32.xlu0 %v1102, 97
    %v1275 = vpop.permute.xlu0 %1274
    %1276 = vrot.lane.b32.xlu0 %v1103, 97
    %v1277 = vpop.permute.xlu0 %1276
    %v1278 = vld [vmem:[#allocation8 + $0xc] sm:$0x1]
    %v1279 = vlaneseq
    %v1280 = vshrl.u32 %v1279, 7
    %v1281 = vsub.s32 0, %v1280
    %v1282 = vrot.slane %v1278, %v1281
    %v1283 = vmul.f32 %v1282, %v1275
    %v1284 = vmul.f32 %v1282, %v1277
    %v1285 = vadd.f32 %v1272, %v1283
    %v1286 = vadd.f32 %v1273, %v1284
    %1287 = vrot.lane.b32.xlu0 %v1102, 96
    %v1288 = vpop.permute.xlu0 %1287
    %1289 = vrot.lane.b32.xlu0 %v1103, 96
    %v1290 = vpop.permute.xlu0 %1289
    %v1291 = vld [vmem:[#allocation8 + $0xd] sm:$0x1]
    %v1292 = vlaneseq
    %v1293 = vshrl.u32 %v1292, 7
    %v1294 = vsub.s32 0, %v1293
    %v1295 = vrot.slane %v1291, %v1294
    %v1296 = vmul.f32 %v1295, %v1288
    %v1297 = vmul.f32 %v1295, %v1290
    %v1298 = vadd.f32 %v1285, %v1296
    %v1299 = vadd.f32 %v1286, %v1297
    %1300 = vrot.lane.b32.xlu0 %v1102, 95
    %v1301 = vpop.permute.xlu0 %1300
    %1302 = vrot.lane.b32.xlu0 %v1103, 95
    %v1303 = vpop.permute.xlu0 %1302
    %v1304 = vld [vmem:[#allocation8 + $0xe] sm:$0x1]
    %v1305 = vlaneseq
    %v1306 = vshrl.u32 %v1305, 7
    %v1307 = vsub.s32 0, %v1306
    %v1308 = vrot.slane %v1304, %v1307
    %v1309 = vmul.f32 %v1308, %v1301
    %v1310 = vmul.f32 %v1308, %v1303
    %v1311 = vadd.f32 %v1298, %v1309
    %v1312 = vadd.f32 %v1299, %v1310
    %1313 = vrot.lane.b32.xlu0 %v1114, 97
    %v1314 = vpop.permute.xlu0 %1313
    %1315 = vrot.lane.b32.xlu0 %v1117, 97
    %v1316 = vpop.permute.xlu0 %1315
    %v1317 = vld [vmem:[#allocation8 + $0xf] sm:$0x1]
    %v1318 = vlaneseq
    %v1319 = vshrl.u32 %v1318, 7
    %v1320 = vsub.s32 0, %v1319
    %v1321 = vrot.slane %v1317, %v1320
    %v1322 = vmul.f32 %v1321, %v1314
    %v1323 = vmul.f32 %v1321, %v1316
    %v1324 = vadd.f32 %v1311, %v1322
    %v1325 = vadd.f32 %v1312, %v1323
    %1326 = vrot.lane.b32.xlu0 %v1114, 96
    %v1327 = vpop.permute.xlu0 %1326
    %1328 = vrot.lane.b32.xlu0 %v1117, 96
    %v1329 = vpop.permute.xlu0 %1328
    %v1330 = vld [vmem:[#allocation8 + $0x10] sm:$0x1]
    %v1331 = vlaneseq
    %v1332 = vshrl.u32 %v1331, 7
    %v1333 = vsub.s32 0, %v1332
    %v1334 = vrot.slane %v1330, %v1333
    %v1335 = vmul.f32 %v1334, %v1327
    %v1336 = vmul.f32 %v1334, %v1329
    %v1337 = vadd.f32 %v1324, %v1335
    %v1338 = vadd.f32 %v1325, %v1336
    %1339 = vrot.lane.b32.xlu0 %v1114, 95
    %v1340 = vpop.permute.xlu0 %1339
    %1341 = vrot.lane.b32.xlu0 %v1117, 95
    %v1342 = vpop.permute.xlu0 %1341
    %v1343 = vld [vmem:[#allocation8 + $0x11] sm:$0x1]
    %v1344 = vlaneseq
    %v1345 = vshrl.u32 %v1344, 7
    %v1346 = vsub.s32 0, %v1345
    %v1347 = vrot.slane %v1343, %v1346
    %v1348 = vmul.f32 %v1347, %v1340
    %v1349 = vmul.f32 %v1347, %v1342
    %v1350 = vadd.f32 %v1337, %v1348
    %v1351 = vadd.f32 %v1338, %v1349
    %1352 = vrot.lane.b32.xlu0 %v1111, 113
    %v1353 = vpop.permute.xlu0 %1352
    %1354 = vrot.lane.b32.xlu0 %v1108, 113
    %v1355 = vpop.permute.xlu0 %1354
    %v1356 = vld [vmem:[#allocation8 + $0x12] sm:$0x1]
    %v1357 = vlaneseq
    %v1358 = vshrl.u32 %v1357, 7
    %v1359 = vsub.s32 0, %v1358
    %v1360 = vrot.slane %v1356, %v1359
    %v1361 = vmul.f32 %v1360, %v1353
    %v1362 = vmul.f32 %v1360, %v1355
    %v1363 = vadd.f32 %v1350, %v1361
    %v1364 = vadd.f32 %v1351, %v1362
    %1365 = vrot.lane.b32.xlu0 %v1111, 112
    %v1366 = vpop.permute.xlu0 %1365
    %1367 = vrot.lane.b32.xlu0 %v1108, 112
    %v1368 = vpop.permute.xlu0 %1367
    %v1369 = vld [vmem:[#allocation8 + $0x13] sm:$0x1]
    %v1370 = vlaneseq
    %v1371 = vshrl.u32 %v1370, 7
    %v1372 = vsub.s32 0, %v1371
    %v1373 = vrot.slane %v1369, %v1372
    %v1374 = vmul.f32 %v1373, %v1366
    %v1375 = vmul.f32 %v1373, %v1368
    %v1376 = vadd.f32 %v1363, %v1374
    %v1377 = vadd.f32 %v1364, %v1375
    %1378 = vrot.lane.b32.xlu0 %v1111, 111
    %v1379 = vpop.permute.xlu0 %1378
    %1380 = vrot.lane.b32.xlu0 %v1108, 111
    %v1381 = vpop.permute.xlu0 %1380
    %v1382 = vld [vmem:[#allocation8 + $0x14] sm:$0x1]
    %v1383 = vlaneseq
    %v1384 = vshrl.u32 %v1383, 7
    %v1385 = vsub.s32 0, %v1384
    %v1386 = vrot.slane %v1382, %v1385
    %v1387 = vmul.f32 %v1386, %v1379
    %v1388 = vmul.f32 %v1386, %v1381
    %v1389 = vadd.f32 %v1376, %v1387
    %v1390 = vadd.f32 %v1377, %v1388
    %1391 = vrot.lane.b32.xlu0 %v1102, 113
    %v1392 = vpop.permute.xlu0 %1391
    %1393 = vrot.lane.b32.xlu0 %v1103, 113
    %v1394 = vpop.permute.xlu0 %1393
    %v1395 = vld [vmem:[#allocation8 + $0x15] sm:$0x1]
    %v1396 = vlaneseq
    %v1397 = vshrl.u32 %v1396, 7
    %v1398 = vsub.s32 0, %v1397
    %v1399 = vrot.slane %v1395, %v1398
    %v1400 = vmul.f32 %v1399, %v1392
    %v1401 = vmul.f32 %v1399, %v1394
    %v1402 = vadd.f32 %v1389, %v1400
    %v1403 = vadd.f32 %v1390, %v1401
    %1404 = vrot.lane.b32.xlu0 %v1102, 112
    %v1405 = vpop.permute.xlu0 %1404
    %1406 = vrot.lane.b32.xlu0 %v1103, 112
    %v1407 = vpop.permute.xlu0 %1406
    %v1408 = vld [vmem:[#allocation8 + $0x16] sm:$0x1]
    %v1409 = vlaneseq
    %v1410 = vshrl.u32 %v1409, 7
    %v1411 = vsub.s32 0, %v1410
    %v1412 = vrot.slane %v1408, %v1411
    %v1413 = vmul.f32 %v1412, %v1405
    %v1414 = vmul.f32 %v1412, %v1407
    %v1415 = vadd.f32 %v1402, %v1413
    %v1416 = vadd.f32 %v1403, %v1414
    %1417 = vrot.lane.b32.xlu0 %v1102, 111
    %v1418 = vpop.permute.xlu0 %1417
    %1419 = vrot.lane.b32.xlu0 %v1103, 111
    %v1420 = vpop.permute.xlu0 %1419
    %v1421 = vld [vmem:[#allocation8 + $0x17] sm:$0x1]
    %v1422 = vlaneseq
    %v1423 = vshrl.u32 %v1422, 7
    %v1424 = vsub.s32 0, %v1423
    %v1425 = vrot.slane %v1421, %v1424
    %v1426 = vmul.f32 %v1425, %v1418
    %v1427 = vmul.f32 %v1425, %v1420
    %v1428 = vadd.f32 %v1415, %v1426
    %v1429 = vadd.f32 %v1416, %v1427
    %1430 = vrot.lane.b32.xlu0 %v1114, 113
    %v1431 = vpop.permute.xlu0 %1430
    %1432 = vrot.lane.b32.xlu0 %v1117, 113
    %v1433 = vpop.permute.xlu0 %1432
    %v1434 = vld [vmem:[#allocation8 + $0x18] sm:$0x1]
    %v1435 = vlaneseq
    %v1436 = vshrl.u32 %v1435, 7
    %v1437 = vsub.s32 0, %v1436
    %v1438 = vrot.slane %v1434, %v1437
    %v1439 = vmul.f32 %v1438, %v1431
    %v1440 = vmul.f32 %v1438, %v1433
    %v1441 = vadd.f32 %v1428, %v1439
    %v1442 = vadd.f32 %v1429, %v1440
    %1443 = vrot.lane.b32.xlu0 %v1114, 112
    %v1444 = vpop.permute.xlu0 %1443
    %1445 = vrot.lane.b32.xlu0 %v1117, 112
    %v1446 = vpop.permute.xlu0 %1445
    %v1447 = vld [vmem:[#allocation8 + $0x19] sm:$0x1]
    %v1448 = vlaneseq
    %v1449 = vshrl.u32 %v1448, 7
    %v1450 = vsub.s32 0, %v1449
    %v1451 = vrot.slane %v1447, %v1450
    %v1452 = vmul.f32 %v1451, %v1444
    %v1453 = vmul.f32 %v1451, %v1446
    %v1454 = vadd.f32 %v1441, %v1452
    %v1455 = vadd.f32 %v1442, %v1453
    %1456 = vrot.lane.b32.xlu0 %v1114, 111
    %v1457 = vpop.permute.xlu0 %1456
    %1458 = vrot.lane.b32.xlu0 %v1117, 111
    %v1459 = vpop.permute.xlu0 %1458
    %v1460 = vld [vmem:[#allocation8 + $0x1a] sm:$0x1]
    %v1461 = vlaneseq
    %v1462 = vshrl.u32 %v1461, 7
    %v1463 = vsub.s32 0, %v1462
    %v1464 = vrot.slane %v1460, %v1463
    %v1465 = vmul.f32 %v1464, %v1457
    %v1466 = vmul.f32 %v1464, %v1459
    %v1467 = vadd.f32 %v1454, %v1465
    %v1468 = vadd.f32 %v1455, %v1466
    %1469 = vrot.lane.b32.xlu0 %v1111, 1
    %v1470 = vpop.permute.xlu0 %1469
    %1471 = vrot.lane.b32.xlu0 %v1108, 1
    %v1472 = vpop.permute.xlu0 %1471
    %v1473 = vld [vmem:[#allocation8 + $0x1b] sm:$0x1]
    %v1474 = vlaneseq
    %v1475 = vshrl.u32 %v1474, 7
    %v1476 = vsub.s32 0, %v1475
    %v1477 = vrot.slane %v1473, %v1476
    %v1478 = vmul.f32 %v1477, %v1470
    %v1479 = vmul.f32 %v1477, %v1472
    %v1480 = vadd.f32 %v1467, %v1478
    %v1481 = vadd.f32 %v1468, %v1479
    %v1482 = vld [vmem:[#allocation8 + $0x1c] sm:$0x1]
    %v1483 = vlaneseq
    %v1484 = vshrl.u32 %v1483, 7
    %v1485 = vsub.s32 0, %v1484
    %v1486 = vrot.slane %v1482, %v1485
    %v1487 = vmul.f32 %v1486, %v1111
    %v1488 = vmul.f32 %v1486, %v1108
    %v1489 = vadd.f32 %v1480, %v1487
    %v1490 = vadd.f32 %v1481, %v1488
    %1491 = vrot.lane.b32.xlu0 %v1111, 127
    %v1492 = vpop.permute.xlu0 %1491
    %1493 = vrot.lane.b32.xlu0 %v1108, 127
    %v1494 = vpop.permute.xlu0 %1493
    %v1495 = vld [vmem:[#allocation8 + $0x1d] sm:$0x1]
    %v1496 = vlaneseq
    %v1497 = vshrl.u32 %v1496, 7
    %v1498 = vsub.s32 0, %v1497
    %v1499 = vrot.slane %v1495, %v1498
    %v1500 = vmul.f32 %v1499, %v1492
    %v1501 = vmul.f32 %v1499, %v1494
    %v1502 = vadd.f32 %v1489, %v1500
    %v1503 = vadd.f32 %v1490, %v1501
    %1504 = vrot.lane.b32.xlu0 %v1102, 1
    %v1505 = vpop.permute.xlu0 %1504
    %1506 = vrot.lane.b32.xlu0 %v1103, 1
    %v1507 = vpop.permute.xlu0 %1506
    %v1508 = vld [vmem:[#allocation8 + $0x1e] sm:$0x1]
    %v1509 = vlaneseq
    %v1510 = vshrl.u32 %v1509, 7
    %v1511 = vsub.s32 0, %v1510
    %v1512 = vrot.slane %v1508, %v1511
    %v1513 = vmul.f32 %v1512, %v1505
    %v1514 = vmul.f32 %v1512, %v1507
    %v1515 = vadd.f32 %v1502, %v1513
    %v1516 = vadd.f32 %v1503, %v1514
    %v1517 = vld [vmem:[#allocation8 + $0x1f] sm:$0x1]
    %v1518 = vlaneseq
    %v1519 = vshrl.u32 %v1518, 7
    %v1520 = vsub.s32 0, %v1519
    %v1521 = vrot.slane %v1517, %v1520
    %v1522 = vmul.f32 %v1521, %v1102
    %v1523 = vmul.f32 %v1521, %v1103
    %v1524 = vadd.f32 %v1515, %v1522
    %v1525 = vadd.f32 %v1516, %v1523
    %1526 = vrot.lane.b32.xlu0 %v1102, 127
    %v1527 = vpop.permute.xlu0 %1526
    %1528 = vrot.lane.b32.xlu0 %v1103, 127
    %v1529 = vpop.permute.xlu0 %1528
    %v1530 = vld [vmem:[#allocation8 + $0x20] sm:$0x1]
    %v1531 = vlaneseq
    %v1532 = vshrl.u32 %v1531, 7
    %v1533 = vsub.s32 0, %v1532
    %v1534 = vrot.slane %v1530, %v1533
    %v1535 = vmul.f32 %v1534, %v1527
    %v1536 = vmul.f32 %v1534, %v1529
    %v1537 = vadd.f32 %v1524, %v1535
    %v1538 = vadd.f32 %v1525, %v1536
    %1539 = vrot.lane.b32.xlu0 %v1114, 1
    %v1540 = vpop.permute.xlu0 %1539
    %1541 = vrot.lane.b32.xlu0 %v1117, 1
    %v1542 = vpop.permute.xlu0 %1541
    %v1543 = vld [vmem:[#allocation8 + $0x21] sm:$0x1]
    %v1544 = vlaneseq
    %v1545 = vshrl.u32 %v1544, 7
    %v1546 = vsub.s32 0, %v1545
    %v1547 = vrot.slane %v1543, %v1546
    %v1548 = vmul.f32 %v1547, %v1540
    %v1549 = vmul.f32 %v1547, %v1542
    %v1550 = vadd.f32 %v1537, %v1548
    %v1551 = vadd.f32 %v1538, %v1549
    %v1552 = vld [vmem:[#allocation8 + $0x22] sm:$0x1]
    %v1553 = vlaneseq
    %v1554 = vshrl.u32 %v1553, 7
    %v1555 = vsub.s32 0, %v1554
    %v1556 = vrot.slane %v1552, %v1555
    %v1557 = vmul.f32 %v1556, %v1114
    %v1558 = vmul.f32 %v1556, %v1117
    %v1559 = vadd.f32 %v1550, %v1557
    %v1560 = vadd.f32 %v1551, %v1558
    %1561 = vrot.lane.b32.xlu0 %v1114, 127
    %v1562 = vpop.permute.xlu0 %1561
    %1563 = vrot.lane.b32.xlu0 %v1117, 127
    %v1564 = vpop.permute.xlu0 %1563
    %v1565 = vld [vmem:[#allocation8 + $0x23] sm:$0x1]
    %v1566 = vlaneseq
    %v1567 = vshrl.u32 %v1566, 7
    %v1568 = vsub.s32 0, %v1567
    %v1569 = vrot.slane %v1565, %v1568
    %v1570 = vmul.f32 %v1569, %v1562
    %v1571 = vmul.f32 %v1569, %v1564
    %v1572 = vadd.f32 %v1559, %v1570
    %v1573 = vadd.f32 %v1560, %v1571
    %1574 = vrot.lane.b32.xlu0 %v1111, 17
    %v1575 = vpop.permute.xlu0 %1574
    %1576 = vrot.lane.b32.xlu0 %v1108, 17
    %v1577 = vpop.permute.xlu0 %1576
    %v1578 = vld [vmem:[#allocation8 + $0x24] sm:$0x1]
    %v1579 = vlaneseq
    %v1580 = vshrl.u32 %v1579, 7
    %v1581 = vsub.s32 0, %v1580
    %v1582 = vrot.slane %v1578, %v1581
    %v1583 = vmul.f32 %v1582, %v1575
    %v1584 = vmul.f32 %v1582, %v1577
    %v1585 = vadd.f32 %v1572, %v1583
    %v1586 = vadd.f32 %v1573, %v1584
    %1587 = vrot.lane.b32.xlu0 %v1111, 16
    %v1588 = vpop.permute.xlu0 %1587
    %1589 = vrot.lane.b32.xlu0 %v1108, 16
    %v1590 = vpop.permute.xlu0 %1589
    %v1591 = vld [vmem:[#allocation8 + $0x25] sm:$0x1]
    %v1592 = vlaneseq
    %v1593 = vshrl.u32 %v1592, 7
    %v1594 = vsub.s32 0, %v1593
    %v1595 = vrot.slane %v1591, %v1594
    %v1596 = vmul.f32 %v1595, %v1588
    %v1597 = vmul.f32 %v1595, %v1590
    %v1598 = vadd.f32 %v1585, %v1596
    %v1599 = vadd.f32 %v1586, %v1597
    %1600 = vrot.lane.b32.xlu0 %v1111, 15
    %v1601 = vpop.permute.xlu0 %1600
    %1602 = vrot.lane.b32.xlu0 %v1108, 15
    %v1603 = vpop.permute.xlu0 %1602
    %v1604 = vld [vmem:[#allocation8 + $0x26] sm:$0x1]
    %v1605 = vlaneseq
    %v1606 = vshrl.u32 %v1605, 7
    %v1607 = vsub.s32 0, %v1606
    %v1608 = vrot.slane %v1604, %v1607
    %v1609 = vmul.f32 %v1608, %v1601
    %v1610 = vmul.f32 %v1608, %v1603
    %v1611 = vadd.f32 %v1598, %v1609
    %v1612 = vadd.f32 %v1599, %v1610
    %1613 = vrot.lane.b32.xlu0 %v1102, 17
    %v1614 = vpop.permute.xlu0 %1613
    %1615 = vrot.lane.b32.xlu0 %v1103, 17
    %v1616 = vpop.permute.xlu0 %1615
    %v1617 = vld [vmem:[#allocation8 + $0x27] sm:$0x1]
    %v1618 = vlaneseq
    %v1619 = vshrl.u32 %v1618, 7
    %v1620 = vsub.s32 0, %v1619
    %v1621 = vrot.slane %v1617, %v1620
    %v1622 = vmul.f32 %v1621, %v1614
    %v1623 = vmul.f32 %v1621, %v1616
    %v1624 = vadd.f32 %v1611, %v1622
    %v1625 = vadd.f32 %v1612, %v1623
    %1626 = vrot.lane.b32.xlu0 %v1102, 16
    %v1627 = vpop.permute.xlu0 %1626
    %1628 = vrot.lane.b32.xlu0 %v1103, 16
    %v1629 = vpop.permute.xlu0 %1628
    %v1630 = vld [vmem:[#allocation8 + $0x28] sm:$0x1]
    %v1631 = vlaneseq
    %v1632 = vshrl.u32 %v1631, 7
    %v1633 = vsub.s32 0, %v1632
    %v1634 = vrot.slane %v1630, %v1633
    %v1635 = vmul.f32 %v1634, %v1627
    %v1636 = vmul.f32 %v1634, %v1629
    %v1637 = vadd.f32 %v1624, %v1635
    %v1638 = vadd.f32 %v1625, %v1636
    %1639 = vrot.lane.b32.xlu0 %v1102, 15
    %v1640 = vpop.permute.xlu0 %1639
    %1641 = vrot.lane.b32.xlu0 %v1103, 15
    %v1642 = vpop.permute.xlu0 %1641
    %v1643 = vld [vmem:[#allocation8 + $0x29] sm:$0x1]
    %v1644 = vlaneseq
    %v1645 = vshrl.u32 %v1644, 7
    %v1646 = vsub.s32 0, %v1645
    %v1647 = vrot.slane %v1643, %v1646
    %v1648 = vmul.f32 %v1647, %v1640
    %v1649 = vmul.f32 %v1647, %v1642
    %v1650 = vadd.f32 %v1637, %v1648
    %v1651 = vadd.f32 %v1638, %v1649
    %1652 = vrot.lane.b32.xlu0 %v1114, 17
    %v1653 = vpop.permute.xlu0 %1652
    %1654 = vrot.lane.b32.xlu0 %v1117, 17
    %v1655 = vpop.permute.xlu0 %1654
    %v1656 = vld [vmem:[#allocation8 + $0x2a] sm:$0x1]
    %v1657 = vlaneseq
    %v1658 = vshrl.u32 %v1657, 7
    %v1659 = vsub.s32 0, %v1658
    %v1660 = vrot.slane %v1656, %v1659
    %v1661 = vmul.f32 %v1660, %v1653
    %v1662 = vmul.f32 %v1660, %v1655
    %v1663 = vadd.f32 %v1650, %v1661
    %v1664 = vadd.f32 %v1651, %v1662
    %1665 = vrot.lane.b32.xlu0 %v1114, 16
    %v1666 = vpop.permute.xlu0 %1665
    %1667 = vrot.lane.b32.xlu0 %v1117, 16
    %v1668 = vpop.permute.xlu0 %1667
    %v1669 = vld [vmem:[#allocation8 + $0x2b] sm:$0x1]
    %v1670 = vlaneseq
    %v1671 = vshrl.u32 %v1670, 7
    %v1672 = vsub.s32 0, %v1671
    %v1673 = vrot.slane %v1669, %v1672
    %v1674 = vmul.f32 %v1673, %v1666
    %v1675 = vmul.f32 %v1673, %v1668
    %v1676 = vadd.f32 %v1663, %v1674
    %v1677 = vadd.f32 %v1664, %v1675
    %1678 = vrot.lane.b32.xlu0 %v1114, 15
    %v1679 = vpop.permute.xlu0 %1678
    %1680 = vrot.lane.b32.xlu0 %v1117, 15
    %v1681 = vpop.permute.xlu0 %1680
    %v1682 = vld [vmem:[#allocation8 + $0x2c] sm:$0x1]
    %v1683 = vlaneseq
    %v1684 = vshrl.u32 %v1683, 7
    %v1685 = vsub.s32 0, %v1684
    %v1686 = vrot.slane %v1682, %v1685
    %v1687 = vmul.f32 %v1686, %v1679
    %v1688 = vmul.f32 %v1686, %v1681
    %v1689 = vadd.f32 %v1676, %v1687
    %v1690 = vadd.f32 %v1677, %v1688
    %1691 = vrot.lane.b32.xlu0 %v1111, 33
    %v1692 = vpop.permute.xlu0 %1691
    %1693 = vrot.lane.b32.xlu0 %v1108, 33
    %v1694 = vpop.permute.xlu0 %1693
    %v1695 = vld [vmem:[#allocation8 + $0x2d] sm:$0x1]
    %v1696 = vlaneseq
    %v1697 = vshrl.u32 %v1696, 7
    %v1698 = vsub.s32 0, %v1697
    %v1699 = vrot.slane %v1695, %v1698
    %v1700 = vmul.f32 %v1699, %v1692
    %v1701 = vmul.f32 %v1699, %v1694
    %v1702 = vadd.f32 %v1689, %v1700
    %v1703 = vadd.f32 %v1690, %v1701
    %1704 = vrot.lane.b32.xlu0 %v1111, 32
    %v1705 = vpop.permute.xlu0 %1704
    %1706 = vrot.lane.b32.xlu0 %v1108, 32
    %v1707 = vpop.permute.xlu0 %1706
    %v1708 = vld [vmem:[#allocation8 + $0x2e] sm:$0x1]
    %v1709 = vlaneseq
    %v1710 = vshrl.u32 %v1709, 7
    %v1711 = vsub.s32 0, %v1710
    %v1712 = vrot.slane %v1708, %v1711
    %v1713 = vmul.f32 %v1712, %v1705
    %v1714 = vmul.f32 %v1712, %v1707
    %v1715 = vadd.f32 %v1702, %v1713
    %v1716 = vadd.f32 %v1703, %v1714
    %1717 = vrot.lane.b32.xlu0 %v1111, 31
    %v1718 = vpop.permute.xlu0 %1717
    %1719 = vrot.lane.b32.xlu0 %v1108, 31
    %v1720 = vpop.permute.xlu0 %1719
    %v1721 = vld [vmem:[#allocation8 + $0x2f] sm:$0x1]
    %v1722 = vlaneseq
    %v1723 = vshrl.u32 %v1722, 7
    %v1724 = vsub.s32 0, %v1723
    %v1725 = vrot.slane %v1721, %v1724
    %v1726 = vmul.f32 %v1725, %v1718
    %v1727 = vmul.f32 %v1725, %v1720
    %v1728 = vadd.f32 %v1715, %v1726
    %v1729 = vadd.f32 %v1716, %v1727
    %1730 = vrot.lane.b32.xlu0 %v1102, 33
    %v1731 = vpop.permute.xlu0 %1730
    %1732 = vrot.lane.b32.xlu0 %v1103, 33
    %v1733 = vpop.permute.xlu0 %1732
    %v1734 = vld [vmem:[#allocation8 + $0x30] sm:$0x1]
    %v1735 = vlaneseq
    %v1736 = vshrl.u32 %v1735, 7
    %v1737 = vsub.s32 0, %v1736
    %v1738 = vrot.slane %v1734, %v1737
    %v1739 = vmul.f32 %v1738, %v1731
    %v1740 = vmul.f32 %v1738, %v1733
    %v1741 = vadd.f32 %v1728, %v1739
    %v1742 = vadd.f32 %v1729, %v1740
    %1743 = vrot.lane.b32.xlu0 %v1102, 32
    %v1744 = vpop.permute.xlu0 %1743
    %1745 = vrot.lane.b32.xlu0 %v1103, 32
    %v1746 = vpop.permute.xlu0 %1745
    %v1747 = vld [vmem:[#allocation8 + $0x31] sm:$0x1]
    %v1748 = vlaneseq
    %v1749 = vshrl.u32 %v1748, 7
    %v1750 = vsub.s32 0, %v1749
    %v1751 = vrot.slane %v1747, %v1750
    %v1752 = vmul.f32 %v1751, %v1744
    %v1753 = vmul.f32 %v1751, %v1746
    %v1754 = vadd.f32 %v1741, %v1752
    %v1755 = vadd.f32 %v1742, %v1753
    %1756 = vrot.lane.b32.xlu0 %v1102, 31
    %v1757 = vpop.permute.xlu0 %1756
    %1758 = vrot.lane.b32.xlu0 %v1103, 31
    %v1759 = vpop.permute.xlu0 %1758
    %v1760 = vld [vmem:[#allocation8 + $0x32] sm:$0x1]
    %v1761 = vlaneseq
    %v1762 = vshrl.u32 %v1761, 7
    %v1763 = vsub.s32 0, %v1762
    %v1764 = vrot.slane %v1760, %v1763
    %v1765 = vmul.f32 %v1764, %v1757
    %v1766 = vmul.f32 %v1764, %v1759
    %v1767 = vadd.f32 %v1754, %v1765
    %v1768 = vadd.f32 %v1755, %v1766
    %1769 = vrot.lane.b32.xlu0 %v1114, 33
    %v1770 = vpop.permute.xlu0 %1769
    %1771 = vrot.lane.b32.xlu0 %v1117, 33
    %v1772 = vpop.permute.xlu0 %1771
    %v1773 = vld [vmem:[#allocation8 + $0x33] sm:$0x1]
    %v1774 = vlaneseq
    %v1775 = vshrl.u32 %v1774, 7
    %v1776 = vsub.s32 0, %v1775
    %v1777 = vrot.slane %v1773, %v1776
    %v1778 = vmul.f32 %v1777, %v1770
    %v1779 = vmul.f32 %v1777, %v1772
    %v1780 = vadd.f32 %v1767, %v1778
    %v1781 = vadd.f32 %v1768, %v1779
    %1782 = vrot.lane.b32.xlu0 %v1114, 32
    %v1783 = vpop.permute.xlu0 %1782
    %1784 = vrot.lane.b32.xlu0 %v1117, 32
    %v1785 = vpop.permute.xlu0 %1784
    %v1786 = vld [vmem:[#allocation8 + $0x34] sm:$0x1]
    %v1787 = vlaneseq
    %v1788 = vshrl.u32 %v1787, 7
    %v1789 = vsub.s32 0, %v1788
    %v1790 = vrot.slane %v1786, %v1789
    %v1791 = vmul.f32 %v1790, %v1783
    %v1792 = vmul.f32 %v1790, %v1785
    %v1793 = vadd.f32 %v1780, %v1791
    %v1794 = vadd.f32 %v1781, %v1792
    %1795 = vrot.lane.b32.xlu0 %v1114, 31
    %v1796 = vpop.permute.xlu0 %1795
    %1797 = vrot.lane.b32.xlu0 %v1117, 31
    %v1798 = vpop.permute.xlu0 %1797
    %v1799 = vld [vmem:[#allocation8 + $0x35] sm:$0x1]
    %v1800 = vlaneseq
    %v1801 = vshrl.u32 %v1800, 7
    %v1802 = vsub.s32 0, %v1801
    %v1803 = vrot.slane %v1799, %v1802
    %v1804 = vmul.f32 %v1803, %v1796
    %v1805 = vmul.f32 %v1803, %v1798
    %v1806 = vadd.f32 %v1793, %v1804
    %v1807 = vadd.f32 %v1794, %v1805
    %1808 = vrot.lane.b32.xlu0 %v1111, 49
    %v1809 = vpop.permute.xlu0 %1808
    %1810 = vrot.lane.b32.xlu0 %v1108, 49
    %v1811 = vpop.permute.xlu0 %1810
    %v1812 = vld [vmem:[#allocation8 + $0x36] sm:$0x1]
    %v1813 = vlaneseq
    %v1814 = vshrl.u32 %v1813, 7
    %v1815 = vsub.s32 0, %v1814
    %v1816 = vrot.slane %v1812, %v1815
    %v1817 = vmul.f32 %v1816, %v1809
    %v1818 = vmul.f32 %v1816, %v1811
    %v1819 = vadd.f32 %v1806, %v1817
    %v1820 = vadd.f32 %v1807, %v1818
    %1821 = vrot.lane.b32.xlu0 %v1111, 48
    %v1822 = vpop.permute.xlu0 %1821
    %1823 = vrot.lane.b32.xlu0 %v1108, 48
    %v1824 = vpop.permute.xlu0 %1823
    %v1825 = vld [vmem:[#allocation8 + $0x37] sm:$0x1]
    %v1826 = vlaneseq
    %v1827 = vshrl.u32 %v1826, 7
    %v1828 = vsub.s32 0, %v1827
    %v1829 = vrot.slane %v1825, %v1828
    %v1830 = vmul.f32 %v1829, %v1822
    %v1831 = vmul.f32 %v1829, %v1824
    %v1832 = vadd.f32 %v1819, %v1830
    %v1833 = vadd.f32 %v1820, %v1831
    %1834 = vrot.lane.b32.xlu0 %v1111, 47
    %v1835 = vpop.permute.xlu0 %1834
    %1836 = vrot.lane.b32.xlu0 %v1108, 47
    %v1837 = vpop.permute.xlu0 %1836
    %v1838 = vld [vmem:[#allocation8 + $0x38] sm:$0x1]
    %v1839 = vlaneseq
    %v1840 = vshrl.u32 %v1839, 7
    %v1841 = vsub.s32 0, %v1840
    %v1842 = vrot.slane %v1838, %v1841
    %v1843 = vmul.f32 %v1842, %v1835
    %v1844 = vmul.f32 %v1842, %v1837
    %v1845 = vadd.f32 %v1832, %v1843
    %v1846 = vadd.f32 %v1833, %v1844
    %1847 = vrot.lane.b32.xlu0 %v1102, 49
    %v1848 = vpop.permute.xlu0 %1847
    %1849 = vrot.lane.b32.xlu0 %v1103, 49
    %v1850 = vpop.permute.xlu0 %1849
    %v1851 = vld [vmem:[#allocation8 + $0x39] sm:$0x1]
    %v1852 = vlaneseq
    %v1853 = vshrl.u32 %v1852, 7
    %v1854 = vsub.s32 0, %v1853
    %v1855 = vrot.slane %v1851, %v1854
    %v1856 = vmul.f32 %v1855, %v1848
    %v1857 = vmul.f32 %v1855, %v1850
    %v1858 = vadd.f32 %v1845, %v1856
    %v1859 = vadd.f32 %v1846, %v1857
    %1860 = vrot.lane.b32.xlu0 %v1102, 48
    %v1861 = vpop.permute.xlu0 %1860
    %1862 = vrot.lane.b32.xlu0 %v1103, 48
    %v1863 = vpop.permute.xlu0 %1862
    %v1864 = vld [vmem:[#allocation8 + $0x3a] sm:$0x1]
    %v1865 = vlaneseq
    %v1866 = vshrl.u32 %v1865, 7
    %v1867 = vsub.s32 0, %v1866
    %v1868 = vrot.slane %v1864, %v1867
    %v1869 = vmul.f32 %v1868, %v1861
    %v1870 = vmul.f32 %v1868, %v1863
    %v1871 = vadd.f32 %v1858, %v1869
    %v1872 = vadd.f32 %v1859, %v1870
    %1873 = vrot.lane.b32.xlu0 %v1102, 47
    %v1874 = vpop.permute.xlu0 %1873
    %1875 = vrot.lane.b32.xlu0 %v1103, 47
    %v1876 = vpop.permute.xlu0 %1875
    %v1877 = vld [vmem:[#allocation8 + $0x3b] sm:$0x1]
    %v1878 = vlaneseq
    %v1879 = vshrl.u32 %v1878, 7
    %v1880 = vsub.s32 0, %v1879
    %v1881 = vrot.slane %v1877, %v1880
    %v1882 = vmul.f32 %v1881, %v1874
    %v1883 = vmul.f32 %v1881, %v1876
    %v1884 = vadd.f32 %v1871, %v1882
    %v1885 = vadd.f32 %v1872, %v1883
    %1886 = vrot.lane.b32.xlu0 %v1114, 49
    %v1887 = vpop.permute.xlu0 %1886
    %1888 = vrot.lane.b32.xlu0 %v1117, 49
    %v1889 = vpop.permute.xlu0 %1888
    %v1890 = vld [vmem:[#allocation8 + $0x3c] sm:$0x1]
    %v1891 = vlaneseq
    %v1892 = vshrl.u32 %v1891, 7
    %v1893 = vsub.s32 0, %v1892
    %v1894 = vrot.slane %v1890, %v1893
    %v1895 = vmul.f32 %v1894, %v1887
    %v1896 = vmul.f32 %v1894, %v1889
    %v1897 = vadd.f32 %v1884, %v1895
    %v1898 = vadd.f32 %v1885, %v1896
    %1899 = vrot.lane.b32.xlu0 %v1114, 48
    %v1900 = vpop.permute.xlu0 %1899
    %1901 = vrot.lane.b32.xlu0 %v1117, 48
    %v1902 = vpop.permute.xlu0 %1901
    %v1903 = vld [vmem:[#allocation8 + $0x3d] sm:$0x1]
    %v1904 = vlaneseq
    %v1905 = vshrl.u32 %v1904, 7
    %v1906 = vsub.s32 0, %v1905
    %v1907 = vrot.slane %v1903, %v1906
    %v1908 = vmul.f32 %v1907, %v1900
    %v1909 = vmul.f32 %v1907, %v1902
    %v1910 = vadd.f32 %v1897, %v1908
    %v1911 = vadd.f32 %v1898, %v1909
    %1912 = vrot.lane.b32.xlu0 %v1114, 47
    %v1913 = vpop.permute.xlu0 %1912
    %1914 = vrot.lane.b32.xlu0 %v1117, 47
    %v1915 = vpop.permute.xlu0 %1914
    %v1916 = vld [vmem:[#allocation8 + $0x3e] sm:$0x1]
    %v1917 = vlaneseq
    %v1918 = vshrl.u32 %v1917, 7
    %v1919 = vsub.s32 0, %v1918
    %v1920 = vrot.slane %v1916, %v1919
    %v1921 = vmul.f32 %v1920, %v1913
    %v1922 = vmul.f32 %v1920, %v1915
    %v1923 = vadd.f32 %v1910, %v1921
    %v1924 = vadd.f32 %v1911, %v1922
    %v1925 = vadd.f32 %v1923, %v1924
    %v1926 = vrot.slane %v1925, 4
    %v1927 = vadd.f32 %v1925, %v1926
    %v1928 = vrot.slane %v1927, 2
    %v1929 = vadd.f32 %v1927, %v1928
    %v1930 = vrot.slane %v1929, 1
    %v1931 = vadd.f32 %v1929, %v1930
    %v1932 = vmul.f32 %v1923, %v1923
    %v1933 = vmul.f32 %v1924, %v1924
    %v1934 = vadd.f32 %v1932, %v1933
    %v1935 = vrot.slane %v1934, 4
    %v1936 = vadd.f32 %v1934, %v1935
    %v1937 = vrot.slane %v1936, 2
    %v1938 = vadd.f32 %v1936, %v1937
    %v1939 = vrot.slane %v1938, 1
    %v1940 = vadd.f32 %v1938, %v1939
    %v1941 = vmul.f32 %v1931, %v917
    %v1942 = vsel %vm80, %v1941, 0.0
    %1943 = vadd.xlane.f32.xlu0 %v1942
    %v1944 = vpop.xlane.xlu0 %1943
    %v1945 = vrot.slane %v1944, 4
    %v1946 = vadd.f32 %v1944, %v1945
    %v1947 = vrot.slane %v1946, 2
    %v1948 = vadd.f32 %v1946, %v1947
    %v1949 = vrot.slane %v1948, 1
    %v1950 = vadd.f32 %v1948, %v1949
    %s1951 = vtos %v1950
    %v1952 = vmul.f32 %v1940, %v917
    %v1953 = vsel %vm80, %v1952, 0.0
    %1954 = vadd.xlane.f32.xlu0 %v1953
    %v1955 = vpop.xlane.xlu0 %1954
    %v1956 = vrot.slane %v1955, 4
    %v1957 = vadd.f32 %v1955, %v1956
    %v1958 = vrot.slane %v1957, 2
    %v1959 = vadd.f32 %v1957, %v1958
    %v1960 = vrot.slane %v1959, 1
    %v1961 = vadd.f32 %v1959, %v1960
    %s1962 = vtos %v1961
    %s1963 = smul.f32 %s1951, 0.001953125
    %s1964 = smul.f32 %s1962, 0.001953125
    %s1965 = smul.f32 %s1963, %s1963
    %s1966 = ssub.f32 %s1964, %s1965
    %s1967 = sadd.f32 %s1966, 1e-05
    %v1968 = vstv %s1967
    %v1969 = vrsqrt.pop %v1968
    %s1970 = vtos %v1969
    %s1971 = sld [smem:[#allocation9 + $0x8]]
    %s1972 = smul.f32 %s1970, %s1971
    %s1973 = sld [smem:[#allocation9 + $0xc]]
    %s1974 = smul.f32 %s1963, %s1972
    %s1975 = ssub.f32 %s1973, %s1974
    %v1976 = vstv %s1972
    %v1977 = vmul.f32 %v1976, %v917
    %v1978 = vadd.f32 %v1977, 0.0
    %v1979 = vstv %s1975
    %v1980 = vmul.f32 %v1979, %v917
    %v1981 = vadd.f32 %v1980, 0.0
    %v1982 = vmul.f32 %v1931, %v959
    %v1983 = vsel %vm80, %v1982, 0.0
    %1984 = vadd.xlane.f32.xlu0 %v1983
    %v1985 = vpop.xlane.xlu0 %1984
    %v1986 = vrot.slane %v1985, 4
    %v1987 = vadd.f32 %v1985, %v1986
    %v1988 = vrot.slane %v1987, 2
    %v1989 = vadd.f32 %v1987, %v1988
    %v1990 = vrot.slane %v1989, 1
    %v1991 = vadd.f32 %v1989, %v1990
    %s1992 = vtos %v1991
    %v1993 = vmul.f32 %v1940, %v959
    %v1994 = vsel %vm80, %v1993, 0.0
    %1995 = vadd.xlane.f32.xlu0 %v1994
    %v1996 = vpop.xlane.xlu0 %1995
    %v1997 = vrot.slane %v1996, 4
    %v1998 = vadd.f32 %v1996, %v1997
    %v1999 = vrot.slane %v1998, 2
    %v2000 = vadd.f32 %v1998, %v1999
    %v2001 = vrot.slane %v2000, 1
    %v2002 = vadd.f32 %v2000, %v2001
    %s2003 = vtos %v2002
    %s2004 = smul.f32 %s1992, 0.001953125
    %s2005 = smul.f32 %s2003, 0.001953125
    %s2006 = smul.f32 %s2004, %s2004
    %s2007 = ssub.f32 %s2005, %s2006
    %s2008 = sadd.f32 %s2007, 1e-05
    %v2009 = vstv %s2008
    %v2010 = vrsqrt.pop %v2009
    %s2011 = vtos %v2010
    %s2012 = sld [smem:[#allocation9 + $0x9]]
    %s2013 = smul.f32 %s2011, %s2012
    %s2014 = sld [smem:[#allocation9 + $0xd]]
    %s2015 = smul.f32 %s2004, %s2013
    %s2016 = ssub.f32 %s2014, %s2015
    %v2017 = vstv %s2013
    %v2018 = vmul.f32 %v2017, %v959
    %v2019 = vadd.f32 %v1978, %v2018
    %v2020 = vstv %s2016
    %v2021 = vmul.f32 %v2020, %v959
    %v2022 = vadd.f32 %v1981, %v2021
    %v2023 = vmul.f32 %v1931, %v1001
    %v2024 = vsel %vm80, %v2023, 0.0
    %2025 = vadd.xlane.f32.xlu0 %v2024
    %v2026 = vpop.xlane.xlu0 %2025
    %v2027 = vrot.slane %v2026, 4
    %v2028 = vadd.f32 %v2026, %v2027
    %v2029 = vrot.slane %v2028, 2
    %v2030 = vadd.f32 %v2028, %v2029
    %v2031 = vrot.slane %v2030, 1
    %v2032 = vadd.f32 %v2030, %v2031
    %s2033 = vtos %v2032
    %v2034 = vmul.f32 %v1940, %v1001
    %v2035 = vsel %vm80, %v2034, 0.0
    %2036 = vadd.xlane.f32.xlu0 %v2035
    %v2037 = vpop.xlane.xlu0 %2036
    %v2038 = vrot.slane %v2037, 4
    %v2039 = vadd.f32 %v2037, %v2038
    %v2040 = vrot.slane %v2039, 2
    %v2041 = vadd.f32 %v2039, %v2040
    %v2042 = vrot.slane %v2041, 1
    %v2043 = vadd.f32 %v2041, %v2042
    %s2044 = vtos %v2043
    %s2045 = smul.f32 %s2033, 0.001953125
    %s2046 = smul.f32 %s2044, 0.001953125
    %s2047 = smul.f32 %s2045, %s2045
    %s2048 = ssub.f32 %s2046, %s2047
    %s2049 = sadd.f32 %s2048, 1e-05
    %v2050 = vstv %s2049
    %v2051 = vrsqrt.pop %v2050
    %s2052 = vtos %v2051
    %s2053 = sld [smem:[#allocation9 + $0xa]]
    %s2054 = smul.f32 %s2052, %s2053
    %s2055 = sld [smem:[#allocation9 + $0xe]]
    %s2056 = smul.f32 %s2045, %s2054
    %s2057 = ssub.f32 %s2055, %s2056
    %v2058 = vstv %s2054
    %v2059 = vmul.f32 %v2058, %v1001
    %v2060 = vadd.f32 %v2019, %v2059
    %v2061 = vstv %s2057
    %v2062 = vmul.f32 %v2061, %v1001
    %v2063 = vadd.f32 %v2022, %v2062
    %v2064 = vmul.f32 %v1931, %v1043
    %v2065 = vsel %vm80, %v2064, 0.0
    %2066 = vadd.xlane.f32.xlu0 %v2065
    %v2067 = vpop.xlane.xlu0 %2066
    %v2068 = vrot.slane %v2067, 4
    %v2069 = vadd.f32 %v2067, %v2068
    %v2070 = vrot.slane %v2069, 2
    %v2071 = vadd.f32 %v2069, %v2070
    %v2072 = vrot.slane %v2071, 1
    %v2073 = vadd.f32 %v2071, %v2072
    %s2074 = vtos %v2073
    %v2075 = vmul.f32 %v1940, %v1043
    %v2076 = vsel %vm80, %v2075, 0.0
    %2077 = vadd.xlane.f32.xlu0 %v2076
    %v2078 = vpop.xlane.xlu0 %2077
    %v2079 = vrot.slane %v2078, 4
    %v2080 = vadd.f32 %v2078, %v2079
    %v2081 = vrot.slane %v2080, 2
    %v2082 = vadd.f32 %v2080, %v2081
    %v2083 = vrot.slane %v2082, 1
    %v2084 = vadd.f32 %v2082, %v2083
    %s2085 = vtos %v2084
    %s2086 = smul.f32 %s2074, 0.001953125
    %s2087 = smul.f32 %s2085, 0.001953125
    %s2088 = smul.f32 %s2086, %s2086
    %s2089 = ssub.f32 %s2087, %s2088
    %s2090 = sadd.f32 %s2089, 1e-05
    %v2091 = vstv %s2090
    %v2092 = vrsqrt.pop %v2091
    %s2093 = vtos %v2092
    %s2094 = sld [smem:[#allocation9 + $0xb]]
    %s2095 = smul.f32 %s2093, %s2094
    %s2096 = sld [smem:[#allocation9 + $0xf]]
    %s2097 = smul.f32 %s2086, %s2095
    %s2098 = ssub.f32 %s2096, %s2097
    %v2099 = vstv %s2095
    %v2100 = vmul.f32 %v2099, %v1043
    %v2101 = vadd.f32 %v2060, %v2100
    %v2102 = vstv %s2098
    %v2103 = vmul.f32 %v2102, %v1043
    %v2104 = vadd.f32 %v2063, %v2103
    %v2105 = vlaneseq
    %v2106 = vshrl.u32 %v2105, 7
    %v2107 = vsub.s32 0, %v2106
    %v2108 = vrot.slane %v2101, %v2107
    %v2109 = vmul.f32 %v1923, %v2108
    %v2110 = vmul.f32 %v1924, %v2108
    %v2111 = vlaneseq
    %v2112 = vshrl.u32 %v2111, 7
    %v2113 = vsub.s32 0, %v2112
    %v2114 = vrot.slane %v2104, %v2113
    %v2115 = vadd.f32 %v2109, %v2114
    %v2116 = vadd.f32 %v2110, %v2114
    %v2117 = vadd.f32 %v76, %v2115
    %v2118 = vadd.f32 %v77, %v2116
    %2119 = vst [vmem:[#allocation10] sm:$0xff] %v2117
    %2120 = vst [vmem:[#allocation10 + $0x8] sm:$0xff] %v2118
    // Predicated region
    $region38: #{tpu_custom_call.1} parent=1 // pred_check
      _
    $region39: #{tpu_custom_call.1} parent=1 // pred_check_branch
      %2122 = sbr.rel (0) target = $region41
    $region40: #{tpu_custom_call.1} parent=1 // pred_region
      %s2124 = ssub.s32 256, 256
      %2125 = vsyncadd [#allocation4], %s2124
      %s2126 = sshll.u32 [#allocation10], 4
      %s2127 = int_to_ptr.vmem [resolvable:$true] %s2126
      %2132 = dma.vmem_to_hbm [thread:$0]  %s2127, 256, %s5, [#allocation4], 128, 128, 8
    $region41: #{tpu_custom_call.1} parent=1 // pred_fallthru
      _
    // Predicated region
    $region42: #{tpu_custom_call.1} parent=1 // pred_check
      _
    $region43: #{tpu_custom_call.1} parent=1 // pred_check_branch
      %2134 = sbr.rel (0) target = $region45
    $region44: #{tpu_custom_call.1} parent=1 // pred_region
      %2135 = dma.done [#allocation4], 256
    $region45: #{tpu_custom_call.1} parent=1 // pred_fallthru
      _
    %2136 = vsyncpa [#allocation3], 1
    %2137 = vsyncpa [#allocation7], 1
    %2138 = vsyncpa [#allocation4], 1
    %2139 = vsyncpa [#allocation5], 1

</llo_original>
